<compile_context>
chip_gen: v7x
topology: tpu7x:2x2x1
jax: 0.10.0
libtpu: 0.0.40
codegen_flags: <defaults>
</compile_context>

<pallas_src>
import numpy as np
import jax
import jax.numpy as jnp
from jax.experimental import pallas as pl
from jax.experimental.pallas import tpu as pltpu


# ----------------------------- glue helpers ------------------------------- #

def _round_up(x, m):
    return ((x + m - 1) // m) * m


def _hann_padded_np(win_length, fft_size):
    # torch.hann_window(win_length) (periodic), zero-padded centered to fft_size
    n = np.arange(win_length, dtype=np.float64)
    w = 0.5 * (1.0 - np.cos(2.0 * np.pi * n / win_length))
    lpad = (fft_size - win_length) // 2
    full = np.zeros(fft_size, dtype=np.float64)
    full[lpad:lpad + win_length] = w
    return full


def _fused_windowed_basis_np(fft_size, win_length):
    """Window-folded real-DFT basis with the Nyquist bin folded into the
    (identically zero) sin-bin-0 column -> an exactly (fft, fft) MXU operand.

      cols [0, half)    : cos(2*pi*n*k/N) * w[n],  k = 0..half-1
      col  half         : cos(pi*n) * w[n]         (Nyquist-bin real part)
      cols (half, fft)  : sin(2*pi*n*k/N) * w[n],  k = 1..half-1
    """
    half = fft_size // 2
    win = _hann_padded_np(win_length, fft_size)
    n = np.arange(fft_size, dtype=np.int64)
    k = np.arange(half, dtype=np.int64)
    ang = 2.0 * np.pi * np.mod(np.outer(n, k), fft_size).astype(np.float64) / fft_size
    cos_b = np.cos(ang) * win[:, None]
    sin_b = np.sin(ang) * win[:, None]
    basis = np.concatenate([cos_b, sin_b], axis=1)            # (fft, fft)
    basis[:, half] = np.where(n % 2 == 0, 1.0, -1.0) * win    # Nyquist real column
    return basis


def _frames_pair(x, y, fft_size, hop):
    """torch.stft(center=True, pad_mode='reflect') framing for both signals.
    Returns frames of shape (2, B*n_frames, fft) (axis 0 = x, y) and n_frames."""
    B, T = x.shape
    pad = fft_size // 2
    sig = jnp.stack([x, y])                                    # (2, B, T)
    sp = jnp.pad(sig, ((0, 0), (0, 0), (pad, pad)), mode="reflect")
    n_frames = T // hop + 1
    idx = jnp.arange(n_frames)[:, None] * hop + jnp.arange(fft_size)[None, :]
    fr = sp[:, :, idx]                                         # (2, B, n_frames, fft)
    return fr.reshape(2, B * n_frames, fft_size), n_frames


def _vmem_capacity_bytes():
    try:
        return int(pltpu.get_tpu_info().vmem_capacity_bytes)
    except Exception:
        return 64 << 20                                        # conservative (v7x-sized)


# ------------------------------ Pallas kernel ------------------------------ #

def _make_kernel(tm, half):
    eps = 1e-7

    def kernel(fr_ref, basis_hbm, out_ref, basis_vmem, basis_sem):
        i = pl.program_id(1)

        # Stage the grid-invariant basis into VMEM once per core (single-buffered;
        # BlockSpec auto-pipelining would double-buffer ~8 MiB at fft=2048).
        @pl.when(i == 0)
        def _():
            cp = pltpu.make_async_copy(basis_hbm, basis_vmem, basis_sem)
            cp.start()
            cp.wait()

        # One fused MXU matmul for the stacked [x-tile; y-tile] rows against the
        # shared [cos | nyq | sin] basis: bf16 operands, f32 accumulation.
        s = jnp.dot(fr_ref[...], basis_vmem[...],
                    preferred_element_type=jnp.float32)        # (2*tm, fft)

        re = s[:, :half]                                       # bins 0..half-1 real
        im_raw = s[:, half:]                                   # col 0 = Nyquist real
        lane = jax.lax.broadcasted_iota(jnp.int32, (2 * tm, half), 1)
        im = jnp.where(lane == 0, 0.0, im_raw)                 # true imag (bin0 imag = 0)

        # torch: mag = sqrt(clamp(re^2 + im^2, min=1e-7))
        sq = jnp.maximum(re * re + im * im, eps)               # (2*tm, half)
        mag = jnp.sqrt(sq)
        x_sq, y_sq = sq[:tm], sq[tm:]
        x_mag, y_mag = mag[:tm], mag[tm:]

        nyq_sq = jnp.maximum(im_raw[:, 0:1] * im_raw[:, 0:1], eps)   # (2*tm, 1)
        nyq_mag = jnp.sqrt(nyq_sq)
        xn_sq, yn_sq = nyq_sq[:tm], nyq_sq[tm:]
        xn_mag, yn_mag = nyq_mag[:tm], nyq_mag[tm:]

        diff = y_mag - x_mag
        ndiff = yn_mag - xn_mag
        s_diff = jnp.sum(diff * diff) + jnp.sum(ndiff * ndiff)      # ||y-x||_F^2 partial
        s_y = jnp.sum(y_sq) + jnp.sum(yn_sq)                        # ||y||_F^2 partial
        # |log y_mag - log x_mag| == 0.5*|log(y_sq / x_sq)|: one log instead of two.
        s_log = 0.5 * (jnp.sum(jnp.abs(jnp.log(y_sq / x_sq)))
                       + jnp.sum(jnp.abs(jnp.log(yn_sq / xn_sq))))

        # Scatter the 3 partial sums into lanes 0..2 of sublane 0 of this core's
        # (1,8,128) resident accumulator tile (single-vreg VPU work per step).
        sub = jax.lax.broadcasted_iota(jnp.int32, (1, 8, 128), 1)
        ln = jax.lax.broadcasted_iota(jnp.int32, (1, 8, 128), 2)
        vec = jnp.where((sub == 0) & (ln == 0), s_diff, 0.0)
        vec = vec + jnp.where((sub == 0) & (ln == 1), s_y, 0.0)
        vec = vec + jnp.where((sub == 0) & (ln == 2), s_log, 0.0)

        @pl.when(i == 0)
        def _():
            out_ref[...] = jnp.zeros_like(out_ref)

        out_ref[...] += vec.astype(jnp.float32)

    return kernel


def stft_loss_pallas(x, y, fft_size, hop, win_length):
    """Single-resolution STFT loss (spectral convergence, log STFT magnitude)."""
    B = x.shape[0]
    half = fft_size // 2
    n_bins = half + 1

    fr, n_frames = _frames_pair(x, y, fft_size, hop)           # (2, n_rows, fft)
    n_rows = B * n_frames

    # Row tile: multiple of 16 (bf16 sublane packing); larger tiles at smaller FFTs
    # so per-grid-step pipeline overhead (~0.35us) stays negligible.
    tm_target = 512 if fft_size <= 1024 else 256
    n_rows_16 = _round_up(n_rows, 16)
    if n_rows_16 <= tm_target:
        tm, n_tiles = n_rows_16, 1
    else:
        tm = tm_target
        n_tiles = (n_rows + tm - 1) // tm

    # Split row tiles across 2 TensorCores (v7x megacore); serial/harmless on v5e/v6e.
    n_split = 2 if n_tiles >= 2 else 1
    tiles_per_core = (n_tiles + n_split - 1) // n_split
    n_tiles_p = n_split * tiles_per_core
    n_rows_p = n_tiles_p * tm

    fr = jnp.pad(fr, ((0, 0), (0, n_rows_p - n_rows), (0, 0))).astype(jnp.bfloat16)
    # Tile-interleave x and y rows so each grid step feeds one (2*tm, fft) LHS block.
    fr = jnp.stack([fr[0].reshape(n_tiles_p, tm, fft_size),
                    fr[1].reshape(n_tiles_p, tm, fft_size)], axis=1)
    fr = fr.reshape(n_tiles_p * 2 * tm, fft_size)

    basis = jnp.asarray(_fused_windowed_basis_np(fft_size, win_length),
                        dtype=jnp.bfloat16)                    # (fft, fft)

    # VMEM budget: double-buffered frame blocks + single-buffered basis scratch +
    # f32 intermediates; capped to leave headroom (40 MiB-class on 64 MiB v7x VMEM).
    frame_bytes = 2 * tm * fft_size * 2
    basis_bytes = fft_size * fft_size * 2
    inter_bytes = 12 * tm * fft_size * 4
    budget = 2 * frame_bytes + basis_bytes + inter_bytes + (8 << 20)
    vmem_limit = int(min(max(budget, 16 << 20), (_vmem_capacity_bytes() * 5) // 8))

    kernel = _make_kernel(tm, half)
    out = pl.pallas_call(
        kernel,
        out_shape=jax.ShapeDtypeStruct((n_split, 8, 128), jnp.float32),
        grid_spec=pltpu.PrefetchScalarGridSpec(
            num_scalar_prefetch=0,
            grid=(n_split, tiles_per_core),
            in_specs=[
                pl.BlockSpec((2 * tm, fft_size),
                             lambda c, i: (c * tiles_per_core + i, 0)),   # frames
                pl.BlockSpec(memory_space=pl.ANY),                        # basis (HBM)
            ],
            out_specs=pl.BlockSpec((1, 8, 128), lambda c, i: (c, 0, 0)),
            scratch_shapes=[
                pltpu.VMEM((fft_size, fft_size), jnp.bfloat16),           # staged basis
                pltpu.SemaphoreType.DMA(()),
            ],
        ),
        compiler_params=pltpu.CompilerParams(
            dimension_semantics=("parallel", "arbitrary"),
            vmem_limit_bytes=vmem_limit,
        ),
    )(fr, basis)

    partials = out.sum(axis=0)                                  # (8, 128)
    s_diff, s_y, s_log = partials[0, 0], partials[0, 1], partials[0, 2]
    # Padded (all-zero) rows contribute exactly n_bins*1e-7 each, only to ||y||^2.
    s_y = s_y - (n_rows_p - n_rows) * n_bins * 1e-7
    sc_loss = jnp.sqrt(s_diff) / jnp.sqrt(s_y)
    mag_loss = s_log / float(n_rows * n_bins)
    return sc_loss, mag_loss


def multi_resolution_stft_loss_pallas(
        x, y,
        fft_sizes=(1024, 2048, 512),
        hop_sizes=(120, 240, 50),
        win_lengths=(600, 1200, 240)):
    assert len(fft_sizes) == len(hop_sizes) == len(win_lengths)
    sc_total, mag_total = 0.0, 0.0
    for fs, ss, wl in zip(fft_sizes, hop_sizes, win_lengths):
        sc, mg = stft_loss_pallas(x, y, fs, ss, wl)
        sc_total = sc_total + sc
        mag_total = mag_total + mg
    n = len(fft_sizes)
    return sc_total / n, mag_total / n


# ------------------------- pure-JAX reference check ------------------------ #

def _reference_stft_loss(x, y, fft_size, hop, win_length):
    B, T = x.shape
    pad = fft_size // 2

    def frames(s):
        sp = jnp.pad(s, ((0, 0), (pad, pad)), mode="reflect")
        n_frames = T // hop + 1
        idx = jnp.arange(n_frames)[:, None] * hop + jnp.arange(fft_size)[None, :]
        return sp[:, idx].reshape(B * n_frames, fft_size)

    xf, yf = frames(x), frames(y)
    n_bins = fft_size // 2 + 1
    win = jnp.asarray(_hann_padded_np(win_length, fft_size), jnp.float32).reshape(1, -1)
    n = np.arange(fft_size, dtype=np.int64)
    k = np.arange(n_bins, dtype=np.int64)
    ang = 2.0 * np.pi * np.mod(np.outer(n, k), fft_size).astype(np.float64) / fft_size
    cos_b = jnp.asarray(np.cos(ang), jnp.float32)
    sin_b = jnp.asarray(np.sin(ang), jnp.float32)

    def mag(f):
        fw = f * win
        re = jnp.dot(fw, cos_b, precision=jax.lax.Precision.HIGHEST)
        im = jnp.dot(fw, sin_b, precision=jax.lax.Precision.HIGHEST)
        return jnp.sqrt(jnp.maximum(re * re + im * im, 1e-7))

    xm, ym = mag(xf), mag(yf)
    sc = jnp.linalg.norm(ym - xm) / jnp.linalg.norm(ym)
    mg = jnp.mean(jnp.abs(jnp.log(ym) - jnp.log(xm)))
    return sc, mg


def multi_resolution_stft_loss_ref(x, y,
                                   fft_sizes=(1024, 2048, 512),
                                   hop_sizes=(120, 240, 50),
                                   win_lengths=(600, 1200, 240)):
    sc_total, mag_total = 0.0, 0.0
    for fs, ss, wl in zip(fft_sizes, hop_sizes, win_lengths):
        sc, mg = _reference_stft_loss(x, y, fs, ss, wl)
        sc_total = sc_total + sc
        mag_total = mag_total + mg
    n = len(fft_sizes)
    return sc_total / n, mag_total / n


# ----------------------------------- main ---------------------------------- #

if __name__ == "__main__":
    key = jax.random.PRNGKey(0)
    kx, ky = jax.random.split(key)

    # Small case (single-tile path) and a longer case that exercises the
    # multi-tile / 2-core-split / multi-step accumulation paths.
    for B, T in ((2, 2400), (2, 38400)):
        x = jax.random.normal(kx, (B, T), dtype=jnp.float32)
        y = jax.random.normal(ky, (B, T), dtype=jnp.float32)

        sc_loss, mag_loss = multi_resolution_stft_loss_pallas(x, y)
        sc_loss = jax.block_until_ready(sc_loss)
        mag_loss = jax.block_until_ready(mag_loss)

        sc_ref, mag_ref = multi_resolution_stft_loss_ref(x, y)
        assert jnp.allclose(sc_loss, sc_ref, rtol=5e-2, atol=1e-4), (B, T, sc_loss, sc_ref)
        assert jnp.allclose(mag_loss, mag_ref, rtol=5e-2, atol=1e-4), (B, T, mag_loss, mag_ref)

    print("KERNEL_OK")
</pallas_src>

<mosaic_0001>
module attributes {stable_mosaic.version = 11 : i64} {
  func.func @kernel(%arg0: i32, %arg1: i32, %arg2: memref<96x1024xbf16, #tpu.memory_space<vmem>>, %arg3: memref<1024x1024xbf16, #tpu.memory_space<any>>, %arg4: memref<1x8x128xf32, #tpu.memory_space<vmem>>, %arg5: memref<1024x1024xbf16, #tpu.memory_space<vmem>>, %arg6: memref<!tpu.dma_semaphore, #tpu.memory_space<semaphore_mem>>) attributes {dimension_semantics = [#tpu.dimension_semantics<parallel>, #tpu.dimension_semantics<arbitrary>], iteration_bounds = array<i64: 1, 1>, scalar_prefetch = 0 : i64, scratch_operands = 2 : i64, tpu.core_type = #tpu.core_type<tc>, window_params = [{transform_indices = @transform_0, window_bounds = array<i64: 96, 1024>}, {}, {transform_indices = @transform_2, window_bounds = array<i64: 1, 8, 128>}]} {
    %c0_i32 = arith.constant 0 : i32
    %0 = arith.cmpi eq, %arg1, %c0_i32 : i32
    %1 = arith.extui %0 : i1 to i32
    %c0_i32_0 = arith.constant 0 : i32
    %2 = arith.cmpi ne, %1, %c0_i32_0 : i32
    scf.if %2 {
      tpu.enqueue_dma source(%arg3 : memref<1024x1024xbf16, #tpu.memory_space<any>>) target(%arg5 : memref<1024x1024xbf16, #tpu.memory_space<vmem>>) target_semaphore(%arg6 : memref<!tpu.dma_semaphore, #tpu.memory_space<semaphore_mem>>)
      tpu.wait_dma2 semaphore(%arg6 : memref<!tpu.dma_semaphore, #tpu.memory_space<semaphore_mem>>) src(%arg3 : memref<1024x1024xbf16, #tpu.memory_space<any>>) dst(%arg5 : memref<1024x1024xbf16, #tpu.memory_space<vmem>>)
    } else {
    }
    %c0 = arith.constant 0 : index
    %c0_1 = arith.constant 0 : index
    %3 = vector.load %arg2[%c0, %c0_1] : memref<96x1024xbf16, #tpu.memory_space<vmem>>, vector<96x1024xbf16>
    %c0_2 = arith.constant 0 : index
    %c0_3 = arith.constant 0 : index
    %4 = vector.load %arg5[%c0_2, %c0_3] : memref<1024x1024xbf16, #tpu.memory_space<vmem>>, vector<1024x1024xbf16>
    %cst = arith.constant dense<0.000000e+00> : vector<96x1024xf32>
    %5 = tpu.matmul %3, %4, %cst {dimension_numbers = #tpu.dot_dimension_numbers<[1], [0], [0], [1], [0, 0, 1, 1], [], []>} : vector<96x1024xbf16>, vector<1024x1024xbf16>, vector<96x1024xf32> -> vector<96x1024xf32>
    %6 = vector.extract_strided_slice %5 {offsets = [0, 0], sizes = [96, 512], strides = [1, 1]} : vector<96x1024xf32> to vector<96x512xf32>
    %7 = vector.extract_strided_slice %5 {offsets = [0, 512], sizes = [96, 512], strides = [1, 1]} : vector<96x1024xf32> to vector<96x512xf32>
    %8 = tpu.iota {dimensions = array<i32: 1>} : vector<96x512xi32>
    %c0_i32_4 = arith.constant 0 : i32
    %9 = vector.broadcast %c0_i32_4 : i32 to vector<96x512xi32>
    %10 = arith.cmpi eq, %8, %9 : vector<96x512xi32>
    %cst_5 = arith.constant 0.000000e+00 : f32
    %11 = vector.broadcast %cst_5 : f32 to vector<96x512xf32>
    %12 = arith.select %10, %11, %7 : vector<96x512xi1>, vector<96x512xf32>
    %13 = arith.mulf %6, %6 : vector<96x512xf32>
    %14 = arith.mulf %12, %12 : vector<96x512xf32>
    %15 = arith.addf %13, %14 : vector<96x512xf32>
    %cst_6 = arith.constant 1.000000e-07 : f32
    %16 = vector.broadcast %cst_6 : f32 to vector<96x512xf32>
    %17 = arith.maximumf %15, %16 : vector<96x512xf32>
    %18 = math.sqrt %17 : vector<96x512xf32>
    %19 = vector.extract_strided_slice %17 {offsets = [0, 0], sizes = [48, 512], strides = [1, 1]} : vector<96x512xf32> to vector<48x512xf32>
    %20 = vector.extract_strided_slice %17 {offsets = [48, 0], sizes = [48, 512], strides = [1, 1]} : vector<96x512xf32> to vector<48x512xf32>
    %21 = vector.extract_strided_slice %18 {offsets = [0, 0], sizes = [48, 512], strides = [1, 1]} : vector<96x512xf32> to vector<48x512xf32>
    %22 = vector.extract_strided_slice %18 {offsets = [48, 0], sizes = [48, 512], strides = [1, 1]} : vector<96x512xf32> to vector<48x512xf32>
    %23 = vector.extract_strided_slice %7 {offsets = [0, 0], sizes = [96, 1], strides = [1, 1]} : vector<96x512xf32> to vector<96x1xf32>
    %24 = vector.extract_strided_slice %7 {offsets = [0, 0], sizes = [96, 1], strides = [1, 1]} : vector<96x512xf32> to vector<96x1xf32>
    %25 = arith.mulf %23, %24 : vector<96x1xf32>
    %cst_7 = arith.constant 1.000000e-07 : f32
    %26 = vector.broadcast %cst_7 : f32 to vector<96x1xf32>
    %27 = arith.maximumf %25, %26 : vector<96x1xf32>
    %28 = math.sqrt %27 : vector<96x1xf32>
    %29 = vector.extract_strided_slice %27 {offsets = [0, 0], sizes = [48, 1], strides = [1, 1]} : vector<96x1xf32> to vector<48x1xf32>
    %30 = vector.extract_strided_slice %27 {offsets = [48, 0], sizes = [48, 1], strides = [1, 1]} : vector<96x1xf32> to vector<48x1xf32>
    %31 = vector.extract_strided_slice %28 {offsets = [0, 0], sizes = [48, 1], strides = [1, 1]} : vector<96x1xf32> to vector<48x1xf32>
    %32 = vector.extract_strided_slice %28 {offsets = [48, 0], sizes = [48, 1], strides = [1, 1]} : vector<96x1xf32> to vector<48x1xf32>
    %33 = arith.subf %22, %21 : vector<48x512xf32>
    %34 = arith.subf %32, %31 : vector<48x1xf32>
    %35 = arith.mulf %33, %33 : vector<48x512xf32>
    %36 = vector.shape_cast %35 : vector<48x512xf32> to vector<1x48x512xf32>
    %cst_8 = arith.constant dense<0.000000e+00> : vector<1xf32>
    %37 = vector.multi_reduction <add>, %36, %cst_8 [1, 2] : vector<1x48x512xf32> to vector<1xf32>
    %38 = vector.shape_cast %37 : vector<1xf32> to vector<1x1x1xf32>
    %39 = vector.extract %38[0, 0, 0] : f32 from vector<1x1x1xf32>
    %40 = arith.mulf %34, %34 : vector<48x1xf32>
    %41 = vector.shape_cast %40 : vector<48x1xf32> to vector<1x48x1xf32>
    %cst_9 = arith.constant dense<0.000000e+00> : vector<1xf32>
    %42 = vector.multi_reduction <add>, %41, %cst_9 [1, 2] : vector<1x48x1xf32> to vector<1xf32>
    %43 = vector.shape_cast %42 : vector<1xf32> to vector<1x1x1xf32>
    %44 = vector.extract %43[0, 0, 0] : f32 from vector<1x1x1xf32>
    %45 = arith.addf %39, %44 : f32
    %46 = vector.shape_cast %20 : vector<48x512xf32> to vector<1x48x512xf32>
    %cst_10 = arith.constant dense<0.000000e+00> : vector<1xf32>
    %47 = vector.multi_reduction <add>, %46, %cst_10 [1, 2] : vector<1x48x512xf32> to vector<1xf32>
    %48 = vector.shape_cast %47 : vector<1xf32> to vector<1x1x1xf32>
    %49 = vector.extract %48[0, 0, 0] : f32 from vector<1x1x1xf32>
    %50 = vector.shape_cast %30 : vector<48x1xf32> to vector<1x48x1xf32>
    %cst_11 = arith.constant dense<0.000000e+00> : vector<1xf32>
    %51 = vector.multi_reduction <add>, %50, %cst_11 [1, 2] : vector<1x48x1xf32> to vector<1xf32>
    %52 = vector.shape_cast %51 : vector<1xf32> to vector<1x1x1xf32>
    %53 = vector.extract %52[0, 0, 0] : f32 from vector<1x1x1xf32>
    %54 = arith.addf %49, %53 : f32
    %55 = arith.divf %20, %19 : vector<48x512xf32>
    %56 = math.log %55 : vector<48x512xf32>
    %57 = math.absf %56 : vector<48x512xf32>
    %58 = vector.shape_cast %57 : vector<48x512xf32> to vector<1x48x512xf32>
    %cst_12 = arith.constant dense<0.000000e+00> : vector<1xf32>
    %59 = vector.multi_reduction <add>, %58, %cst_12 [1, 2] : vector<1x48x512xf32> to vector<1xf32>
    %60 = vector.shape_cast %59 : vector<1xf32> to vector<1x1x1xf32>
    %61 = vector.extract %60[0, 0, 0] : f32 from vector<1x1x1xf32>
    %62 = arith.divf %30, %29 : vector<48x1xf32>
    %63 = math.log %62 : vector<48x1xf32>
    %64 = math.absf %63 : vector<48x1xf32>
    %65 = vector.shape_cast %64 : vector<48x1xf32> to vector<1x48x1xf32>
    %cst_13 = arith.constant dense<0.000000e+00> : vector<1xf32>
    %66 = vector.multi_reduction <add>, %65, %cst_13 [1, 2] : vector<1x48x1xf32> to vector<1xf32>
    %67 = vector.shape_cast %66 : vector<1xf32> to vector<1x1x1xf32>
    %68 = vector.extract %67[0, 0, 0] : f32 from vector<1x1x1xf32>
    %69 = arith.addf %61, %68 : f32
    %cst_14 = arith.constant 5.000000e-01 : f32
    %70 = arith.mulf %cst_14, %69 : f32
    %71 = tpu.iota {dimensions = array<i32: 1>} : vector<1x8x128xi32>
    %72 = tpu.iota {dimensions = array<i32: 2>} : vector<1x8x128xi32>
    %c0_i32_15 = arith.constant 0 : i32
    %73 = vector.broadcast %c0_i32_15 : i32 to vector<1x8x128xi32>
    %74 = arith.cmpi eq, %71, %73 : vector<1x8x128xi32>
    %c0_i32_16 = arith.constant 0 : i32
    %75 = vector.broadcast %c0_i32_16 : i32 to vector<1x8x128xi32>
    %76 = arith.cmpi eq, %72, %75 : vector<1x8x128xi32>
    %77 = arith.andi %74, %76 : vector<1x8x128xi1>
    %cst_17 = arith.constant 0.000000e+00 : f32
    %78 = vector.broadcast %45 : f32 to vector<1x8x128xf32>
    %79 = vector.broadcast %cst_17 : f32 to vector<1x8x128xf32>
    %80 = arith.select %77, %78, %79 : vector<1x8x128xi1>, vector<1x8x128xf32>
    %c0_i32_18 = arith.constant 0 : i32
    %81 = vector.broadcast %c0_i32_18 : i32 to vector<1x8x128xi32>
    %82 = arith.cmpi eq, %71, %81 : vector<1x8x128xi32>
    %c1_i32 = arith.constant 1 : i32
    %83 = vector.broadcast %c1_i32 : i32 to vector<1x8x128xi32>
    %84 = arith.cmpi eq, %72, %83 : vector<1x8x128xi32>
    %85 = arith.andi %82, %84 : vector<1x8x128xi1>
    %cst_19 = arith.constant 0.000000e+00 : f32
    %86 = vector.broadcast %54 : f32 to vector<1x8x128xf32>
    %87 = vector.broadcast %cst_19 : f32 to vector<1x8x128xf32>
    %88 = arith.select %85, %86, %87 : vector<1x8x128xi1>, vector<1x8x128xf32>
    %89 = arith.addf %80, %88 : vector<1x8x128xf32>
    %c0_i32_20 = arith.constant 0 : i32
    %90 = vector.broadcast %c0_i32_20 : i32 to vector<1x8x128xi32>
    %91 = arith.cmpi eq, %71, %90 : vector<1x8x128xi32>
    %c2_i32 = arith.constant 2 : i32
    %92 = vector.broadcast %c2_i32 : i32 to vector<1x8x128xi32>
    %93 = arith.cmpi eq, %72, %92 : vector<1x8x128xi32>
    %94 = arith.andi %91, %93 : vector<1x8x128xi1>
    %cst_21 = arith.constant 0.000000e+00 : f32
    %95 = vector.broadcast %70 : f32 to vector<1x8x128xf32>
    %96 = vector.broadcast %cst_21 : f32 to vector<1x8x128xf32>
    %97 = arith.select %94, %95, %96 : vector<1x8x128xi1>, vector<1x8x128xf32>
    %98 = arith.addf %89, %97 : vector<1x8x128xf32>
    %c0_i32_22 = arith.constant 0 : i32
    %99 = arith.cmpi eq, %arg1, %c0_i32_22 : i32
    %100 = arith.extui %99 : i1 to i32
    %c0_i32_23 = arith.constant 0 : i32
    %101 = arith.cmpi ne, %100, %c0_i32_23 : i32
    scf.if %101 {
      %cst_30 = arith.constant 0.000000e+00 : f32
      %105 = vector.broadcast %cst_30 : f32 to vector<1x8x128xf32>
      %c0_31 = arith.constant 0 : index
      %c0_32 = arith.constant 0 : index
      %c0_33 = arith.constant 0 : index
      %106 = vector.load %arg4[%c0_31, %c0_32, %c0_33] : memref<1x8x128xf32, #tpu.memory_space<vmem>>, vector<1x8x128xf32>
      tpu.vector_store %arg4[%c0_31, %c0_32, %c0_33], %105 {strides = array<i32>} : memref<1x8x128xf32, #tpu.memory_space<vmem>>, vector<1x8x128xf32>,
    } else {
    }
    %c0_24 = arith.constant 0 : index
    %c0_25 = arith.constant 0 : index
    %c0_26 = arith.constant 0 : index
    %102 = vector.load %arg4[%c0_24, %c0_25, %c0_26] : memref<1x8x128xf32, #tpu.memory_space<vmem>>, vector<1x8x128xf32>
    %103 = arith.addf %102, %98 : vector<1x8x128xf32>
    %c0_27 = arith.constant 0 : index
    %c0_28 = arith.constant 0 : index
    %c0_29 = arith.constant 0 : index
    %104 = vector.load %arg4[%c0_27, %c0_28, %c0_29] : memref<1x8x128xf32, #tpu.memory_space<vmem>>, vector<1x8x128xf32>
    tpu.vector_store %arg4[%c0_27, %c0_28, %c0_29], %103 {strides = array<i32>} : memref<1x8x128xf32, #tpu.memory_space<vmem>>, vector<1x8x128xf32>,
    return
  }
  func.func @transform_0(%arg0: i32, %arg1: i32) -> (i32, i32) {
    %c1_i32 = arith.constant 1 : i32
    %0 = arith.muli %arg0, %c1_i32 : i32
    %1 = arith.addi %0, %arg1 : i32
    %c0_i32 = arith.constant 0 : i32
    %c0_i32_0 = arith.constant 0 : i32
    return %1, %c0_i32 : i32, i32
  }
  func.func @transform_2(%arg0: i32, %arg1: i32) -> (i32, i32, i32) {
    %c0_i32 = arith.constant 0 : i32
    %c0_i32_0 = arith.constant 0 : i32
    %c0_i32_1 = arith.constant 0 : i32
    return %arg0, %c0_i32, %c0_i32_0 : i32, i32, i32
  }
}

</mosaic_0001>

<llo_original>
// kernel: tpu_custom_call.1
$region0: #{tpu_custom_call.1}
  #allocation0 [shape = 'u32[]', space=smem, size = 0x4, offset = 0x4, fixed_abs, tag = 'smem constant byte address 0x4 - core index']
  #allocation1 [shape = 'u32[144,128]{1,0:T(1,128)}', space=vmem, size = 0x12000, scoped, tag = 'internal scratch']
  #allocation2 [shape = 'bf16[1024,1024]{1,0:T(16,128)(2,1)}', space=vmem, size = 0x200000, scoped, tag = 'scratch operand']
  #allocation3 [shape = 's32[1]{0}', space=sflag, size = 0x4, scoped, tag = 'scratch operand']
  #allocation8 [shape = 's32[]', space=sflag, size = 0x4, offset = 0, fixed_abs, tag = 'sflag constant byte address 0x0 - dummy sync flag']
  %s0 = inlined_call_operand.hbm [shape: bf16[96,1024], index: 0, kind: input, shape index: {}]
  %s1 = inlined_call_operand.hbm [shape: bf16[1024,1024], index: 1, kind: input, shape index: {}]
  %s2 = inlined_call_operand.hbm [shape: f32[1,8,128], index: 2, kind: output, shape index: {}]
  %s3 = sld [smem:[#allocation0]]
  $region26: #{tpu_custom_call.1} parent=0
    _
  %s5 = ssub.s32 1, %s3
  %s6 = scalar_select 0, %s5, %s3
  $region1: #{tpu_custom_call.1} parent=0
    #allocation4 [shape = 'u8[196608]{0}', space=vmem, size = 0x30000, scoped, tag = 'input window, operand 0, single buffered']
    #allocation5 [shape = 's32[1]{0}', space=sflag, size = 0x4, scoped, tag = 'scoped memory for tpu_custom_call.1']
    #allocation6 [shape = 's32[1]{0}', space=sflag, size = 0x4, scoped, tag = 'scoped memory for tpu_custom_call.1']
    #allocation7 [shape = 'u8[4096]{0}', space=vmem, size = 0x1000, scoped, tag = 'output window, operand 0, single buffered']
    %7 = vsyncpa [#allocation5], 0
    %8 = vsyncpa [#allocation6], 0
    // Predicated region
    $region2: #{tpu_custom_call.1} parent=1 // pred_check
      _
    $region3: #{tpu_custom_call.1} parent=1 // pred_check_branch
      %10 = sbr.rel (0) target = $region5
    $region4: #{tpu_custom_call.1} parent=1 // pred_region
      %s11 = sadd.s32 0, 0
      %s12 = smul.u32 12, %s11
      %s14 = ssub.s32 6144, 6144
      %15 = vsyncadd [#allocation5], %s14
      %s16 = smul.addr %s12, 8
      %s17 = smul.addr %s16, 64
      %s18 = scalar_lea.hbm %s0, %s17
      %s19 = sshll.u32 [#allocation4], 4
      %s20 = int_to_ptr.vmem [resolvable:$true] %s19
      %25 = dma.hbm_to_vmem [thread:$0]  %s18, 6144, %s20, [#allocation5], 512, 512, 32
    $region5: #{tpu_custom_call.1} parent=1 // pred_fallthru
      _
    // Predicated region
    $region6: #{tpu_custom_call.1} parent=1 // pred_check
      _
    $region7: #{tpu_custom_call.1} parent=1 // pred_check_branch
      %27 = sbr.rel (0) target = $region9
    $region8: #{tpu_custom_call.1} parent=1 // pred_region
      %28 = dma.done [#allocation5], 6144
    $region9: #{tpu_custom_call.1} parent=1 // pred_fallthru
      _
    %s29 = sadd.s32 0, 0
    %s30 = smul.u32 12, %s29
    %p31 = scmp.eq.s32.totalorder 0, 0
    // Predicated region
    $region10: #{tpu_custom_call.1} parent=1 // pred_check
      %p32 = pneg %p31
    $region11: #{tpu_custom_call.1} parent=1 // pred_check_branch
      %34 = sbr.rel (%p32) target = $region13
    $region12: #{tpu_custom_call.1} parent=1 // pred_region
      #allocation9 [shape = 'u32[9]{0}', space=smem, size = 0x24, scoped, tag = 'DMA stride descriptor']
      %s36 = sshll.u32 1, 14
      %s37 = sxor.u32 4294967295, %s36
      %s39 = sld [smem:[#allocation0]]
      %s40 = sadd.s32 2, %s39
      %s42 = sshll.u32 7, 26
      %s43 = sxor.u32 4294967295, %s42
      %s44 = sand.u32 0, %s43
      %s45 = sshll.u32 %s40, 26
      %s46 = sor.u32 %s44, %s45
      %s47 = sshll.u32 [#allocation2], 4
      %s48 = int_to_ptr.vmem [resolvable:$true] %s47
      %51 = sst [smem:[#allocation9]] 1024
      %s52 = scalar_lea.smem [#allocation9], 1
      %53 = sst [smem:[%s52]] 1024
      %s54 = scalar_lea.smem [#allocation9], 2
      %55 = sst [smem:[%s54]] 8
      %s56 = scalar_lea.smem [#allocation9], 3
      %57 = sst [smem:[%s56]] 64
      %s58 = scalar_lea.smem [#allocation9], 4
      %59 = sst [smem:[%s58]] 128
      %s60 = scalar_lea.smem [#allocation9], 5
      %61 = sst [smem:[%s60]] 2
      %s62 = scalar_lea.smem [#allocation9], 6
      %63 = sst [smem:[%s62]] 512
      %s64 = scalar_lea.smem [#allocation9], 7
      %65 = sst [smem:[%s64]] 64
      %s66 = scalar_lea.smem [#allocation9], 8
      %67 = sst [smem:[%s66]] 4
      %69 = dma.general %s1, 65536, %s48, [#allocation3], [#allocation8], [#allocation9], %s46, 0
      %s70 = smul.u32 4, 128
      %s71 = smul.u32 %s70, 8
      %s72 = sshll.u32 %s71, 4
      %73 = dma.done [#allocation3], %s72
    $region13: #{tpu_custom_call.1} parent=1 // pred_fallthru
      _
    %v74 = vld [vmem:[#allocation4] sm:$0xff]
    %v75 = vld [vmem:[#allocation4 + $0x8] sm:$0xff]
    %v76 = vld [vmem:[#allocation4 + $0x10] sm:$0xff]
    %v77 = vld [vmem:[#allocation4 + $0x18] sm:$0xff]
    %v78 = vld [vmem:[#allocation4 + $0x20] sm:$0xff]
    %v79 = vld [vmem:[#allocation4 + $0x28] sm:$0xff]
    %v80 = vld [vmem:[#allocation4 + $0x30] sm:$0xff]
    %v81 = vld [vmem:[#allocation4 + $0x38] sm:$0xff]
    %v82 = vld [vmem:[#allocation4 + $0x40] sm:$0xff]
    %v83 = vld [vmem:[#allocation4 + $0x48] sm:$0xff]
    %v84 = vld [vmem:[#allocation4 + $0x50] sm:$0xff]
    %v85 = vld [vmem:[#allocation4 + $0x58] sm:$0xff]
    %v86 = vld [vmem:[#allocation4 + $0x60] sm:$0xff]
    %v87 = vld [vmem:[#allocation4 + $0x68] sm:$0xff]
    %v88 = vld [vmem:[#allocation4 + $0x70] sm:$0xff]
    %v89 = vld [vmem:[#allocation4 + $0x78] sm:$0xff]
    %v90 = vld [vmem:[#allocation4 + $0x80] sm:$0xff]
    %v91 = vld [vmem:[#allocation4 + $0x88] sm:$0xff]
    %v92 = vld [vmem:[#allocation4 + $0x90] sm:$0xff]
    %v93 = vld [vmem:[#allocation4 + $0x98] sm:$0xff]
    %v94 = vld [vmem:[#allocation4 + $0xa0] sm:$0xff]
    %v95 = vld [vmem:[#allocation4 + $0xa8] sm:$0xff]
    %v96 = vld [vmem:[#allocation4 + $0xb0] sm:$0xff]
    %v97 = vld [vmem:[#allocation4 + $0xb8] sm:$0xff]
    %v98 = vld [vmem:[#allocation4 + $0xc0] sm:$0xff]
    %v99 = vld [vmem:[#allocation4 + $0xc8] sm:$0xff]
    %v100 = vld [vmem:[#allocation4 + $0xd0] sm:$0xff]
    %v101 = vld [vmem:[#allocation4 + $0xd8] sm:$0xff]
    %v102 = vld [vmem:[#allocation4 + $0xe0] sm:$0xff]
    %v103 = vld [vmem:[#allocation4 + $0xe8] sm:$0xff]
    %v104 = vld [vmem:[#allocation4 + $0xf0] sm:$0xff]
    %v105 = vld [vmem:[#allocation4 + $0xf8] sm:$0xff]
    %v106 = vld [vmem:[#allocation4 + $0x100] sm:$0xff]
    %v107 = vld [vmem:[#allocation4 + $0x108] sm:$0xff]
    %v108 = vld [vmem:[#allocation4 + $0x110] sm:$0xff]
    %v109 = vld [vmem:[#allocation4 + $0x118] sm:$0xff]
    %v110 = vld [vmem:[#allocation4 + $0x120] sm:$0xff]
    %v111 = vld [vmem:[#allocation4 + $0x128] sm:$0xff]
    %v112 = vld [vmem:[#allocation4 + $0x130] sm:$0xff]
    %v113 = vld [vmem:[#allocation4 + $0x138] sm:$0xff]
    %v114 = vld [vmem:[#allocation4 + $0x140] sm:$0xff]
    %v115 = vld [vmem:[#allocation4 + $0x148] sm:$0xff]
    %v116 = vld [vmem:[#allocation4 + $0x150] sm:$0xff]
    %v117 = vld [vmem:[#allocation4 + $0x158] sm:$0xff]
    %v118 = vld [vmem:[#allocation4 + $0x160] sm:$0xff]
    %v119 = vld [vmem:[#allocation4 + $0x168] sm:$0xff]
    %v120 = vld [vmem:[#allocation4 + $0x170] sm:$0xff]
    %v121 = vld [vmem:[#allocation4 + $0x178] sm:$0xff]
    %v122 = vld [vmem:[#allocation2] sm:$0xff]
    %v123 = vld [vmem:[#allocation2 + $0x8] sm:$0xff]
    %v124 = vld [vmem:[#allocation2 + $0x10] sm:$0xff]
    %v125 = vld [vmem:[#allocation2 + $0x18] sm:$0xff]
    %v126 = vld [vmem:[#allocation2 + $0x20] sm:$0xff]
    %v127 = vld [vmem:[#allocation2 + $0x28] sm:$0xff]
    %v128 = vld [vmem:[#allocation2 + $0x30] sm:$0xff]
    %v129 = vld [vmem:[#allocation2 + $0x38] sm:$0xff]
    %v130 = vld [vmem:[#allocation2 + $0x40] sm:$0xff]
    %v131 = vld [vmem:[#allocation2 + $0x48] sm:$0xff]
    %v132 = vld [vmem:[#allocation2 + $0x50] sm:$0xff]
    %v133 = vld [vmem:[#allocation2 + $0x58] sm:$0xff]
    %v134 = vld [vmem:[#allocation2 + $0x60] sm:$0xff]
    %v135 = vld [vmem:[#allocation2 + $0x68] sm:$0xff]
    %v136 = vld [vmem:[#allocation2 + $0x70] sm:$0xff]
    %v137 = vld [vmem:[#allocation2 + $0x78] sm:$0xff]
    %v138 = vld [vmem:[#allocation2 + $0x80] sm:$0xff]
    %v139 = vld [vmem:[#allocation2 + $0x88] sm:$0xff]
    %v140 = vld [vmem:[#allocation2 + $0x90] sm:$0xff]
    %v141 = vld [vmem:[#allocation2 + $0x98] sm:$0xff]
    %v142 = vld [vmem:[#allocation2 + $0xa0] sm:$0xff]
    %v143 = vld [vmem:[#allocation2 + $0xa8] sm:$0xff]
    %v144 = vld [vmem:[#allocation2 + $0xb0] sm:$0xff]
    %v145 = vld [vmem:[#allocation2 + $0xb8] sm:$0xff]
    %v146 = vld [vmem:[#allocation2 + $0xc0] sm:$0xff]
    %v147 = vld [vmem:[#allocation2 + $0xc8] sm:$0xff]
    %v148 = vld [vmem:[#allocation2 + $0xd0] sm:$0xff]
    %v149 = vld [vmem:[#allocation2 + $0xd8] sm:$0xff]
    %v150 = vld [vmem:[#allocation2 + $0xe0] sm:$0xff]
    %v151 = vld [vmem:[#allocation2 + $0xe8] sm:$0xff]
    %v152 = vld [vmem:[#allocation2 + $0xf0] sm:$0xff]
    %v153 = vld [vmem:[#allocation2 + $0xf8] sm:$0xff]
    %v154 = vld [vmem:[#allocation2 + $0x100] sm:$0xff]
    %v155 = vld [vmem:[#allocation2 + $0x108] sm:$0xff]
    %v156 = vld [vmem:[#allocation2 + $0x110] sm:$0xff]
    %v157 = vld [vmem:[#allocation2 + $0x118] sm:$0xff]
    %v158 = vld [vmem:[#allocation2 + $0x120] sm:$0xff]
    %v159 = vld [vmem:[#allocation2 + $0x128] sm:$0xff]
    %v160 = vld [vmem:[#allocation2 + $0x130] sm:$0xff]
    %v161 = vld [vmem:[#allocation2 + $0x138] sm:$0xff]
    %v162 = vld [vmem:[#allocation2 + $0x140] sm:$0xff]
    %v163 = vld [vmem:[#allocation2 + $0x148] sm:$0xff]
    %v164 = vld [vmem:[#allocation2 + $0x150] sm:$0xff]
    %v165 = vld [vmem:[#allocation2 + $0x158] sm:$0xff]
    %v166 = vld [vmem:[#allocation2 + $0x160] sm:$0xff]
    %v167 = vld [vmem:[#allocation2 + $0x168] sm:$0xff]
    %v168 = vld [vmem:[#allocation2 + $0x170] sm:$0xff]
    %v169 = vld [vmem:[#allocation2 + $0x178] sm:$0xff]
    %v170 = vld [vmem:[#allocation2 + $0x180] sm:$0xff]
    %v171 = vld [vmem:[#allocation2 + $0x188] sm:$0xff]
    %v172 = vld [vmem:[#allocation2 + $0x190] sm:$0xff]
    %v173 = vld [vmem:[#allocation2 + $0x198] sm:$0xff]
    %v174 = vld [vmem:[#allocation2 + $0x1a0] sm:$0xff]
    %v175 = vld [vmem:[#allocation2 + $0x1a8] sm:$0xff]
    %v176 = vld [vmem:[#allocation2 + $0x1b0] sm:$0xff]
    %v177 = vld [vmem:[#allocation2 + $0x1b8] sm:$0xff]
    %v178 = vld [vmem:[#allocation2 + $0x1c0] sm:$0xff]
    %v179 = vld [vmem:[#allocation2 + $0x1c8] sm:$0xff]
    %v180 = vld [vmem:[#allocation2 + $0x1d0] sm:$0xff]
    %v181 = vld [vmem:[#allocation2 + $0x1d8] sm:$0xff]
    %v182 = vld [vmem:[#allocation2 + $0x1e0] sm:$0xff]
    %v183 = vld [vmem:[#allocation2 + $0x1e8] sm:$0xff]
    %v184 = vld [vmem:[#allocation2 + $0x1f0] sm:$0xff]
    %v185 = vld [vmem:[#allocation2 + $0x1f8] sm:$0xff]
    %v186 = vld [vmem:[#allocation2 + $0x200] sm:$0xff]
    %v187 = vld [vmem:[#allocation2 + $0x208] sm:$0xff]
    %v188 = vld [vmem:[#allocation2 + $0x210] sm:$0xff]
    %v189 = vld [vmem:[#allocation2 + $0x218] sm:$0xff]
    %v190 = vld [vmem:[#allocation2 + $0x220] sm:$0xff]
    %v191 = vld [vmem:[#allocation2 + $0x228] sm:$0xff]
    %v192 = vld [vmem:[#allocation2 + $0x230] sm:$0xff]
    %v193 = vld [vmem:[#allocation2 + $0x238] sm:$0xff]
    %v194 = vld [vmem:[#allocation2 + $0x240] sm:$0xff]
    %v195 = vld [vmem:[#allocation2 + $0x248] sm:$0xff]
    %v196 = vld [vmem:[#allocation2 + $0x250] sm:$0xff]
    %v197 = vld [vmem:[#allocation2 + $0x258] sm:$0xff]
    %v198 = vld [vmem:[#allocation2 + $0x260] sm:$0xff]
    %v199 = vld [vmem:[#allocation2 + $0x268] sm:$0xff]
    %v200 = vld [vmem:[#allocation2 + $0x270] sm:$0xff]
    %v201 = vld [vmem:[#allocation2 + $0x278] sm:$0xff]
    %v202 = vld [vmem:[#allocation2 + $0x280] sm:$0xff]
    %v203 = vld [vmem:[#allocation2 + $0x288] sm:$0xff]
    %v204 = vld [vmem:[#allocation2 + $0x290] sm:$0xff]
    %v205 = vld [vmem:[#allocation2 + $0x298] sm:$0xff]
    %v206 = vld [vmem:[#allocation2 + $0x2a0] sm:$0xff]
    %v207 = vld [vmem:[#allocation2 + $0x2a8] sm:$0xff]
    %v208 = vld [vmem:[#allocation2 + $0x2b0] sm:$0xff]
    %v209 = vld [vmem:[#allocation2 + $0x2b8] sm:$0xff]
    %v210 = vld [vmem:[#allocation2 + $0x2c0] sm:$0xff]
    %v211 = vld [vmem:[#allocation2 + $0x2c8] sm:$0xff]
    %v212 = vld [vmem:[#allocation2 + $0x2d0] sm:$0xff]
    %v213 = vld [vmem:[#allocation2 + $0x2d8] sm:$0xff]
    %v214 = vld [vmem:[#allocation2 + $0x2e0] sm:$0xff]
    %v215 = vld [vmem:[#allocation2 + $0x2e8] sm:$0xff]
    %v216 = vld [vmem:[#allocation2 + $0x2f0] sm:$0xff]
    %v217 = vld [vmem:[#allocation2 + $0x2f8] sm:$0xff]
    %v218 = vld [vmem:[#allocation2 + $0x300] sm:$0xff]
    %v219 = vld [vmem:[#allocation2 + $0x308] sm:$0xff]
    %v220 = vld [vmem:[#allocation2 + $0x310] sm:$0xff]
    %v221 = vld [vmem:[#allocation2 + $0x318] sm:$0xff]
    %v222 = vld [vmem:[#allocation2 + $0x320] sm:$0xff]
    %v223 = vld [vmem:[#allocation2 + $0x328] sm:$0xff]
    %v224 = vld [vmem:[#allocation2 + $0x330] sm:$0xff]
    %v225 = vld [vmem:[#allocation2 + $0x338] sm:$0xff]
    %v226 = vld [vmem:[#allocation2 + $0x340] sm:$0xff]
    %v227 = vld [vmem:[#allocation2 + $0x348] sm:$0xff]
    %v228 = vld [vmem:[#allocation2 + $0x350] sm:$0xff]
    %v229 = vld [vmem:[#allocation2 + $0x358] sm:$0xff]
    %v230 = vld [vmem:[#allocation2 + $0x360] sm:$0xff]
    %v231 = vld [vmem:[#allocation2 + $0x368] sm:$0xff]
    %v232 = vld [vmem:[#allocation2 + $0x370] sm:$0xff]
    %v233 = vld [vmem:[#allocation2 + $0x378] sm:$0xff]
    %v234 = vld [vmem:[#allocation2 + $0x380] sm:$0xff]
    %v235 = vld [vmem:[#allocation2 + $0x388] sm:$0xff]
    %v236 = vld [vmem:[#allocation2 + $0x390] sm:$0xff]
    %v237 = vld [vmem:[#allocation2 + $0x398] sm:$0xff]
    %v238 = vld [vmem:[#allocation2 + $0x3a0] sm:$0xff]
    %v239 = vld [vmem:[#allocation2 + $0x3a8] sm:$0xff]
    %v240 = vld [vmem:[#allocation2 + $0x3b0] sm:$0xff]
    %v241 = vld [vmem:[#allocation2 + $0x3b8] sm:$0xff]
    %v242 = vld [vmem:[#allocation2 + $0x3c0] sm:$0xff]
    %v243 = vld [vmem:[#allocation2 + $0x3c8] sm:$0xff]
    %v244 = vld [vmem:[#allocation2 + $0x3d0] sm:$0xff]
    %v245 = vld [vmem:[#allocation2 + $0x3d8] sm:$0xff]
    %v246 = vld [vmem:[#allocation2 + $0x3e0] sm:$0xff]
    %v247 = vld [vmem:[#allocation2 + $0x3e8] sm:$0xff]
    %v248 = vld [vmem:[#allocation2 + $0x3f0] sm:$0xff]
    %v249 = vld [vmem:[#allocation2 + $0x3f8] sm:$0xff]
    %v250 = vld [vmem:[#allocation2 + $0x400] sm:$0xff]
    %v251 = vld [vmem:[#allocation2 + $0x408] sm:$0xff]
    %v252 = vld [vmem:[#allocation2 + $0x410] sm:$0xff]
    %v253 = vld [vmem:[#allocation2 + $0x418] sm:$0xff]
    %v254 = vld [vmem:[#allocation2 + $0x420] sm:$0xff]
    %v255 = vld [vmem:[#allocation2 + $0x428] sm:$0xff]
    %v256 = vld [vmem:[#allocation2 + $0x430] sm:$0xff]
    %v257 = vld [vmem:[#allocation2 + $0x438] sm:$0xff]
    %v258 = vld [vmem:[#allocation2 + $0x440] sm:$0xff]
    %v259 = vld [vmem:[#allocation2 + $0x448] sm:$0xff]
    %v260 = vld [vmem:[#allocation2 + $0x450] sm:$0xff]
    %v261 = vld [vmem:[#allocation2 + $0x458] sm:$0xff]
    %v262 = vld [vmem:[#allocation2 + $0x460] sm:$0xff]
    %v263 = vld [vmem:[#allocation2 + $0x468] sm:$0xff]
    %v264 = vld [vmem:[#allocation2 + $0x470] sm:$0xff]
    %v265 = vld [vmem:[#allocation2 + $0x478] sm:$0xff]
    %v266 = vld [vmem:[#allocation2 + $0x480] sm:$0xff]
    %v267 = vld [vmem:[#allocation2 + $0x488] sm:$0xff]
    %v268 = vld [vmem:[#allocation2 + $0x490] sm:$0xff]
    %v269 = vld [vmem:[#allocation2 + $0x498] sm:$0xff]
    %v270 = vld [vmem:[#allocation2 + $0x4a0] sm:$0xff]
    %v271 = vld [vmem:[#allocation2 + $0x4a8] sm:$0xff]
    %v272 = vld [vmem:[#allocation2 + $0x4b0] sm:$0xff]
    %v273 = vld [vmem:[#allocation2 + $0x4b8] sm:$0xff]
    %v274 = vld [vmem:[#allocation2 + $0x4c0] sm:$0xff]
    %v275 = vld [vmem:[#allocation2 + $0x4c8] sm:$0xff]
    %v276 = vld [vmem:[#allocation2 + $0x4d0] sm:$0xff]
    %v277 = vld [vmem:[#allocation2 + $0x4d8] sm:$0xff]
    %v278 = vld [vmem:[#allocation2 + $0x4e0] sm:$0xff]
    %v279 = vld [vmem:[#allocation2 + $0x4e8] sm:$0xff]
    %v280 = vld [vmem:[#allocation2 + $0x4f0] sm:$0xff]
    %v281 = vld [vmem:[#allocation2 + $0x4f8] sm:$0xff]
    %v282 = vld [vmem:[#allocation2 + $0x500] sm:$0xff]
    %v283 = vld [vmem:[#allocation2 + $0x508] sm:$0xff]
    %v284 = vld [vmem:[#allocation2 + $0x510] sm:$0xff]
    %v285 = vld [vmem:[#allocation2 + $0x518] sm:$0xff]
    %v286 = vld [vmem:[#allocation2 + $0x520] sm:$0xff]
    %v287 = vld [vmem:[#allocation2 + $0x528] sm:$0xff]
    %v288 = vld [vmem:[#allocation2 + $0x530] sm:$0xff]
    %v289 = vld [vmem:[#allocation2 + $0x538] sm:$0xff]
    %v290 = vld [vmem:[#allocation2 + $0x540] sm:$0xff]
    %v291 = vld [vmem:[#allocation2 + $0x548] sm:$0xff]
    %v292 = vld [vmem:[#allocation2 + $0x550] sm:$0xff]
    %v293 = vld [vmem:[#allocation2 + $0x558] sm:$0xff]
    %v294 = vld [vmem:[#allocation2 + $0x560] sm:$0xff]
    %v295 = vld [vmem:[#allocation2 + $0x568] sm:$0xff]
    %v296 = vld [vmem:[#allocation2 + $0x570] sm:$0xff]
    %v297 = vld [vmem:[#allocation2 + $0x578] sm:$0xff]
    %v298 = vld [vmem:[#allocation2 + $0x580] sm:$0xff]
    %v299 = vld [vmem:[#allocation2 + $0x588] sm:$0xff]
    %v300 = vld [vmem:[#allocation2 + $0x590] sm:$0xff]
    %v301 = vld [vmem:[#allocation2 + $0x598] sm:$0xff]
    %v302 = vld [vmem:[#allocation2 + $0x5a0] sm:$0xff]
    %v303 = vld [vmem:[#allocation2 + $0x5a8] sm:$0xff]
    %v304 = vld [vmem:[#allocation2 + $0x5b0] sm:$0xff]
    %v305 = vld [vmem:[#allocation2 + $0x5b8] sm:$0xff]
    %v306 = vld [vmem:[#allocation2 + $0x5c0] sm:$0xff]
    %v307 = vld [vmem:[#allocation2 + $0x5c8] sm:$0xff]
    %v308 = vld [vmem:[#allocation2 + $0x5d0] sm:$0xff]
    %v309 = vld [vmem:[#allocation2 + $0x5d8] sm:$0xff]
    %v310 = vld [vmem:[#allocation2 + $0x5e0] sm:$0xff]
    %v311 = vld [vmem:[#allocation2 + $0x5e8] sm:$0xff]
    %v312 = vld [vmem:[#allocation2 + $0x5f0] sm:$0xff]
    %v313 = vld [vmem:[#allocation2 + $0x5f8] sm:$0xff]
    %v314 = vld [vmem:[#allocation2 + $0x600] sm:$0xff]
    %v315 = vld [vmem:[#allocation2 + $0x608] sm:$0xff]
    %v316 = vld [vmem:[#allocation2 + $0x610] sm:$0xff]
    %v317 = vld [vmem:[#allocation2 + $0x618] sm:$0xff]
    %v318 = vld [vmem:[#allocation2 + $0x620] sm:$0xff]
    %v319 = vld [vmem:[#allocation2 + $0x628] sm:$0xff]
    %v320 = vld [vmem:[#allocation2 + $0x630] sm:$0xff]
    %v321 = vld [vmem:[#allocation2 + $0x638] sm:$0xff]
    %v322 = vld [vmem:[#allocation2 + $0x640] sm:$0xff]
    %v323 = vld [vmem:[#allocation2 + $0x648] sm:$0xff]
    %v324 = vld [vmem:[#allocation2 + $0x650] sm:$0xff]
    %v325 = vld [vmem:[#allocation2 + $0x658] sm:$0xff]
    %v326 = vld [vmem:[#allocation2 + $0x660] sm:$0xff]
    %v327 = vld [vmem:[#allocation2 + $0x668] sm:$0xff]
    %v328 = vld [vmem:[#allocation2 + $0x670] sm:$0xff]
    %v329 = vld [vmem:[#allocation2 + $0x678] sm:$0xff]
    %v330 = vld [vmem:[#allocation2 + $0x680] sm:$0xff]
    %v331 = vld [vmem:[#allocation2 + $0x688] sm:$0xff]
    %v332 = vld [vmem:[#allocation2 + $0x690] sm:$0xff]
    %v333 = vld [vmem:[#allocation2 + $0x698] sm:$0xff]
    %v334 = vld [vmem:[#allocation2 + $0x6a0] sm:$0xff]
    %v335 = vld [vmem:[#allocation2 + $0x6a8] sm:$0xff]
    %v336 = vld [vmem:[#allocation2 + $0x6b0] sm:$0xff]
    %v337 = vld [vmem:[#allocation2 + $0x6b8] sm:$0xff]
    %v338 = vld [vmem:[#allocation2 + $0x6c0] sm:$0xff]
    %v339 = vld [vmem:[#allocation2 + $0x6c8] sm:$0xff]
    %v340 = vld [vmem:[#allocation2 + $0x6d0] sm:$0xff]
    %v341 = vld [vmem:[#allocation2 + $0x6d8] sm:$0xff]
    %v342 = vld [vmem:[#allocation2 + $0x6e0] sm:$0xff]
    %v343 = vld [vmem:[#allocation2 + $0x6e8] sm:$0xff]
    %v344 = vld [vmem:[#allocation2 + $0x6f0] sm:$0xff]
    %v345 = vld [vmem:[#allocation2 + $0x6f8] sm:$0xff]
    %v346 = vld [vmem:[#allocation2 + $0x700] sm:$0xff]
    %v347 = vld [vmem:[#allocation2 + $0x708] sm:$0xff]
    %v348 = vld [vmem:[#allocation2 + $0x710] sm:$0xff]
    %v349 = vld [vmem:[#allocation2 + $0x718] sm:$0xff]
    %v350 = vld [vmem:[#allocation2 + $0x720] sm:$0xff]
    %v351 = vld [vmem:[#allocation2 + $0x728] sm:$0xff]
    %v352 = vld [vmem:[#allocation2 + $0x730] sm:$0xff]
    %v353 = vld [vmem:[#allocation2 + $0x738] sm:$0xff]
    %v354 = vld [vmem:[#allocation2 + $0x740] sm:$0xff]
    %v355 = vld [vmem:[#allocation2 + $0x748] sm:$0xff]
    %v356 = vld [vmem:[#allocation2 + $0x750] sm:$0xff]
    %v357 = vld [vmem:[#allocation2 + $0x758] sm:$0xff]
    %v358 = vld [vmem:[#allocation2 + $0x760] sm:$0xff]
    %v359 = vld [vmem:[#allocation2 + $0x768] sm:$0xff]
    %v360 = vld [vmem:[#allocation2 + $0x770] sm:$0xff]
    %v361 = vld [vmem:[#allocation2 + $0x778] sm:$0xff]
    %v362 = vld [vmem:[#allocation2 + $0x780] sm:$0xff]
    %v363 = vld [vmem:[#allocation2 + $0x788] sm:$0xff]
    %v364 = vld [vmem:[#allocation2 + $0x790] sm:$0xff]
    %v365 = vld [vmem:[#allocation2 + $0x798] sm:$0xff]
    %v366 = vld [vmem:[#allocation2 + $0x7a0] sm:$0xff]
    %v367 = vld [vmem:[#allocation2 + $0x7a8] sm:$0xff]
    %v368 = vld [vmem:[#allocation2 + $0x7b0] sm:$0xff]
    %v369 = vld [vmem:[#allocation2 + $0x7b8] sm:$0xff]
    %v370 = vld [vmem:[#allocation2 + $0x7c0] sm:$0xff]
    %v371 = vld [vmem:[#allocation2 + $0x7c8] sm:$0xff]
    %v372 = vld [vmem:[#allocation2 + $0x7d0] sm:$0xff]
    %v373 = vld [vmem:[#allocation2 + $0x7d8] sm:$0xff]
    %v374 = vld [vmem:[#allocation2 + $0x7e0] sm:$0xff]
    %v375 = vld [vmem:[#allocation2 + $0x7e8] sm:$0xff]
    %v376 = vld [vmem:[#allocation2 + $0x7f0] sm:$0xff]
    %v377 = vld [vmem:[#allocation2 + $0x7f8] sm:$0xff]
    %v378 = vld [vmem:[#allocation2 + $0x800] sm:$0xff]
    %v379 = vld [vmem:[#allocation2 + $0x808] sm:$0xff]
    %v380 = vld [vmem:[#allocation2 + $0x810] sm:$0xff]
    %v381 = vld [vmem:[#allocation2 + $0x818] sm:$0xff]
    %v382 = vld [vmem:[#allocation2 + $0x820] sm:$0xff]
    %v383 = vld [vmem:[#allocation2 + $0x828] sm:$0xff]
    %v384 = vld [vmem:[#allocation2 + $0x830] sm:$0xff]
    %v385 = vld [vmem:[#allocation2 + $0x838] sm:$0xff]
    %v386 = vld [vmem:[#allocation2 + $0x840] sm:$0xff]
    %v387 = vld [vmem:[#allocation2 + $0x848] sm:$0xff]
    %v388 = vld [vmem:[#allocation2 + $0x850] sm:$0xff]
    %v389 = vld [vmem:[#allocation2 + $0x858] sm:$0xff]
    %v390 = vld [vmem:[#allocation2 + $0x860] sm:$0xff]
    %v391 = vld [vmem:[#allocation2 + $0x868] sm:$0xff]
    %v392 = vld [vmem:[#allocation2 + $0x870] sm:$0xff]
    %v393 = vld [vmem:[#allocation2 + $0x878] sm:$0xff]
    %v394 = vld [vmem:[#allocation2 + $0x880] sm:$0xff]
    %v395 = vld [vmem:[#allocation2 + $0x888] sm:$0xff]
    %v396 = vld [vmem:[#allocation2 + $0x890] sm:$0xff]
    %v397 = vld [vmem:[#allocation2 + $0x898] sm:$0xff]
    %v398 = vld [vmem:[#allocation2 + $0x8a0] sm:$0xff]
    %v399 = vld [vmem:[#allocation2 + $0x8a8] sm:$0xff]
    %v400 = vld [vmem:[#allocation2 + $0x8b0] sm:$0xff]
    %v401 = vld [vmem:[#allocation2 + $0x8b8] sm:$0xff]
    %v402 = vld [vmem:[#allocation2 + $0x8c0] sm:$0xff]
    %v403 = vld [vmem:[#allocation2 + $0x8c8] sm:$0xff]
    %v404 = vld [vmem:[#allocation2 + $0x8d0] sm:$0xff]
    %v405 = vld [vmem:[#allocation2 + $0x8d8] sm:$0xff]
    %v406 = vld [vmem:[#allocation2 + $0x8e0] sm:$0xff]
    %v407 = vld [vmem:[#allocation2 + $0x8e8] sm:$0xff]
    %v408 = vld [vmem:[#allocation2 + $0x8f0] sm:$0xff]
    %v409 = vld [vmem:[#allocation2 + $0x8f8] sm:$0xff]
    %v410 = vld [vmem:[#allocation2 + $0x900] sm:$0xff]
    %v411 = vld [vmem:[#allocation2 + $0x908] sm:$0xff]
    %v412 = vld [vmem:[#allocation2 + $0x910] sm:$0xff]
    %v413 = vld [vmem:[#allocation2 + $0x918] sm:$0xff]
    %v414 = vld [vmem:[#allocation2 + $0x920] sm:$0xff]
    %v415 = vld [vmem:[#allocation2 + $0x928] sm:$0xff]
    %v416 = vld [vmem:[#allocation2 + $0x930] sm:$0xff]
    %v417 = vld [vmem:[#allocation2 + $0x938] sm:$0xff]
    %v418 = vld [vmem:[#allocation2 + $0x940] sm:$0xff]
    %v419 = vld [vmem:[#allocation2 + $0x948] sm:$0xff]
    %v420 = vld [vmem:[#allocation2 + $0x950] sm:$0xff]
    %v421 = vld [vmem:[#allocation2 + $0x958] sm:$0xff]
    %v422 = vld [vmem:[#allocation2 + $0x960] sm:$0xff]
    %v423 = vld [vmem:[#allocation2 + $0x968] sm:$0xff]
    %v424 = vld [vmem:[#allocation2 + $0x970] sm:$0xff]
    %v425 = vld [vmem:[#allocation2 + $0x978] sm:$0xff]
    %v426 = vld [vmem:[#allocation2 + $0x980] sm:$0xff]
    %v427 = vld [vmem:[#allocation2 + $0x988] sm:$0xff]
    %v428 = vld [vmem:[#allocation2 + $0x990] sm:$0xff]
    %v429 = vld [vmem:[#allocation2 + $0x998] sm:$0xff]
    %v430 = vld [vmem:[#allocation2 + $0x9a0] sm:$0xff]
    %v431 = vld [vmem:[#allocation2 + $0x9a8] sm:$0xff]
    %v432 = vld [vmem:[#allocation2 + $0x9b0] sm:$0xff]
    %v433 = vld [vmem:[#allocation2 + $0x9b8] sm:$0xff]
    %v434 = vld [vmem:[#allocation2 + $0x9c0] sm:$0xff]
    %v435 = vld [vmem:[#allocation2 + $0x9c8] sm:$0xff]
    %v436 = vld [vmem:[#allocation2 + $0x9d0] sm:$0xff]
    %v437 = vld [vmem:[#allocation2 + $0x9d8] sm:$0xff]
    %v438 = vld [vmem:[#allocation2 + $0x9e0] sm:$0xff]
    %v439 = vld [vmem:[#allocation2 + $0x9e8] sm:$0xff]
    %v440 = vld [vmem:[#allocation2 + $0x9f0] sm:$0xff]
    %v441 = vld [vmem:[#allocation2 + $0x9f8] sm:$0xff]
    %v442 = vld [vmem:[#allocation2 + $0xa00] sm:$0xff]
    %v443 = vld [vmem:[#allocation2 + $0xa08] sm:$0xff]
    %v444 = vld [vmem:[#allocation2 + $0xa10] sm:$0xff]
    %v445 = vld [vmem:[#allocation2 + $0xa18] sm:$0xff]
    %v446 = vld [vmem:[#allocation2 + $0xa20] sm:$0xff]
    %v447 = vld [vmem:[#allocation2 + $0xa28] sm:$0xff]
    %v448 = vld [vmem:[#allocation2 + $0xa30] sm:$0xff]
    %v449 = vld [vmem:[#allocation2 + $0xa38] sm:$0xff]
    %v450 = vld [vmem:[#allocation2 + $0xa40] sm:$0xff]
    %v451 = vld [vmem:[#allocation2 + $0xa48] sm:$0xff]
    %v452 = vld [vmem:[#allocation2 + $0xa50] sm:$0xff]
    %v453 = vld [vmem:[#allocation2 + $0xa58] sm:$0xff]
    %v454 = vld [vmem:[#allocation2 + $0xa60] sm:$0xff]
    %v455 = vld [vmem:[#allocation2 + $0xa68] sm:$0xff]
    %v456 = vld [vmem:[#allocation2 + $0xa70] sm:$0xff]
    %v457 = vld [vmem:[#allocation2 + $0xa78] sm:$0xff]
    %v458 = vld [vmem:[#allocation2 + $0xa80] sm:$0xff]
    %v459 = vld [vmem:[#allocation2 + $0xa88] sm:$0xff]
    %v460 = vld [vmem:[#allocation2 + $0xa90] sm:$0xff]
    %v461 = vld [vmem:[#allocation2 + $0xa98] sm:$0xff]
    %v462 = vld [vmem:[#allocation2 + $0xaa0] sm:$0xff]
    %v463 = vld [vmem:[#allocation2 + $0xaa8] sm:$0xff]
    %v464 = vld [vmem:[#allocation2 + $0xab0] sm:$0xff]
    %v465 = vld [vmem:[#allocation2 + $0xab8] sm:$0xff]
    %v466 = vld [vmem:[#allocation2 + $0xac0] sm:$0xff]
    %v467 = vld [vmem:[#allocation2 + $0xac8] sm:$0xff]
    %v468 = vld [vmem:[#allocation2 + $0xad0] sm:$0xff]
    %v469 = vld [vmem:[#allocation2 + $0xad8] sm:$0xff]
    %v470 = vld [vmem:[#allocation2 + $0xae0] sm:$0xff]
    %v471 = vld [vmem:[#allocation2 + $0xae8] sm:$0xff]
    %v472 = vld [vmem:[#allocation2 + $0xaf0] sm:$0xff]
    %v473 = vld [vmem:[#allocation2 + $0xaf8] sm:$0xff]
    %v474 = vld [vmem:[#allocation2 + $0xb00] sm:$0xff]
    %v475 = vld [vmem:[#allocation2 + $0xb08] sm:$0xff]
    %v476 = vld [vmem:[#allocation2 + $0xb10] sm:$0xff]
    %v477 = vld [vmem:[#allocation2 + $0xb18] sm:$0xff]
    %v478 = vld [vmem:[#allocation2 + $0xb20] sm:$0xff]
    %v479 = vld [vmem:[#allocation2 + $0xb28] sm:$0xff]
    %v480 = vld [vmem:[#allocation2 + $0xb30] sm:$0xff]
    %v481 = vld [vmem:[#allocation2 + $0xb38] sm:$0xff]
    %v482 = vld [vmem:[#allocation2 + $0xb40] sm:$0xff]
    %v483 = vld [vmem:[#allocation2 + $0xb48] sm:$0xff]
    %v484 = vld [vmem:[#allocation2 + $0xb50] sm:$0xff]
    %v485 = vld [vmem:[#allocation2 + $0xb58] sm:$0xff]
    %v486 = vld [vmem:[#allocation2 + $0xb60] sm:$0xff]
    %v487 = vld [vmem:[#allocation2 + $0xb68] sm:$0xff]
    %v488 = vld [vmem:[#allocation2 + $0xb70] sm:$0xff]
    %v489 = vld [vmem:[#allocation2 + $0xb78] sm:$0xff]
    %v490 = vld [vmem:[#allocation2 + $0xb80] sm:$0xff]
    %v491 = vld [vmem:[#allocation2 + $0xb88] sm:$0xff]
    %v492 = vld [vmem:[#allocation2 + $0xb90] sm:$0xff]
    %v493 = vld [vmem:[#allocation2 + $0xb98] sm:$0xff]
    %v494 = vld [vmem:[#allocation2 + $0xba0] sm:$0xff]
    %v495 = vld [vmem:[#allocation2 + $0xba8] sm:$0xff]
    %v496 = vld [vmem:[#allocation2 + $0xbb0] sm:$0xff]
    %v497 = vld [vmem:[#allocation2 + $0xbb8] sm:$0xff]
    %v498 = vld [vmem:[#allocation2 + $0xbc0] sm:$0xff]
    %v499 = vld [vmem:[#allocation2 + $0xbc8] sm:$0xff]
    %v500 = vld [vmem:[#allocation2 + $0xbd0] sm:$0xff]
    %v501 = vld [vmem:[#allocation2 + $0xbd8] sm:$0xff]
    %v502 = vld [vmem:[#allocation2 + $0xbe0] sm:$0xff]
    %v503 = vld [vmem:[#allocation2 + $0xbe8] sm:$0xff]
    %v504 = vld [vmem:[#allocation2 + $0xbf0] sm:$0xff]
    %v505 = vld [vmem:[#allocation2 + $0xbf8] sm:$0xff]
    %v506 = vld [vmem:[#allocation2 + $0xc00] sm:$0xff]
    %v507 = vld [vmem:[#allocation2 + $0xc08] sm:$0xff]
    %v508 = vld [vmem:[#allocation2 + $0xc10] sm:$0xff]
    %v509 = vld [vmem:[#allocation2 + $0xc18] sm:$0xff]
    %v510 = vld [vmem:[#allocation2 + $0xc20] sm:$0xff]
    %v511 = vld [vmem:[#allocation2 + $0xc28] sm:$0xff]
    %v512 = vld [vmem:[#allocation2 + $0xc30] sm:$0xff]
    %v513 = vld [vmem:[#allocation2 + $0xc38] sm:$0xff]
    %v514 = vld [vmem:[#allocation2 + $0xc40] sm:$0xff]
    %v515 = vld [vmem:[#allocation2 + $0xc48] sm:$0xff]
    %v516 = vld [vmem:[#allocation2 + $0xc50] sm:$0xff]
    %v517 = vld [vmem:[#allocation2 + $0xc58] sm:$0xff]
    %v518 = vld [vmem:[#allocation2 + $0xc60] sm:$0xff]
    %v519 = vld [vmem:[#allocation2 + $0xc68] sm:$0xff]
    %v520 = vld [vmem:[#allocation2 + $0xc70] sm:$0xff]
    %v521 = vld [vmem:[#allocation2 + $0xc78] sm:$0xff]
    %v522 = vld [vmem:[#allocation2 + $0xc80] sm:$0xff]
    %v523 = vld [vmem:[#allocation2 + $0xc88] sm:$0xff]
    %v524 = vld [vmem:[#allocation2 + $0xc90] sm:$0xff]
    %v525 = vld [vmem:[#allocation2 + $0xc98] sm:$0xff]
    %v526 = vld [vmem:[#allocation2 + $0xca0] sm:$0xff]
    %v527 = vld [vmem:[#allocation2 + $0xca8] sm:$0xff]
    %v528 = vld [vmem:[#allocation2 + $0xcb0] sm:$0xff]
    %v529 = vld [vmem:[#allocation2 + $0xcb8] sm:$0xff]
    %v530 = vld [vmem:[#allocation2 + $0xcc0] sm:$0xff]
    %v531 = vld [vmem:[#allocation2 + $0xcc8] sm:$0xff]
    %v532 = vld [vmem:[#allocation2 + $0xcd0] sm:$0xff]
    %v533 = vld [vmem:[#allocation2 + $0xcd8] sm:$0xff]
    %v534 = vld [vmem:[#allocation2 + $0xce0] sm:$0xff]
    %v535 = vld [vmem:[#allocation2 + $0xce8] sm:$0xff]
    %v536 = vld [vmem:[#allocation2 + $0xcf0] sm:$0xff]
    %v537 = vld [vmem:[#allocation2 + $0xcf8] sm:$0xff]
    %v538 = vld [vmem:[#allocation2 + $0xd00] sm:$0xff]
    %v539 = vld [vmem:[#allocation2 + $0xd08] sm:$0xff]
    %v540 = vld [vmem:[#allocation2 + $0xd10] sm:$0xff]
    %v541 = vld [vmem:[#allocation2 + $0xd18] sm:$0xff]
    %v542 = vld [vmem:[#allocation2 + $0xd20] sm:$0xff]
    %v543 = vld [vmem:[#allocation2 + $0xd28] sm:$0xff]
    %v544 = vld [vmem:[#allocation2 + $0xd30] sm:$0xff]
    %v545 = vld [vmem:[#allocation2 + $0xd38] sm:$0xff]
    %v546 = vld [vmem:[#allocation2 + $0xd40] sm:$0xff]
    %v547 = vld [vmem:[#allocation2 + $0xd48] sm:$0xff]
    %v548 = vld [vmem:[#allocation2 + $0xd50] sm:$0xff]
    %v549 = vld [vmem:[#allocation2 + $0xd58] sm:$0xff]
    %v550 = vld [vmem:[#allocation2 + $0xd60] sm:$0xff]
    %v551 = vld [vmem:[#allocation2 + $0xd68] sm:$0xff]
    %v552 = vld [vmem:[#allocation2 + $0xd70] sm:$0xff]
    %v553 = vld [vmem:[#allocation2 + $0xd78] sm:$0xff]
    %v554 = vld [vmem:[#allocation2 + $0xd80] sm:$0xff]
    %v555 = vld [vmem:[#allocation2 + $0xd88] sm:$0xff]
    %v556 = vld [vmem:[#allocation2 + $0xd90] sm:$0xff]
    %v557 = vld [vmem:[#allocation2 + $0xd98] sm:$0xff]
    %v558 = vld [vmem:[#allocation2 + $0xda0] sm:$0xff]
    %v559 = vld [vmem:[#allocation2 + $0xda8] sm:$0xff]
    %v560 = vld [vmem:[#allocation2 + $0xdb0] sm:$0xff]
    %v561 = vld [vmem:[#allocation2 + $0xdb8] sm:$0xff]
    %v562 = vld [vmem:[#allocation2 + $0xdc0] sm:$0xff]
    %v563 = vld [vmem:[#allocation2 + $0xdc8] sm:$0xff]
    %v564 = vld [vmem:[#allocation2 + $0xdd0] sm:$0xff]
    %v565 = vld [vmem:[#allocation2 + $0xdd8] sm:$0xff]
    %v566 = vld [vmem:[#allocation2 + $0xde0] sm:$0xff]
    %v567 = vld [vmem:[#allocation2 + $0xde8] sm:$0xff]
    %v568 = vld [vmem:[#allocation2 + $0xdf0] sm:$0xff]
    %v569 = vld [vmem:[#allocation2 + $0xdf8] sm:$0xff]
    %v570 = vld [vmem:[#allocation2 + $0xe00] sm:$0xff]
    %v571 = vld [vmem:[#allocation2 + $0xe08] sm:$0xff]
    %v572 = vld [vmem:[#allocation2 + $0xe10] sm:$0xff]
    %v573 = vld [vmem:[#allocation2 + $0xe18] sm:$0xff]
    %v574 = vld [vmem:[#allocation2 + $0xe20] sm:$0xff]
    %v575 = vld [vmem:[#allocation2 + $0xe28] sm:$0xff]
    %v576 = vld [vmem:[#allocation2 + $0xe30] sm:$0xff]
    %v577 = vld [vmem:[#allocation2 + $0xe38] sm:$0xff]
    %v578 = vld [vmem:[#allocation2 + $0xe40] sm:$0xff]
    %v579 = vld [vmem:[#allocation2 + $0xe48] sm:$0xff]
    %v580 = vld [vmem:[#allocation2 + $0xe50] sm:$0xff]
    %v581 = vld [vmem:[#allocation2 + $0xe58] sm:$0xff]
    %v582 = vld [vmem:[#allocation2 + $0xe60] sm:$0xff]
    %v583 = vld [vmem:[#allocation2 + $0xe68] sm:$0xff]
    %v584 = vld [vmem:[#allocation2 + $0xe70] sm:$0xff]
    %v585 = vld [vmem:[#allocation2 + $0xe78] sm:$0xff]
    %v586 = vld [vmem:[#allocation2 + $0xe80] sm:$0xff]
    %v587 = vld [vmem:[#allocation2 + $0xe88] sm:$0xff]
    %v588 = vld [vmem:[#allocation2 + $0xe90] sm:$0xff]
    %v589 = vld [vmem:[#allocation2 + $0xe98] sm:$0xff]
    %v590 = vld [vmem:[#allocation2 + $0xea0] sm:$0xff]
    %v591 = vld [vmem:[#allocation2 + $0xea8] sm:$0xff]
    %v592 = vld [vmem:[#allocation2 + $0xeb0] sm:$0xff]
    %v593 = vld [vmem:[#allocation2 + $0xeb8] sm:$0xff]
    %v594 = vld [vmem:[#allocation2 + $0xec0] sm:$0xff]
    %v595 = vld [vmem:[#allocation2 + $0xec8] sm:$0xff]
    %v596 = vld [vmem:[#allocation2 + $0xed0] sm:$0xff]
    %v597 = vld [vmem:[#allocation2 + $0xed8] sm:$0xff]
    %v598 = vld [vmem:[#allocation2 + $0xee0] sm:$0xff]
    %v599 = vld [vmem:[#allocation2 + $0xee8] sm:$0xff]
    %v600 = vld [vmem:[#allocation2 + $0xef0] sm:$0xff]
    %v601 = vld [vmem:[#allocation2 + $0xef8] sm:$0xff]
    %v602 = vld [vmem:[#allocation2 + $0xf00] sm:$0xff]
    %v603 = vld [vmem:[#allocation2 + $0xf08] sm:$0xff]
    %v604 = vld [vmem:[#allocation2 + $0xf10] sm:$0xff]
    %v605 = vld [vmem:[#allocation2 + $0xf18] sm:$0xff]
    %v606 = vld [vmem:[#allocation2 + $0xf20] sm:$0xff]
    %v607 = vld [vmem:[#allocation2 + $0xf28] sm:$0xff]
    %v608 = vld [vmem:[#allocation2 + $0xf30] sm:$0xff]
    %v609 = vld [vmem:[#allocation2 + $0xf38] sm:$0xff]
    %v610 = vld [vmem:[#allocation2 + $0xf40] sm:$0xff]
    %v611 = vld [vmem:[#allocation2 + $0xf48] sm:$0xff]
    %v612 = vld [vmem:[#allocation2 + $0xf50] sm:$0xff]
    %v613 = vld [vmem:[#allocation2 + $0xf58] sm:$0xff]
    %v614 = vld [vmem:[#allocation2 + $0xf60] sm:$0xff]
    %v615 = vld [vmem:[#allocation2 + $0xf68] sm:$0xff]
    %v616 = vld [vmem:[#allocation2 + $0xf70] sm:$0xff]
    %v617 = vld [vmem:[#allocation2 + $0xf78] sm:$0xff]
    %v618 = vld [vmem:[#allocation2 + $0xf80] sm:$0xff]
    %v619 = vld [vmem:[#allocation2 + $0xf88] sm:$0xff]
    %v620 = vld [vmem:[#allocation2 + $0xf90] sm:$0xff]
    %v621 = vld [vmem:[#allocation2 + $0xf98] sm:$0xff]
    %v622 = vld [vmem:[#allocation2 + $0xfa0] sm:$0xff]
    %v623 = vld [vmem:[#allocation2 + $0xfa8] sm:$0xff]
    %v624 = vld [vmem:[#allocation2 + $0xfb0] sm:$0xff]
    %v625 = vld [vmem:[#allocation2 + $0xfb8] sm:$0xff]
    %v626 = vld [vmem:[#allocation2 + $0xfc0] sm:$0xff]
    %v627 = vld [vmem:[#allocation2 + $0xfc8] sm:$0xff]
    %v628 = vld [vmem:[#allocation2 + $0xfd0] sm:$0xff]
    %v629 = vld [vmem:[#allocation2 + $0xfd8] sm:$0xff]
    %v630 = vld [vmem:[#allocation2 + $0xfe0] sm:$0xff]
    %v631 = vld [vmem:[#allocation2 + $0xfe8] sm:$0xff]
    %v632 = vld [vmem:[#allocation2 + $0xff0] sm:$0xff]
    %v633 = vld [vmem:[#allocation2 + $0xff8] sm:$0xff]
    %v682 = vunpack.c.l.b16 %v74
    %v683 = vunpack.c.h.b16 %v74
    %v684 = vunpack.c.l.b16 %v75
    %v685 = vunpack.c.h.b16 %v75
    %v686 = vunpack.c.l.b16 %v76
    %v687 = vunpack.c.h.b16 %v76
    %v688 = vunpack.c.l.b16 %v77
    %v689 = vunpack.c.h.b16 %v77
    %v690 = vunpack.c.l.b16 %v78
    %v691 = vunpack.c.h.b16 %v78
    %v692 = vunpack.c.l.b16 %v79
    %v693 = vunpack.c.h.b16 %v79
    %v694 = vunpack.c.l.b16 %v80
    %v695 = vunpack.c.h.b16 %v80
    %v696 = vunpack.c.l.b16 %v81
    %v697 = vunpack.c.h.b16 %v81
    %v698 = vunpack.c.l.b16 %v82
    %v699 = vunpack.c.h.b16 %v82
    %v700 = vunpack.c.l.b16 %v83
    %v701 = vunpack.c.h.b16 %v83
    %v702 = vunpack.c.l.b16 %v84
    %v703 = vunpack.c.h.b16 %v84
    %v704 = vunpack.c.l.b16 %v85
    %v705 = vunpack.c.h.b16 %v85
    %v706 = vunpack.c.l.b16 %v86
    %v707 = vunpack.c.h.b16 %v86
    %v708 = vunpack.c.l.b16 %v87
    %v709 = vunpack.c.h.b16 %v87
    %v710 = vunpack.c.l.b16 %v88
    %v711 = vunpack.c.h.b16 %v88
    %v712 = vunpack.c.l.b16 %v89
    %v713 = vunpack.c.h.b16 %v89
    %v714 = vunpack.c.l.b16 %v90
    %v715 = vunpack.c.h.b16 %v90
    %v716 = vunpack.c.l.b16 %v91
    %v717 = vunpack.c.h.b16 %v91
    %v718 = vunpack.c.l.b16 %v92
    %v719 = vunpack.c.h.b16 %v92
    %v720 = vunpack.c.l.b16 %v93
    %v721 = vunpack.c.h.b16 %v93
    %v722 = vunpack.c.l.b16 %v94
    %v723 = vunpack.c.h.b16 %v94
    %v724 = vunpack.c.l.b16 %v95
    %v725 = vunpack.c.h.b16 %v95
    %v726 = vunpack.c.l.b16 %v96
    %v727 = vunpack.c.h.b16 %v96
    %v728 = vunpack.c.l.b16 %v97
    %v729 = vunpack.c.h.b16 %v97
    %v730 = vunpack.c.l.b16 %v98
    %v731 = vunpack.c.h.b16 %v98
    %v732 = vunpack.c.l.b16 %v99
    %v733 = vunpack.c.h.b16 %v99
    %v734 = vunpack.c.l.b16 %v100
    %v735 = vunpack.c.h.b16 %v100
    %v736 = vunpack.c.l.b16 %v101
    %v737 = vunpack.c.h.b16 %v101
    %v738 = vunpack.c.l.b16 %v102
    %v739 = vunpack.c.h.b16 %v102
    %v740 = vunpack.c.l.b16 %v103
    %v741 = vunpack.c.h.b16 %v103
    %v742 = vunpack.c.l.b16 %v104
    %v743 = vunpack.c.h.b16 %v104
    %v744 = vunpack.c.l.b16 %v105
    %v745 = vunpack.c.h.b16 %v105
    %v746 = vunpack.c.l.b16 %v106
    %v747 = vunpack.c.h.b16 %v106
    %v748 = vunpack.c.l.b16 %v107
    %v749 = vunpack.c.h.b16 %v107
    %v750 = vunpack.c.l.b16 %v108
    %v751 = vunpack.c.h.b16 %v108
    %v752 = vunpack.c.l.b16 %v109
    %v753 = vunpack.c.h.b16 %v109
    %v754 = vunpack.c.l.b16 %v110
    %v755 = vunpack.c.h.b16 %v110
    %v756 = vunpack.c.l.b16 %v111
    %v757 = vunpack.c.h.b16 %v111
    %v758 = vunpack.c.l.b16 %v112
    %v759 = vunpack.c.h.b16 %v112
    %v760 = vunpack.c.l.b16 %v113
    %v761 = vunpack.c.h.b16 %v113
    %v762 = vunpack.c.l.b16 %v114
    %v763 = vunpack.c.h.b16 %v114
    %v764 = vunpack.c.l.b16 %v115
    %v765 = vunpack.c.h.b16 %v115
    %v766 = vunpack.c.l.b16 %v116
    %v767 = vunpack.c.h.b16 %v116
    %v768 = vunpack.c.l.b16 %v117
    %v769 = vunpack.c.h.b16 %v117
    %v770 = vunpack.c.l.b16 %v118
    %v771 = vunpack.c.h.b16 %v118
    %v772 = vunpack.c.l.b16 %v119
    %v773 = vunpack.c.h.b16 %v119
    %v774 = vunpack.c.l.b16 %v120
    %v775 = vunpack.c.h.b16 %v120
    %v776 = vunpack.c.l.b16 %v121
    %v777 = vunpack.c.h.b16 %v121
    %v778 = vpack.c.b16 %v690, %v682
    %v779 = vpack.c.b16 %v691, %v683
    %v780 = vpack.c.b16 %v692, %v684
    %v781 = vpack.c.b16 %v693, %v685
    %v782 = vpack.c.b16 %v694, %v686
    %v783 = vpack.c.b16 %v695, %v687
    %v784 = vpack.c.b16 %v696, %v688
    %v785 = vpack.c.b16 %v697, %v689
    %v786 = vpack.c.b16 %v706, %v698
    %v787 = vpack.c.b16 %v707, %v699
    %v788 = vpack.c.b16 %v708, %v700
    %v789 = vpack.c.b16 %v709, %v701
    %v790 = vpack.c.b16 %v710, %v702
    %v791 = vpack.c.b16 %v711, %v703
    %v792 = vpack.c.b16 %v712, %v704
    %v793 = vpack.c.b16 %v713, %v705
    %v794 = vpack.c.b16 %v722, %v714
    %v795 = vpack.c.b16 %v723, %v715
    %v796 = vpack.c.b16 %v724, %v716
    %v797 = vpack.c.b16 %v725, %v717
    %v798 = vpack.c.b16 %v726, %v718
    %v799 = vpack.c.b16 %v727, %v719
    %v800 = vpack.c.b16 %v728, %v720
    %v801 = vpack.c.b16 %v729, %v721
    %v802 = vpack.c.b16 %v738, %v730
    %v803 = vpack.c.b16 %v739, %v731
    %v804 = vpack.c.b16 %v740, %v732
    %v805 = vpack.c.b16 %v741, %v733
    %v806 = vpack.c.b16 %v742, %v734
    %v807 = vpack.c.b16 %v743, %v735
    %v808 = vpack.c.b16 %v744, %v736
    %v809 = vpack.c.b16 %v745, %v737
    %v810 = vpack.c.b16 %v754, %v746
    %v811 = vpack.c.b16 %v755, %v747
    %v812 = vpack.c.b16 %v756, %v748
    %v813 = vpack.c.b16 %v757, %v749
    %v814 = vpack.c.b16 %v758, %v750
    %v815 = vpack.c.b16 %v759, %v751
    %v816 = vpack.c.b16 %v760, %v752
    %v817 = vpack.c.b16 %v761, %v753
    %v818 = vpack.c.b16 %v770, %v762
    %v819 = vpack.c.b16 %v771, %v763
    %v820 = vpack.c.b16 %v772, %v764
    %v821 = vpack.c.b16 %v773, %v765
    %v822 = vpack.c.b16 %v774, %v766
    %v823 = vpack.c.b16 %v775, %v767
    %v824 = vpack.c.b16 %v776, %v768
    %v825 = vpack.c.b16 %v777, %v769
    %874 = vmatprep.subr.bf16.mxu0 %v123
    %875 = vmatpush1.bf16.msra.mxu0 %v122
    %876 = vmatprep.subr.bf16.mxu0 %v131
    %877 = vmatpush1.bf16.msra.mxu0 %v130
    %878 = vmatprep.subr.bf16.mxu0 %v139
    %879 = vmatpush1.bf16.msra.mxu0 %v138
    %880 = vmatprep.subr.bf16.mxu0 %v147
    %881 = vmatpush1.bf16.msra.mxu0 %v146
    %882 = vmatprep.subr.bf16.mxu0 %v155
    %883 = vmatpush1.bf16.msra.mxu0 %v154
    %884 = vmatprep.subr.bf16.mxu0 %v163
    %885 = vmatpush1.bf16.msra.mxu0 %v162
    %886 = vmatprep.subr.bf16.mxu0 %v171
    %887 = vmatpush1.bf16.msra.mxu0 %v170
    %888 = vmatprep.subr.bf16.mxu0 %v179
    %889 = vmatpush1.bf16.msra.mxu0 %v178
    %890 = vmatprep.subr.bf16.mxu0 %v187
    %891 = vmatpush1.bf16.msra.mxu0 %v186
    %892 = vmatprep.subr.bf16.mxu0 %v195
    %893 = vmatpush1.bf16.msra.mxu0 %v194
    %894 = vmatprep.subr.bf16.mxu0 %v203
    %895 = vmatpush1.bf16.msra.mxu0 %v202
    %896 = vmatprep.subr.bf16.mxu0 %v211
    %897 = vmatpush1.bf16.msra.mxu0 %v210
    %898 = vmatprep.subr.bf16.mxu0 %v219
    %899 = vmatpush1.bf16.msra.mxu0 %v218
    %900 = vmatprep.subr.bf16.mxu0 %v227
    %901 = vmatpush1.bf16.msra.mxu0 %v226
    %902 = vmatprep.subr.bf16.mxu0 %v235
    %903 = vmatpush1.bf16.msra.mxu0 %v234
    %904 = vmatprep.subr.bf16.mxu0 %v243
    %905 = vmatpush1.bf16.msra.mxu0 %v242
    %906 = vmatprep.mubr.bf16.mxu0 %v779
    %907 = vmatmul.mubr.bf16.gmra.mrb[0].mxu0 %v778
    %v908 = vpop.f32.mrb[0].mxu0
    %v909 = vadd.f32 0.0, %v908
    %v910 = vpop.f32.mrb[0].mxu0
    %v911 = vadd.f32 0.0, %v910
    %v912 = vpop.f32.mrb[0].mxu0
    %v913 = vadd.f32 0.0, %v912
    %v914 = vpop.f32.mrb[0].mxu0
    %v915 = vadd.f32 0.0, %v914
    %916 = vmatprep.mubr.bf16.mxu0 %v787
    %917 = vmatmul.mubr.bf16.gmra.mrb[0].mxu0 %v786
    %v918 = vpop.f32.mrb[0].mxu0
    %v919 = vadd.f32 0.0, %v918
    %v920 = vpop.f32.mrb[0].mxu0
    %v921 = vadd.f32 0.0, %v920
    %v922 = vpop.f32.mrb[0].mxu0
    %v923 = vadd.f32 0.0, %v922
    %v924 = vpop.f32.mrb[0].mxu0
    %v925 = vadd.f32 0.0, %v924
    %926 = vmatprep.mubr.bf16.mxu0 %v795
    %927 = vmatmul.mubr.bf16.gmra.mrb[0].mxu0 %v794
    %v928 = vpop.f32.mrb[0].mxu0
    %v929 = vadd.f32 0.0, %v928
    %v930 = vpop.f32.mrb[0].mxu0
    %v931 = vadd.f32 0.0, %v930
    %v932 = vpop.f32.mrb[0].mxu0
    %v933 = vadd.f32 0.0, %v932
    %v934 = vpop.f32.mrb[0].mxu0
    %v935 = vadd.f32 0.0, %v934
    %936 = vmatprep.mubr.bf16.mxu0 %v803
    %937 = vmatmul.mubr.bf16.gmra.mrb[0].mxu0 %v802
    %v938 = vpop.f32.mrb[0].mxu0
    %v939 = vadd.f32 0.0, %v938
    %v940 = vpop.f32.mrb[0].mxu0
    %v941 = vadd.f32 0.0, %v940
    %v942 = vpop.f32.mrb[0].mxu0
    %v943 = vadd.f32 0.0, %v942
    %v944 = vpop.f32.mrb[0].mxu0
    %v945 = vadd.f32 0.0, %v944
    %946 = vmatprep.mubr.bf16.mxu0 %v811
    %947 = vmatmul.mubr.bf16.gmra.mrb[0].mxu0 %v810
    %v948 = vpop.f32.mrb[0].mxu0
    %v949 = vadd.f32 0.0, %v948
    %v950 = vpop.f32.mrb[0].mxu0
    %v951 = vadd.f32 0.0, %v950
    %v952 = vpop.f32.mrb[0].mxu0
    %v953 = vadd.f32 0.0, %v952
    %v954 = vpop.f32.mrb[0].mxu0
    %v955 = vadd.f32 0.0, %v954
    %956 = vmatprep.mubr.bf16.mxu0 %v819
    %957 = vmatmul.mubr.bf16.gmra.mrb[0].mxu0 %v818
    %v958 = vpop.f32.mrb[0].mxu0
    %v959 = vadd.f32 0.0, %v958
    %v960 = vpop.f32.mrb[0].mxu0
    %v961 = vadd.f32 0.0, %v960
    %v962 = vpop.f32.mrb[0].mxu0
    %v963 = vadd.f32 0.0, %v962
    %v964 = vpop.f32.mrb[0].mxu0
    %v965 = vadd.f32 0.0, %v964
    %966 = vdwg.mxu0
    %967 = vmatprep.subr.bf16.mxu0 %v251
    %968 = vmatpush1.bf16.msra.mxu0 %v250
    %969 = vmatprep.subr.bf16.mxu0 %v259
    %970 = vmatpush1.bf16.msra.mxu0 %v258
    %971 = vmatprep.subr.bf16.mxu0 %v267
    %972 = vmatpush1.bf16.msra.mxu0 %v266
    %973 = vmatprep.subr.bf16.mxu0 %v275
    %974 = vmatpush1.bf16.msra.mxu0 %v274
    %975 = vmatprep.subr.bf16.mxu0 %v283
    %976 = vmatpush1.bf16.msra.mxu0 %v282
    %977 = vmatprep.subr.bf16.mxu0 %v291
    %978 = vmatpush1.bf16.msra.mxu0 %v290
    %979 = vmatprep.subr.bf16.mxu0 %v299
    %980 = vmatpush1.bf16.msra.mxu0 %v298
    %981 = vmatprep.subr.bf16.mxu0 %v307
    %982 = vmatpush1.bf16.msra.mxu0 %v306
    %983 = vmatprep.subr.bf16.mxu0 %v315
    %984 = vmatpush1.bf16.msra.mxu0 %v314
    %985 = vmatprep.subr.bf16.mxu0 %v323
    %986 = vmatpush1.bf16.msra.mxu0 %v322
    %987 = vmatprep.subr.bf16.mxu0 %v331
    %988 = vmatpush1.bf16.msra.mxu0 %v330
    %989 = vmatprep.subr.bf16.mxu0 %v339
    %990 = vmatpush1.bf16.msra.mxu0 %v338
    %991 = vmatprep.subr.bf16.mxu0 %v347
    %992 = vmatpush1.bf16.msra.mxu0 %v346
    %993 = vmatprep.subr.bf16.mxu0 %v355
    %994 = vmatpush1.bf16.msra.mxu0 %v354
    %995 = vmatprep.subr.bf16.mxu0 %v363
    %996 = vmatpush1.bf16.msra.mxu0 %v362
    %997 = vmatprep.subr.bf16.mxu0 %v371
    %998 = vmatpush1.bf16.msra.mxu0 %v370
    %999 = vmatprep.mubr.bf16.mxu0 %v781
    %1000 = vmatmul.mubr.bf16.gmra.mrb[0].mxu0 %v780
    %v1001 = vpop.f32.mrb[0].mxu0
    %v1002 = vadd.f32 %v909, %v1001
    %v1003 = vpop.f32.mrb[0].mxu0
    %v1004 = vadd.f32 %v911, %v1003
    %v1005 = vpop.f32.mrb[0].mxu0
    %v1006 = vadd.f32 %v913, %v1005
    %v1007 = vpop.f32.mrb[0].mxu0
    %v1008 = vadd.f32 %v915, %v1007
    %1009 = vmatprep.mubr.bf16.mxu0 %v789
    %1010 = vmatmul.mubr.bf16.gmra.mrb[0].mxu0 %v788
    %v1011 = vpop.f32.mrb[0].mxu0
    %v1012 = vadd.f32 %v919, %v1011
    %v1013 = vpop.f32.mrb[0].mxu0
    %v1014 = vadd.f32 %v921, %v1013
    %v1015 = vpop.f32.mrb[0].mxu0
    %v1016 = vadd.f32 %v923, %v1015
    %v1017 = vpop.f32.mrb[0].mxu0
    %v1018 = vadd.f32 %v925, %v1017
    %1019 = vmatprep.mubr.bf16.mxu0 %v797
    %1020 = vmatmul.mubr.bf16.gmra.mrb[0].mxu0 %v796
    %v1021 = vpop.f32.mrb[0].mxu0
    %v1022 = vadd.f32 %v929, %v1021
    %v1023 = vpop.f32.mrb[0].mxu0
    %v1024 = vadd.f32 %v931, %v1023
    %v1025 = vpop.f32.mrb[0].mxu0
    %v1026 = vadd.f32 %v933, %v1025
    %v1027 = vpop.f32.mrb[0].mxu0
    %v1028 = vadd.f32 %v935, %v1027
    %1029 = vmatprep.mubr.bf16.mxu0 %v805
    %1030 = vmatmul.mubr.bf16.gmra.mrb[0].mxu0 %v804
    %v1031 = vpop.f32.mrb[0].mxu0
    %v1032 = vadd.f32 %v939, %v1031
    %v1033 = vpop.f32.mrb[0].mxu0
    %v1034 = vadd.f32 %v941, %v1033
    %v1035 = vpop.f32.mrb[0].mxu0
    %v1036 = vadd.f32 %v943, %v1035
    %v1037 = vpop.f32.mrb[0].mxu0
    %v1038 = vadd.f32 %v945, %v1037
    %1039 = vmatprep.mubr.bf16.mxu0 %v813
    %1040 = vmatmul.mubr.bf16.gmra.mrb[0].mxu0 %v812
    %v1041 = vpop.f32.mrb[0].mxu0
    %v1042 = vadd.f32 %v949, %v1041
    %v1043 = vpop.f32.mrb[0].mxu0
    %v1044 = vadd.f32 %v951, %v1043
    %v1045 = vpop.f32.mrb[0].mxu0
    %v1046 = vadd.f32 %v953, %v1045
    %v1047 = vpop.f32.mrb[0].mxu0
    %v1048 = vadd.f32 %v955, %v1047
    %1049 = vmatprep.mubr.bf16.mxu0 %v821
    %1050 = vmatmul.mubr.bf16.gmra.mrb[0].mxu0 %v820
    %v1051 = vpop.f32.mrb[0].mxu0
    %v1052 = vadd.f32 %v959, %v1051
    %v1053 = vpop.f32.mrb[0].mxu0
    %v1054 = vadd.f32 %v961, %v1053
    %v1055 = vpop.f32.mrb[0].mxu0
    %v1056 = vadd.f32 %v963, %v1055
    %v1057 = vpop.f32.mrb[0].mxu0
    %v1058 = vadd.f32 %v965, %v1057
    %1059 = vdwg.mxu0
    %1060 = vmatprep.subr.bf16.mxu0 %v379
    %1061 = vmatpush1.bf16.msra.mxu0 %v378
    %1062 = vmatprep.subr.bf16.mxu0 %v387
    %1063 = vmatpush1.bf16.msra.mxu0 %v386
    %1064 = vmatprep.subr.bf16.mxu0 %v395
    %1065 = vmatpush1.bf16.msra.mxu0 %v394
    %1066 = vmatprep.subr.bf16.mxu0 %v403
    %1067 = vmatpush1.bf16.msra.mxu0 %v402
    %1068 = vmatprep.subr.bf16.mxu0 %v411
    %1069 = vmatpush1.bf16.msra.mxu0 %v410
    %1070 = vmatprep.subr.bf16.mxu0 %v419
    %1071 = vmatpush1.bf16.msra.mxu0 %v418
    %1072 = vmatprep.subr.bf16.mxu0 %v427
    %1073 = vmatpush1.bf16.msra.mxu0 %v426
    %1074 = vmatprep.subr.bf16.mxu0 %v435
    %1075 = vmatpush1.bf16.msra.mxu0 %v434
    %1076 = vmatprep.subr.bf16.mxu0 %v443
    %1077 = vmatpush1.bf16.msra.mxu0 %v442
    %1078 = vmatprep.subr.bf16.mxu0 %v451
    %1079 = vmatpush1.bf16.msra.mxu0 %v450
    %1080 = vmatprep.subr.bf16.mxu0 %v459
    %1081 = vmatpush1.bf16.msra.mxu0 %v458
    %1082 = vmatprep.subr.bf16.mxu0 %v467
    %1083 = vmatpush1.bf16.msra.mxu0 %v466
    %1084 = vmatprep.subr.bf16.mxu0 %v475
    %1085 = vmatpush1.bf16.msra.mxu0 %v474
    %1086 = vmatprep.subr.bf16.mxu0 %v483
    %1087 = vmatpush1.bf16.msra.mxu0 %v482
    %1088 = vmatprep.subr.bf16.mxu0 %v491
    %1089 = vmatpush1.bf16.msra.mxu0 %v490
    %1090 = vmatprep.subr.bf16.mxu0 %v499
    %1091 = vmatpush1.bf16.msra.mxu0 %v498
    %1092 = vmatprep.mubr.bf16.mxu0 %v783
    %1093 = vmatmul.mubr.bf16.gmra.mrb[0].mxu0 %v782
    %v1094 = vpop.f32.mrb[0].mxu0
    %v1095 = vadd.f32 %v1002, %v1094
    %v1096 = vpop.f32.mrb[0].mxu0
    %v1097 = vadd.f32 %v1004, %v1096
    %v1098 = vpop.f32.mrb[0].mxu0
    %v1099 = vadd.f32 %v1006, %v1098
    %v1100 = vpop.f32.mrb[0].mxu0
    %v1101 = vadd.f32 %v1008, %v1100
    %1102 = vmatprep.mubr.bf16.mxu0 %v791
    %1103 = vmatmul.mubr.bf16.gmra.mrb[0].mxu0 %v790
    %v1104 = vpop.f32.mrb[0].mxu0
    %v1105 = vadd.f32 %v1012, %v1104
    %v1106 = vpop.f32.mrb[0].mxu0
    %v1107 = vadd.f32 %v1014, %v1106
    %v1108 = vpop.f32.mrb[0].mxu0
    %v1109 = vadd.f32 %v1016, %v1108
    %v1110 = vpop.f32.mrb[0].mxu0
    %v1111 = vadd.f32 %v1018, %v1110
    %1112 = vmatprep.mubr.bf16.mxu0 %v799
    %1113 = vmatmul.mubr.bf16.gmra.mrb[0].mxu0 %v798
    %v1114 = vpop.f32.mrb[0].mxu0
    %v1115 = vadd.f32 %v1022, %v1114
    %v1116 = vpop.f32.mrb[0].mxu0
    %v1117 = vadd.f32 %v1024, %v1116
    %v1118 = vpop.f32.mrb[0].mxu0
    %v1119 = vadd.f32 %v1026, %v1118
    %v1120 = vpop.f32.mrb[0].mxu0
    %v1121 = vadd.f32 %v1028, %v1120
    %1122 = vmatprep.mubr.bf16.mxu0 %v807
    %1123 = vmatmul.mubr.bf16.gmra.mrb[0].mxu0 %v806
    %v1124 = vpop.f32.mrb[0].mxu0
    %v1125 = vadd.f32 %v1032, %v1124
    %v1126 = vpop.f32.mrb[0].mxu0
    %v1127 = vadd.f32 %v1034, %v1126
    %v1128 = vpop.f32.mrb[0].mxu0
    %v1129 = vadd.f32 %v1036, %v1128
    %v1130 = vpop.f32.mrb[0].mxu0
    %v1131 = vadd.f32 %v1038, %v1130
    %1132 = vmatprep.mubr.bf16.mxu0 %v815
    %1133 = vmatmul.mubr.bf16.gmra.mrb[0].mxu0 %v814
    %v1134 = vpop.f32.mrb[0].mxu0
    %v1135 = vadd.f32 %v1042, %v1134
    %v1136 = vpop.f32.mrb[0].mxu0
    %v1137 = vadd.f32 %v1044, %v1136
    %v1138 = vpop.f32.mrb[0].mxu0
    %v1139 = vadd.f32 %v1046, %v1138
    %v1140 = vpop.f32.mrb[0].mxu0
    %v1141 = vadd.f32 %v1048, %v1140
    %1142 = vmatprep.mubr.bf16.mxu0 %v823
    %1143 = vmatmul.mubr.bf16.gmra.mrb[0].mxu0 %v822
    %v1144 = vpop.f32.mrb[0].mxu0
    %v1145 = vadd.f32 %v1052, %v1144
    %v1146 = vpop.f32.mrb[0].mxu0
    %v1147 = vadd.f32 %v1054, %v1146
    %v1148 = vpop.f32.mrb[0].mxu0
    %v1149 = vadd.f32 %v1056, %v1148
    %v1150 = vpop.f32.mrb[0].mxu0
    %v1151 = vadd.f32 %v1058, %v1150
    %1152 = vdwg.mxu0
    %1153 = vmatprep.subr.bf16.mxu0 %v507
    %1154 = vmatpush1.bf16.msra.mxu0 %v506
    %1155 = vmatprep.subr.bf16.mxu0 %v515
    %1156 = vmatpush1.bf16.msra.mxu0 %v514
    %1157 = vmatprep.subr.bf16.mxu0 %v523
    %1158 = vmatpush1.bf16.msra.mxu0 %v522
    %1159 = vmatprep.subr.bf16.mxu0 %v531
    %1160 = vmatpush1.bf16.msra.mxu0 %v530
    %1161 = vmatprep.subr.bf16.mxu0 %v539
    %1162 = vmatpush1.bf16.msra.mxu0 %v538
    %1163 = vmatprep.subr.bf16.mxu0 %v547
    %1164 = vmatpush1.bf16.msra.mxu0 %v546
    %1165 = vmatprep.subr.bf16.mxu0 %v555
    %1166 = vmatpush1.bf16.msra.mxu0 %v554
    %1167 = vmatprep.subr.bf16.mxu0 %v563
    %1168 = vmatpush1.bf16.msra.mxu0 %v562
    %1169 = vmatprep.subr.bf16.mxu0 %v571
    %1170 = vmatpush1.bf16.msra.mxu0 %v570
    %1171 = vmatprep.subr.bf16.mxu0 %v579
    %1172 = vmatpush1.bf16.msra.mxu0 %v578
    %1173 = vmatprep.subr.bf16.mxu0 %v587
    %1174 = vmatpush1.bf16.msra.mxu0 %v586
    %1175 = vmatprep.subr.bf16.mxu0 %v595
    %1176 = vmatpush1.bf16.msra.mxu0 %v594
    %1177 = vmatprep.subr.bf16.mxu0 %v603
    %1178 = vmatpush1.bf16.msra.mxu0 %v602
    %1179 = vmatprep.subr.bf16.mxu0 %v611
    %1180 = vmatpush1.bf16.msra.mxu0 %v610
    %1181 = vmatprep.subr.bf16.mxu0 %v619
    %1182 = vmatpush1.bf16.msra.mxu0 %v618
    %1183 = vmatprep.subr.bf16.mxu0 %v627
    %1184 = vmatpush1.bf16.msra.mxu0 %v626
    %1185 = vmatprep.mubr.bf16.mxu0 %v785
    %1186 = vmatmul.mubr.bf16.gmra.mrb[0].mxu0 %v784
    %v1187 = vpop.f32.mrb[0].mxu0
    %v1188 = vadd.f32 %v1095, %v1187
    %v1189 = vpop.f32.mrb[0].mxu0
    %v1190 = vadd.f32 %v1097, %v1189
    %v1191 = vpop.f32.mrb[0].mxu0
    %v1192 = vadd.f32 %v1099, %v1191
    %v1193 = vpop.f32.mrb[0].mxu0
    %v1194 = vadd.f32 %v1101, %v1193
    %1195 = vmatprep.mubr.bf16.mxu0 %v793
    %1196 = vmatmul.mubr.bf16.gmra.mrb[0].mxu0 %v792
    %v1197 = vpop.f32.mrb[0].mxu0
    %v1198 = vadd.f32 %v1105, %v1197
    %v1199 = vpop.f32.mrb[0].mxu0
    %v1200 = vadd.f32 %v1107, %v1199
    %v1201 = vpop.f32.mrb[0].mxu0
    %v1202 = vadd.f32 %v1109, %v1201
    %v1203 = vpop.f32.mrb[0].mxu0
    %v1204 = vadd.f32 %v1111, %v1203
    %1205 = vmatprep.mubr.bf16.mxu0 %v801
    %1206 = vmatmul.mubr.bf16.gmra.mrb[0].mxu0 %v800
    %v1207 = vpop.f32.mrb[0].mxu0
    %v1208 = vadd.f32 %v1115, %v1207
    %v1209 = vpop.f32.mrb[0].mxu0
    %v1210 = vadd.f32 %v1117, %v1209
    %v1211 = vpop.f32.mrb[0].mxu0
    %v1212 = vadd.f32 %v1119, %v1211
    %v1213 = vpop.f32.mrb[0].mxu0
    %v1214 = vadd.f32 %v1121, %v1213
    %1215 = vmatprep.mubr.bf16.mxu0 %v809
    %1216 = vmatmul.mubr.bf16.gmra.mrb[0].mxu0 %v808
    %v1217 = vpop.f32.mrb[0].mxu0
    %v1218 = vadd.f32 %v1125, %v1217
    %v1219 = vpop.f32.mrb[0].mxu0
    %v1220 = vadd.f32 %v1127, %v1219
    %v1221 = vpop.f32.mrb[0].mxu0
    %v1222 = vadd.f32 %v1129, %v1221
    %v1223 = vpop.f32.mrb[0].mxu0
    %v1224 = vadd.f32 %v1131, %v1223
    %1225 = vmatprep.mubr.bf16.mxu0 %v817
    %1226 = vmatmul.mubr.bf16.gmra.mrb[0].mxu0 %v816
    %v1227 = vpop.f32.mrb[0].mxu0
    %v1228 = vadd.f32 %v1135, %v1227
    %v1229 = vpop.f32.mrb[0].mxu0
    %v1230 = vadd.f32 %v1137, %v1229
    %v1231 = vpop.f32.mrb[0].mxu0
    %v1232 = vadd.f32 %v1139, %v1231
    %v1233 = vpop.f32.mrb[0].mxu0
    %v1234 = vadd.f32 %v1141, %v1233
    %1235 = vmatprep.mubr.bf16.mxu0 %v825
    %1236 = vmatmul.mubr.bf16.gmra.mrb[0].mxu0 %v824
    %v1237 = vpop.f32.mrb[0].mxu0
    %v1238 = vadd.f32 %v1145, %v1237
    %v1239 = vpop.f32.mrb[0].mxu0
    %v1240 = vadd.f32 %v1147, %v1239
    %v1241 = vpop.f32.mrb[0].mxu0
    %v1242 = vadd.f32 %v1149, %v1241
    %v1243 = vpop.f32.mrb[0].mxu0
    %v1244 = vadd.f32 %v1151, %v1243
    %1245 = vdwg.mxu0
    %1246 = vmatprep.subr.bf16.mxu0 %v125
    %1247 = vmatpush1.bf16.msra.mxu0 %v124
    %1248 = vmatprep.subr.bf16.mxu0 %v133
    %1249 = vmatpush1.bf16.msra.mxu0 %v132
    %1250 = vmatprep.subr.bf16.mxu0 %v141
    %1251 = vmatpush1.bf16.msra.mxu0 %v140
    %1252 = vmatprep.subr.bf16.mxu0 %v149
    %1253 = vmatpush1.bf16.msra.mxu0 %v148
    %1254 = vmatprep.subr.bf16.mxu0 %v157
    %1255 = vmatpush1.bf16.msra.mxu0 %v156
    %1256 = vmatprep.subr.bf16.mxu0 %v165
    %1257 = vmatpush1.bf16.msra.mxu0 %v164
    %1258 = vmatprep.subr.bf16.mxu0 %v173
    %1259 = vmatpush1.bf16.msra.mxu0 %v172
    %1260 = vmatprep.subr.bf16.mxu0 %v181
    %1261 = vmatpush1.bf16.msra.mxu0 %v180
    %1262 = vmatprep.subr.bf16.mxu0 %v189
    %1263 = vmatpush1.bf16.msra.mxu0 %v188
    %1264 = vmatprep.subr.bf16.mxu0 %v197
    %1265 = vmatpush1.bf16.msra.mxu0 %v196
    %1266 = vmatprep.subr.bf16.mxu0 %v205
    %1267 = vmatpush1.bf16.msra.mxu0 %v204
    %1268 = vmatprep.subr.bf16.mxu0 %v213
    %1269 = vmatpush1.bf16.msra.mxu0 %v212
    %1270 = vmatprep.subr.bf16.mxu0 %v221
    %1271 = vmatpush1.bf16.msra.mxu0 %v220
    %1272 = vmatprep.subr.bf16.mxu0 %v229
    %1273 = vmatpush1.bf16.msra.mxu0 %v228
    %1274 = vmatprep.subr.bf16.mxu0 %v237
    %1275 = vmatpush1.bf16.msra.mxu0 %v236
    %1276 = vmatprep.subr.bf16.mxu0 %v245
    %1277 = vmatpush1.bf16.msra.mxu0 %v244
    %1278 = vmatprep.mubr.bf16.mxu0 %v779
    %1279 = vmatmul.mubr.bf16.gmra.mrb[0].mxu0 %v778
    %v1280 = vpop.f32.mrb[0].mxu0
    %v1281 = vadd.f32 0.0, %v1280
    %v1282 = vpop.f32.mrb[0].mxu0
    %v1283 = vadd.f32 0.0, %v1282
    %v1284 = vpop.f32.mrb[0].mxu0
    %v1285 = vadd.f32 0.0, %v1284
    %v1286 = vpop.f32.mrb[0].mxu0
    %v1287 = vadd.f32 0.0, %v1286
    %1288 = vmatprep.mubr.bf16.mxu0 %v787
    %1289 = vmatmul.mubr.bf16.gmra.mrb[0].mxu0 %v786
    %v1290 = vpop.f32.mrb[0].mxu0
    %v1291 = vadd.f32 0.0, %v1290
    %v1292 = vpop.f32.mrb[0].mxu0
    %v1293 = vadd.f32 0.0, %v1292
    %v1294 = vpop.f32.mrb[0].mxu0
    %v1295 = vadd.f32 0.0, %v1294
    %v1296 = vpop.f32.mrb[0].mxu0
    %v1297 = vadd.f32 0.0, %v1296
    %1298 = vmatprep.mubr.bf16.mxu0 %v795
    %1299 = vmatmul.mubr.bf16.gmra.mrb[0].mxu0 %v794
    %v1300 = vpop.f32.mrb[0].mxu0
    %v1301 = vadd.f32 0.0, %v1300
    %v1302 = vpop.f32.mrb[0].mxu0
    %v1303 = vadd.f32 0.0, %v1302
    %v1304 = vpop.f32.mrb[0].mxu0
    %v1305 = vadd.f32 0.0, %v1304
    %v1306 = vpop.f32.mrb[0].mxu0
    %v1307 = vadd.f32 0.0, %v1306
    %1308 = vmatprep.mubr.bf16.mxu0 %v803
    %1309 = vmatmul.mubr.bf16.gmra.mrb[0].mxu0 %v802
    %v1310 = vpop.f32.mrb[0].mxu0
    %v1311 = vadd.f32 0.0, %v1310
    %v1312 = vpop.f32.mrb[0].mxu0
    %v1313 = vadd.f32 0.0, %v1312
    %v1314 = vpop.f32.mrb[0].mxu0
    %v1315 = vadd.f32 0.0, %v1314
    %v1316 = vpop.f32.mrb[0].mxu0
    %v1317 = vadd.f32 0.0, %v1316
    %1318 = vmatprep.mubr.bf16.mxu0 %v811
    %1319 = vmatmul.mubr.bf16.gmra.mrb[0].mxu0 %v810
    %v1320 = vpop.f32.mrb[0].mxu0
    %v1321 = vadd.f32 0.0, %v1320
    %v1322 = vpop.f32.mrb[0].mxu0
    %v1323 = vadd.f32 0.0, %v1322
    %v1324 = vpop.f32.mrb[0].mxu0
    %v1325 = vadd.f32 0.0, %v1324
    %v1326 = vpop.f32.mrb[0].mxu0
    %v1327 = vadd.f32 0.0, %v1326
    %1328 = vmatprep.mubr.bf16.mxu0 %v819
    %1329 = vmatmul.mubr.bf16.gmra.mrb[0].mxu0 %v818
    %v1330 = vpop.f32.mrb[0].mxu0
    %v1331 = vadd.f32 0.0, %v1330
    %v1332 = vpop.f32.mrb[0].mxu0
    %v1333 = vadd.f32 0.0, %v1332
    %v1334 = vpop.f32.mrb[0].mxu0
    %v1335 = vadd.f32 0.0, %v1334
    %v1336 = vpop.f32.mrb[0].mxu0
    %v1337 = vadd.f32 0.0, %v1336
    %1338 = vdwg.mxu0
    %1339 = vmatprep.subr.bf16.mxu0 %v253
    %1340 = vmatpush1.bf16.msra.mxu0 %v252
    %1341 = vmatprep.subr.bf16.mxu0 %v261
    %1342 = vmatpush1.bf16.msra.mxu0 %v260
    %1343 = vmatprep.subr.bf16.mxu0 %v269
    %1344 = vmatpush1.bf16.msra.mxu0 %v268
    %1345 = vmatprep.subr.bf16.mxu0 %v277
    %1346 = vmatpush1.bf16.msra.mxu0 %v276
    %1347 = vmatprep.subr.bf16.mxu0 %v285
    %1348 = vmatpush1.bf16.msra.mxu0 %v284
    %1349 = vmatprep.subr.bf16.mxu0 %v293
    %1350 = vmatpush1.bf16.msra.mxu0 %v292
    %1351 = vmatprep.subr.bf16.mxu0 %v301
    %1352 = vmatpush1.bf16.msra.mxu0 %v300
    %1353 = vmatprep.subr.bf16.mxu0 %v309
    %1354 = vmatpush1.bf16.msra.mxu0 %v308
    %1355 = vmatprep.subr.bf16.mxu0 %v317
    %1356 = vmatpush1.bf16.msra.mxu0 %v316
    %1357 = vmatprep.subr.bf16.mxu0 %v325
    %1358 = vmatpush1.bf16.msra.mxu0 %v324
    %1359 = vmatprep.subr.bf16.mxu0 %v333
    %1360 = vmatpush1.bf16.msra.mxu0 %v332
    %1361 = vmatprep.subr.bf16.mxu0 %v341
    %1362 = vmatpush1.bf16.msra.mxu0 %v340
    %1363 = vmatprep.subr.bf16.mxu0 %v349
    %1364 = vmatpush1.bf16.msra.mxu0 %v348
    %1365 = vmatprep.subr.bf16.mxu0 %v357
    %1366 = vmatpush1.bf16.msra.mxu0 %v356
    %1367 = vmatprep.subr.bf16.mxu0 %v365
    %1368 = vmatpush1.bf16.msra.mxu0 %v364
    %1369 = vmatprep.subr.bf16.mxu0 %v373
    %1370 = vmatpush1.bf16.msra.mxu0 %v372
    %1371 = vmatprep.mubr.bf16.mxu0 %v781
    %1372 = vmatmul.mubr.bf16.gmra.mrb[0].mxu0 %v780
    %v1373 = vpop.f32.mrb[0].mxu0
    %v1374 = vadd.f32 %v1281, %v1373
    %v1375 = vpop.f32.mrb[0].mxu0
    %v1376 = vadd.f32 %v1283, %v1375
    %v1377 = vpop.f32.mrb[0].mxu0
    %v1378 = vadd.f32 %v1285, %v1377
    %v1379 = vpop.f32.mrb[0].mxu0
    %v1380 = vadd.f32 %v1287, %v1379
    %1381 = vmatprep.mubr.bf16.mxu0 %v789
    %1382 = vmatmul.mubr.bf16.gmra.mrb[0].mxu0 %v788
    %v1383 = vpop.f32.mrb[0].mxu0
    %v1384 = vadd.f32 %v1291, %v1383
    %v1385 = vpop.f32.mrb[0].mxu0
    %v1386 = vadd.f32 %v1293, %v1385
    %v1387 = vpop.f32.mrb[0].mxu0
    %v1388 = vadd.f32 %v1295, %v1387
    %v1389 = vpop.f32.mrb[0].mxu0
    %v1390 = vadd.f32 %v1297, %v1389
    %1391 = vmatprep.mubr.bf16.mxu0 %v797
    %1392 = vmatmul.mubr.bf16.gmra.mrb[0].mxu0 %v796
    %v1393 = vpop.f32.mrb[0].mxu0
    %v1394 = vadd.f32 %v1301, %v1393
    %v1395 = vpop.f32.mrb[0].mxu0
    %v1396 = vadd.f32 %v1303, %v1395
    %v1397 = vpop.f32.mrb[0].mxu0
    %v1398 = vadd.f32 %v1305, %v1397
    %v1399 = vpop.f32.mrb[0].mxu0
    %v1400 = vadd.f32 %v1307, %v1399
    %1401 = vmatprep.mubr.bf16.mxu0 %v805
    %1402 = vmatmul.mubr.bf16.gmra.mrb[0].mxu0 %v804
    %v1403 = vpop.f32.mrb[0].mxu0
    %v1404 = vadd.f32 %v1311, %v1403
    %v1405 = vpop.f32.mrb[0].mxu0
    %v1406 = vadd.f32 %v1313, %v1405
    %v1407 = vpop.f32.mrb[0].mxu0
    %v1408 = vadd.f32 %v1315, %v1407
    %v1409 = vpop.f32.mrb[0].mxu0
    %v1410 = vadd.f32 %v1317, %v1409
    %1411 = vmatprep.mubr.bf16.mxu0 %v813
    %1412 = vmatmul.mubr.bf16.gmra.mrb[0].mxu0 %v812
    %v1413 = vpop.f32.mrb[0].mxu0
    %v1414 = vadd.f32 %v1321, %v1413
    %v1415 = vpop.f32.mrb[0].mxu0
    %v1416 = vadd.f32 %v1323, %v1415
    %v1417 = vpop.f32.mrb[0].mxu0
    %v1418 = vadd.f32 %v1325, %v1417
    %v1419 = vpop.f32.mrb[0].mxu0
    %v1420 = vadd.f32 %v1327, %v1419
    %1421 = vmatprep.mubr.bf16.mxu0 %v821
    %1422 = vmatmul.mubr.bf16.gmra.mrb[0].mxu0 %v820
    %v1423 = vpop.f32.mrb[0].mxu0
    %v1424 = vadd.f32 %v1331, %v1423
    %v1425 = vpop.f32.mrb[0].mxu0
    %v1426 = vadd.f32 %v1333, %v1425
    %v1427 = vpop.f32.mrb[0].mxu0
    %v1428 = vadd.f32 %v1335, %v1427
    %v1429 = vpop.f32.mrb[0].mxu0
    %v1430 = vadd.f32 %v1337, %v1429
    %1431 = vdwg.mxu0
    %1432 = vmatprep.subr.bf16.mxu0 %v381
    %1433 = vmatpush1.bf16.msra.mxu0 %v380
    %1434 = vmatprep.subr.bf16.mxu0 %v389
    %1435 = vmatpush1.bf16.msra.mxu0 %v388
    %1436 = vmatprep.subr.bf16.mxu0 %v397
    %1437 = vmatpush1.bf16.msra.mxu0 %v396
    %1438 = vmatprep.subr.bf16.mxu0 %v405
    %1439 = vmatpush1.bf16.msra.mxu0 %v404
    %1440 = vmatprep.subr.bf16.mxu0 %v413
    %1441 = vmatpush1.bf16.msra.mxu0 %v412
    %1442 = vmatprep.subr.bf16.mxu0 %v421
    %1443 = vmatpush1.bf16.msra.mxu0 %v420
    %1444 = vmatprep.subr.bf16.mxu0 %v429
    %1445 = vmatpush1.bf16.msra.mxu0 %v428
    %1446 = vmatprep.subr.bf16.mxu0 %v437
    %1447 = vmatpush1.bf16.msra.mxu0 %v436
    %1448 = vmatprep.subr.bf16.mxu0 %v445
    %1449 = vmatpush1.bf16.msra.mxu0 %v444
    %1450 = vmatprep.subr.bf16.mxu0 %v453
    %1451 = vmatpush1.bf16.msra.mxu0 %v452
    %1452 = vmatprep.subr.bf16.mxu0 %v461
    %1453 = vmatpush1.bf16.msra.mxu0 %v460
    %1454 = vmatprep.subr.bf16.mxu0 %v469
    %1455 = vmatpush1.bf16.msra.mxu0 %v468
    %1456 = vmatprep.subr.bf16.mxu0 %v477
    %1457 = vmatpush1.bf16.msra.mxu0 %v476
    %1458 = vmatprep.subr.bf16.mxu0 %v485
    %1459 = vmatpush1.bf16.msra.mxu0 %v484
    %1460 = vmatprep.subr.bf16.mxu0 %v493
    %1461 = vmatpush1.bf16.msra.mxu0 %v492
    %1462 = vmatprep.subr.bf16.mxu0 %v501
    %1463 = vmatpush1.bf16.msra.mxu0 %v500
    %1464 = vmatprep.mubr.bf16.mxu0 %v783
    %1465 = vmatmul.mubr.bf16.gmra.mrb[0].mxu0 %v782
    %v1466 = vpop.f32.mrb[0].mxu0
    %v1467 = vadd.f32 %v1374, %v1466
    %v1468 = vpop.f32.mrb[0].mxu0
    %v1469 = vadd.f32 %v1376, %v1468
    %v1470 = vpop.f32.mrb[0].mxu0
    %v1471 = vadd.f32 %v1378, %v1470
    %v1472 = vpop.f32.mrb[0].mxu0
    %v1473 = vadd.f32 %v1380, %v1472
    %1474 = vmatprep.mubr.bf16.mxu0 %v791
    %1475 = vmatmul.mubr.bf16.gmra.mrb[0].mxu0 %v790
    %v1476 = vpop.f32.mrb[0].mxu0
    %v1477 = vadd.f32 %v1384, %v1476
    %v1478 = vpop.f32.mrb[0].mxu0
    %v1479 = vadd.f32 %v1386, %v1478
    %v1480 = vpop.f32.mrb[0].mxu0
    %v1481 = vadd.f32 %v1388, %v1480
    %v1482 = vpop.f32.mrb[0].mxu0
    %v1483 = vadd.f32 %v1390, %v1482
    %1484 = vmatprep.mubr.bf16.mxu0 %v799
    %1485 = vmatmul.mubr.bf16.gmra.mrb[0].mxu0 %v798
    %v1486 = vpop.f32.mrb[0].mxu0
    %v1487 = vadd.f32 %v1394, %v1486
    %v1488 = vpop.f32.mrb[0].mxu0
    %v1489 = vadd.f32 %v1396, %v1488
    %v1490 = vpop.f32.mrb[0].mxu0
    %v1491 = vadd.f32 %v1398, %v1490
    %v1492 = vpop.f32.mrb[0].mxu0
    %v1493 = vadd.f32 %v1400, %v1492
    %1494 = vmatprep.mubr.bf16.mxu0 %v807
    %1495 = vmatmul.mubr.bf16.gmra.mrb[0].mxu0 %v806
    %v1496 = vpop.f32.mrb[0].mxu0
    %v1497 = vadd.f32 %v1404, %v1496
    %v1498 = vpop.f32.mrb[0].mxu0
    %v1499 = vadd.f32 %v1406, %v1498
    %v1500 = vpop.f32.mrb[0].mxu0
    %v1501 = vadd.f32 %v1408, %v1500
    %v1502 = vpop.f32.mrb[0].mxu0
    %v1503 = vadd.f32 %v1410, %v1502
    %1504 = vmatprep.mubr.bf16.mxu0 %v815
    %1505 = vmatmul.mubr.bf16.gmra.mrb[0].mxu0 %v814
    %v1506 = vpop.f32.mrb[0].mxu0
    %v1507 = vadd.f32 %v1414, %v1506
    %v1508 = vpop.f32.mrb[0].mxu0
    %v1509 = vadd.f32 %v1416, %v1508
    %v1510 = vpop.f32.mrb[0].mxu0
    %v1511 = vadd.f32 %v1418, %v1510
    %v1512 = vpop.f32.mrb[0].mxu0
    %v1513 = vadd.f32 %v1420, %v1512
    %1514 = vmatprep.mubr.bf16.mxu0 %v823
    %1515 = vmatmul.mubr.bf16.gmra.mrb[0].mxu0 %v822
    %v1516 = vpop.f32.mrb[0].mxu0
    %v1517 = vadd.f32 %v1424, %v1516
    %v1518 = vpop.f32.mrb[0].mxu0
    %v1519 = vadd.f32 %v1426, %v1518
    %v1520 = vpop.f32.mrb[0].mxu0
    %v1521 = vadd.f32 %v1428, %v1520
    %v1522 = vpop.f32.mrb[0].mxu0
    %v1523 = vadd.f32 %v1430, %v1522
    %1524 = vdwg.mxu0
    %1525 = vmatprep.subr.bf16.mxu0 %v509
    %1526 = vmatpush1.bf16.msra.mxu0 %v508
    %1527 = vmatprep.subr.bf16.mxu0 %v517
    %1528 = vmatpush1.bf16.msra.mxu0 %v516
    %1529 = vmatprep.subr.bf16.mxu0 %v525
    %1530 = vmatpush1.bf16.msra.mxu0 %v524
    %1531 = vmatprep.subr.bf16.mxu0 %v533
    %1532 = vmatpush1.bf16.msra.mxu0 %v532
    %1533 = vmatprep.subr.bf16.mxu0 %v541
    %1534 = vmatpush1.bf16.msra.mxu0 %v540
    %1535 = vmatprep.subr.bf16.mxu0 %v549
    %1536 = vmatpush1.bf16.msra.mxu0 %v548
    %1537 = vmatprep.subr.bf16.mxu0 %v557
    %1538 = vmatpush1.bf16.msra.mxu0 %v556
    %1539 = vmatprep.subr.bf16.mxu0 %v565
    %1540 = vmatpush1.bf16.msra.mxu0 %v564
    %1541 = vmatprep.subr.bf16.mxu0 %v573
    %1542 = vmatpush1.bf16.msra.mxu0 %v572
    %1543 = vmatprep.subr.bf16.mxu0 %v581
    %1544 = vmatpush1.bf16.msra.mxu0 %v580
    %1545 = vmatprep.subr.bf16.mxu0 %v589
    %1546 = vmatpush1.bf16.msra.mxu0 %v588
    %1547 = vmatprep.subr.bf16.mxu0 %v597
    %1548 = vmatpush1.bf16.msra.mxu0 %v596
    %1549 = vmatprep.subr.bf16.mxu0 %v605
    %1550 = vmatpush1.bf16.msra.mxu0 %v604
    %1551 = vmatprep.subr.bf16.mxu0 %v613
    %1552 = vmatpush1.bf16.msra.mxu0 %v612
    %1553 = vmatprep.subr.bf16.mxu0 %v621
    %1554 = vmatpush1.bf16.msra.mxu0 %v620
    %1555 = vmatprep.subr.bf16.mxu0 %v629
    %1556 = vmatpush1.bf16.msra.mxu0 %v628
    %1557 = vmatprep.mubr.bf16.mxu0 %v785
    %1558 = vmatmul.mubr.bf16.gmra.mrb[0].mxu0 %v784
    %v1559 = vpop.f32.mrb[0].mxu0
    %v1560 = vadd.f32 %v1467, %v1559
    %v1561 = vpop.f32.mrb[0].mxu0
    %v1562 = vadd.f32 %v1469, %v1561
    %v1563 = vpop.f32.mrb[0].mxu0
    %v1564 = vadd.f32 %v1471, %v1563
    %v1565 = vpop.f32.mrb[0].mxu0
    %v1566 = vadd.f32 %v1473, %v1565
    %1567 = vmatprep.mubr.bf16.mxu0 %v793
    %1568 = vmatmul.mubr.bf16.gmra.mrb[0].mxu0 %v792
    %v1569 = vpop.f32.mrb[0].mxu0
    %v1570 = vadd.f32 %v1477, %v1569
    %v1571 = vpop.f32.mrb[0].mxu0
    %v1572 = vadd.f32 %v1479, %v1571
    %v1573 = vpop.f32.mrb[0].mxu0
    %v1574 = vadd.f32 %v1481, %v1573
    %v1575 = vpop.f32.mrb[0].mxu0
    %v1576 = vadd.f32 %v1483, %v1575
    %1577 = vmatprep.mubr.bf16.mxu0 %v801
    %1578 = vmatmul.mubr.bf16.gmra.mrb[0].mxu0 %v800
    %v1579 = vpop.f32.mrb[0].mxu0
    %v1580 = vadd.f32 %v1487, %v1579
    %v1581 = vpop.f32.mrb[0].mxu0
    %v1582 = vadd.f32 %v1489, %v1581
    %v1583 = vpop.f32.mrb[0].mxu0
    %v1584 = vadd.f32 %v1491, %v1583
    %v1585 = vpop.f32.mrb[0].mxu0
    %v1586 = vadd.f32 %v1493, %v1585
    %1587 = vmatprep.mubr.bf16.mxu0 %v809
    %1588 = vmatmul.mubr.bf16.gmra.mrb[0].mxu0 %v808
    %v1589 = vpop.f32.mrb[0].mxu0
    %v1590 = vadd.f32 %v1497, %v1589
    %v1591 = vpop.f32.mrb[0].mxu0
    %v1592 = vadd.f32 %v1499, %v1591
    %v1593 = vpop.f32.mrb[0].mxu0
    %v1594 = vadd.f32 %v1501, %v1593
    %v1595 = vpop.f32.mrb[0].mxu0
    %v1596 = vadd.f32 %v1503, %v1595
    %1597 = vmatprep.mubr.bf16.mxu0 %v817
    %1598 = vmatmul.mubr.bf16.gmra.mrb[0].mxu0 %v816
    %v1599 = vpop.f32.mrb[0].mxu0
    %v1600 = vadd.f32 %v1507, %v1599
    %v1601 = vpop.f32.mrb[0].mxu0
    %v1602 = vadd.f32 %v1509, %v1601
    %v1603 = vpop.f32.mrb[0].mxu0
    %v1604 = vadd.f32 %v1511, %v1603
    %v1605 = vpop.f32.mrb[0].mxu0
    %v1606 = vadd.f32 %v1513, %v1605
    %1607 = vmatprep.mubr.bf16.mxu0 %v825
    %1608 = vmatmul.mubr.bf16.gmra.mrb[0].mxu0 %v824
    %v1609 = vpop.f32.mrb[0].mxu0
    %v1610 = vadd.f32 %v1517, %v1609
    %v1611 = vpop.f32.mrb[0].mxu0
    %v1612 = vadd.f32 %v1519, %v1611
    %v1613 = vpop.f32.mrb[0].mxu0
    %v1614 = vadd.f32 %v1521, %v1613
    %v1615 = vpop.f32.mrb[0].mxu0
    %v1616 = vadd.f32 %v1523, %v1615
    %1617 = vdwg.mxu0
    %1618 = vmatprep.subr.bf16.mxu0 %v127
    %1619 = vmatpush1.bf16.msra.mxu0 %v126
    %1620 = vmatprep.subr.bf16.mxu0 %v135
    %1621 = vmatpush1.bf16.msra.mxu0 %v134
    %1622 = vmatprep.subr.bf16.mxu0 %v143
    %1623 = vmatpush1.bf16.msra.mxu0 %v142
    %1624 = vmatprep.subr.bf16.mxu0 %v151
    %1625 = vmatpush1.bf16.msra.mxu0 %v150
    %1626 = vmatprep.subr.bf16.mxu0 %v159
    %1627 = vmatpush1.bf16.msra.mxu0 %v158
    %1628 = vmatprep.subr.bf16.mxu0 %v167
    %1629 = vmatpush1.bf16.msra.mxu0 %v166
    %1630 = vmatprep.subr.bf16.mxu0 %v175
    %1631 = vmatpush1.bf16.msra.mxu0 %v174
    %1632 = vmatprep.subr.bf16.mxu0 %v183
    %1633 = vmatpush1.bf16.msra.mxu0 %v182
    %1634 = vmatprep.subr.bf16.mxu0 %v191
    %1635 = vmatpush1.bf16.msra.mxu0 %v190
    %1636 = vmatprep.subr.bf16.mxu0 %v199
    %1637 = vmatpush1.bf16.msra.mxu0 %v198
    %1638 = vmatprep.subr.bf16.mxu0 %v207
    %1639 = vmatpush1.bf16.msra.mxu0 %v206
    %1640 = vmatprep.subr.bf16.mxu0 %v215
    %1641 = vmatpush1.bf16.msra.mxu0 %v214
    %1642 = vmatprep.subr.bf16.mxu0 %v223
    %1643 = vmatpush1.bf16.msra.mxu0 %v222
    %1644 = vmatprep.subr.bf16.mxu0 %v231
    %1645 = vmatpush1.bf16.msra.mxu0 %v230
    %1646 = vmatprep.subr.bf16.mxu0 %v239
    %1647 = vmatpush1.bf16.msra.mxu0 %v238
    %1648 = vmatprep.subr.bf16.mxu0 %v247
    %1649 = vmatpush1.bf16.msra.mxu0 %v246
    %1650 = vmatprep.mubr.bf16.mxu0 %v779
    %1651 = vmatmul.mubr.bf16.gmra.mrb[0].mxu0 %v778
    %v1652 = vpop.f32.mrb[0].mxu0
    %v1653 = vadd.f32 0.0, %v1652
    %v1654 = vpop.f32.mrb[0].mxu0
    %v1655 = vadd.f32 0.0, %v1654
    %v1656 = vpop.f32.mrb[0].mxu0
    %v1657 = vadd.f32 0.0, %v1656
    %v1658 = vpop.f32.mrb[0].mxu0
    %v1659 = vadd.f32 0.0, %v1658
    %1660 = vmatprep.mubr.bf16.mxu0 %v787
    %1661 = vmatmul.mubr.bf16.gmra.mrb[0].mxu0 %v786
    %v1662 = vpop.f32.mrb[0].mxu0
    %v1663 = vadd.f32 0.0, %v1662
    %v1664 = vpop.f32.mrb[0].mxu0
    %v1665 = vadd.f32 0.0, %v1664
    %v1666 = vpop.f32.mrb[0].mxu0
    %v1667 = vadd.f32 0.0, %v1666
    %v1668 = vpop.f32.mrb[0].mxu0
    %v1669 = vadd.f32 0.0, %v1668
    %1670 = vmatprep.mubr.bf16.mxu0 %v795
    %1671 = vmatmul.mubr.bf16.gmra.mrb[0].mxu0 %v794
    %v1672 = vpop.f32.mrb[0].mxu0
    %v1673 = vadd.f32 0.0, %v1672
    %v1674 = vpop.f32.mrb[0].mxu0
    %v1675 = vadd.f32 0.0, %v1674
    %v1676 = vpop.f32.mrb[0].mxu0
    %v1677 = vadd.f32 0.0, %v1676
    %v1678 = vpop.f32.mrb[0].mxu0
    %v1679 = vadd.f32 0.0, %v1678
    %1680 = vmatprep.mubr.bf16.mxu0 %v803
    %1681 = vmatmul.mubr.bf16.gmra.mrb[0].mxu0 %v802
    %v1682 = vpop.f32.mrb[0].mxu0
    %v1683 = vadd.f32 0.0, %v1682
    %v1684 = vpop.f32.mrb[0].mxu0
    %v1685 = vadd.f32 0.0, %v1684
    %v1686 = vpop.f32.mrb[0].mxu0
    %v1687 = vadd.f32 0.0, %v1686
    %v1688 = vpop.f32.mrb[0].mxu0
    %v1689 = vadd.f32 0.0, %v1688
    %1690 = vmatprep.mubr.bf16.mxu0 %v811
    %1691 = vmatmul.mubr.bf16.gmra.mrb[0].mxu0 %v810
    %v1692 = vpop.f32.mrb[0].mxu0
    %v1693 = vadd.f32 0.0, %v1692
    %v1694 = vpop.f32.mrb[0].mxu0
    %v1695 = vadd.f32 0.0, %v1694
    %v1696 = vpop.f32.mrb[0].mxu0
    %v1697 = vadd.f32 0.0, %v1696
    %v1698 = vpop.f32.mrb[0].mxu0
    %v1699 = vadd.f32 0.0, %v1698
    %1700 = vmatprep.mubr.bf16.mxu0 %v819
    %1701 = vmatmul.mubr.bf16.gmra.mrb[0].mxu0 %v818
    %v1702 = vpop.f32.mrb[0].mxu0
    %v1703 = vadd.f32 0.0, %v1702
    %v1704 = vpop.f32.mrb[0].mxu0
    %v1705 = vadd.f32 0.0, %v1704
    %v1706 = vpop.f32.mrb[0].mxu0
    %v1707 = vadd.f32 0.0, %v1706
    %v1708 = vpop.f32.mrb[0].mxu0
    %v1709 = vadd.f32 0.0, %v1708
    %1710 = vdwg.mxu0
    %1711 = vmatprep.subr.bf16.mxu0 %v255
    %1712 = vmatpush1.bf16.msra.mxu0 %v254
    %1713 = vmatprep.subr.bf16.mxu0 %v263
    %1714 = vmatpush1.bf16.msra.mxu0 %v262
    %1715 = vmatprep.subr.bf16.mxu0 %v271
    %1716 = vmatpush1.bf16.msra.mxu0 %v270
    %1717 = vmatprep.subr.bf16.mxu0 %v279
    %1718 = vmatpush1.bf16.msra.mxu0 %v278
    %1719 = vmatprep.subr.bf16.mxu0 %v287
    %1720 = vmatpush1.bf16.msra.mxu0 %v286
    %1721 = vmatprep.subr.bf16.mxu0 %v295
    %1722 = vmatpush1.bf16.msra.mxu0 %v294
    %1723 = vmatprep.subr.bf16.mxu0 %v303
    %1724 = vmatpush1.bf16.msra.mxu0 %v302
    %1725 = vmatprep.subr.bf16.mxu0 %v311
    %1726 = vmatpush1.bf16.msra.mxu0 %v310
    %1727 = vmatprep.subr.bf16.mxu0 %v319
    %1728 = vmatpush1.bf16.msra.mxu0 %v318
    %1729 = vmatprep.subr.bf16.mxu0 %v327
    %1730 = vmatpush1.bf16.msra.mxu0 %v326
    %1731 = vmatprep.subr.bf16.mxu0 %v335
    %1732 = vmatpush1.bf16.msra.mxu0 %v334
    %1733 = vmatprep.subr.bf16.mxu0 %v343
    %1734 = vmatpush1.bf16.msra.mxu0 %v342
    %1735 = vmatprep.subr.bf16.mxu0 %v351
    %1736 = vmatpush1.bf16.msra.mxu0 %v350
    %1737 = vmatprep.subr.bf16.mxu0 %v359
    %1738 = vmatpush1.bf16.msra.mxu0 %v358
    %1739 = vmatprep.subr.bf16.mxu0 %v367
    %1740 = vmatpush1.bf16.msra.mxu0 %v366
    %1741 = vmatprep.subr.bf16.mxu0 %v375
    %1742 = vmatpush1.bf16.msra.mxu0 %v374
    %1743 = vmatprep.mubr.bf16.mxu0 %v781
    %1744 = vmatmul.mubr.bf16.gmra.mrb[0].mxu0 %v780
    %v1745 = vpop.f32.mrb[0].mxu0
    %v1746 = vadd.f32 %v1653, %v1745
    %v1747 = vpop.f32.mrb[0].mxu0
    %v1748 = vadd.f32 %v1655, %v1747
    %v1749 = vpop.f32.mrb[0].mxu0
    %v1750 = vadd.f32 %v1657, %v1749
    %v1751 = vpop.f32.mrb[0].mxu0
    %v1752 = vadd.f32 %v1659, %v1751
    %1753 = vmatprep.mubr.bf16.mxu0 %v789
    %1754 = vmatmul.mubr.bf16.gmra.mrb[0].mxu0 %v788
    %v1755 = vpop.f32.mrb[0].mxu0
    %v1756 = vadd.f32 %v1663, %v1755
    %v1757 = vpop.f32.mrb[0].mxu0
    %v1758 = vadd.f32 %v1665, %v1757
    %v1759 = vpop.f32.mrb[0].mxu0
    %v1760 = vadd.f32 %v1667, %v1759
    %v1761 = vpop.f32.mrb[0].mxu0
    %v1762 = vadd.f32 %v1669, %v1761
    %1763 = vmatprep.mubr.bf16.mxu0 %v797
    %1764 = vmatmul.mubr.bf16.gmra.mrb[0].mxu0 %v796
    %v1765 = vpop.f32.mrb[0].mxu0
    %v1766 = vadd.f32 %v1673, %v1765
    %v1767 = vpop.f32.mrb[0].mxu0
    %v1768 = vadd.f32 %v1675, %v1767
    %v1769 = vpop.f32.mrb[0].mxu0
    %v1770 = vadd.f32 %v1677, %v1769
    %v1771 = vpop.f32.mrb[0].mxu0
    %v1772 = vadd.f32 %v1679, %v1771
    %1773 = vmatprep.mubr.bf16.mxu0 %v805
    %1774 = vmatmul.mubr.bf16.gmra.mrb[0].mxu0 %v804
    %v1775 = vpop.f32.mrb[0].mxu0
    %v1776 = vadd.f32 %v1683, %v1775
    %v1777 = vpop.f32.mrb[0].mxu0
    %v1778 = vadd.f32 %v1685, %v1777
    %v1779 = vpop.f32.mrb[0].mxu0
    %v1780 = vadd.f32 %v1687, %v1779
    %v1781 = vpop.f32.mrb[0].mxu0
    %v1782 = vadd.f32 %v1689, %v1781
    %1783 = vmatprep.mubr.bf16.mxu0 %v813
    %1784 = vmatmul.mubr.bf16.gmra.mrb[0].mxu0 %v812
    %v1785 = vpop.f32.mrb[0].mxu0
    %v1786 = vadd.f32 %v1693, %v1785
    %v1787 = vpop.f32.mrb[0].mxu0
    %v1788 = vadd.f32 %v1695, %v1787
    %v1789 = vpop.f32.mrb[0].mxu0
    %v1790 = vadd.f32 %v1697, %v1789
    %v1791 = vpop.f32.mrb[0].mxu0
    %v1792 = vadd.f32 %v1699, %v1791
    %1793 = vmatprep.mubr.bf16.mxu0 %v821
    %1794 = vmatmul.mubr.bf16.gmra.mrb[0].mxu0 %v820
    %v1795 = vpop.f32.mrb[0].mxu0
    %v1796 = vadd.f32 %v1703, %v1795
    %v1797 = vpop.f32.mrb[0].mxu0
    %v1798 = vadd.f32 %v1705, %v1797
    %v1799 = vpop.f32.mrb[0].mxu0
    %v1800 = vadd.f32 %v1707, %v1799
    %v1801 = vpop.f32.mrb[0].mxu0
    %v1802 = vadd.f32 %v1709, %v1801
    %1803 = vdwg.mxu0
    %1804 = vmatprep.subr.bf16.mxu0 %v383
    %1805 = vmatpush1.bf16.msra.mxu0 %v382
    %1806 = vmatprep.subr.bf16.mxu0 %v391
    %1807 = vmatpush1.bf16.msra.mxu0 %v390
    %1808 = vmatprep.subr.bf16.mxu0 %v399
    %1809 = vmatpush1.bf16.msra.mxu0 %v398
    %1810 = vmatprep.subr.bf16.mxu0 %v407
    %1811 = vmatpush1.bf16.msra.mxu0 %v406
    %1812 = vmatprep.subr.bf16.mxu0 %v415
    %1813 = vmatpush1.bf16.msra.mxu0 %v414
    %1814 = vmatprep.subr.bf16.mxu0 %v423
    %1815 = vmatpush1.bf16.msra.mxu0 %v422
    %1816 = vmatprep.subr.bf16.mxu0 %v431
    %1817 = vmatpush1.bf16.msra.mxu0 %v430
    %1818 = vmatprep.subr.bf16.mxu0 %v439
    %1819 = vmatpush1.bf16.msra.mxu0 %v438
    %1820 = vmatprep.subr.bf16.mxu0 %v447
    %1821 = vmatpush1.bf16.msra.mxu0 %v446
    %1822 = vmatprep.subr.bf16.mxu0 %v455
    %1823 = vmatpush1.bf16.msra.mxu0 %v454
    %1824 = vmatprep.subr.bf16.mxu0 %v463
    %1825 = vmatpush1.bf16.msra.mxu0 %v462
    %1826 = vmatprep.subr.bf16.mxu0 %v471
    %1827 = vmatpush1.bf16.msra.mxu0 %v470
    %1828 = vmatprep.subr.bf16.mxu0 %v479
    %1829 = vmatpush1.bf16.msra.mxu0 %v478
    %1830 = vmatprep.subr.bf16.mxu0 %v487
    %1831 = vmatpush1.bf16.msra.mxu0 %v486
    %1832 = vmatprep.subr.bf16.mxu0 %v495
    %1833 = vmatpush1.bf16.msra.mxu0 %v494
    %1834 = vmatprep.subr.bf16.mxu0 %v503
    %1835 = vmatpush1.bf16.msra.mxu0 %v502
    %1836 = vmatprep.mubr.bf16.mxu0 %v783
    %1837 = vmatmul.mubr.bf16.gmra.mrb[0].mxu0 %v782
    %v1838 = vpop.f32.mrb[0].mxu0
    %v1839 = vadd.f32 %v1746, %v1838
    %v1840 = vpop.f32.mrb[0].mxu0
    %v1841 = vadd.f32 %v1748, %v1840
    %v1842 = vpop.f32.mrb[0].mxu0
    %v1843 = vadd.f32 %v1750, %v1842
    %v1844 = vpop.f32.mrb[0].mxu0
    %v1845 = vadd.f32 %v1752, %v1844
    %1846 = vmatprep.mubr.bf16.mxu0 %v791
    %1847 = vmatmul.mubr.bf16.gmra.mrb[0].mxu0 %v790
    %v1848 = vpop.f32.mrb[0].mxu0
    %v1849 = vadd.f32 %v1756, %v1848
    %v1850 = vpop.f32.mrb[0].mxu0
    %v1851 = vadd.f32 %v1758, %v1850
    %v1852 = vpop.f32.mrb[0].mxu0
    %v1853 = vadd.f32 %v1760, %v1852
    %v1854 = vpop.f32.mrb[0].mxu0
    %v1855 = vadd.f32 %v1762, %v1854
    %1856 = vmatprep.mubr.bf16.mxu0 %v799
    %1857 = vmatmul.mubr.bf16.gmra.mrb[0].mxu0 %v798
    %v1858 = vpop.f32.mrb[0].mxu0
    %v1859 = vadd.f32 %v1766, %v1858
    %v1860 = vpop.f32.mrb[0].mxu0
    %v1861 = vadd.f32 %v1768, %v1860
    %v1862 = vpop.f32.mrb[0].mxu0
    %v1863 = vadd.f32 %v1770, %v1862
    %v1864 = vpop.f32.mrb[0].mxu0
    %v1865 = vadd.f32 %v1772, %v1864
    %1866 = vmatprep.mubr.bf16.mxu0 %v807
    %1867 = vmatmul.mubr.bf16.gmra.mrb[0].mxu0 %v806
    %v1868 = vpop.f32.mrb[0].mxu0
    %v1869 = vadd.f32 %v1776, %v1868
    %v1870 = vpop.f32.mrb[0].mxu0
    %v1871 = vadd.f32 %v1778, %v1870
    %v1872 = vpop.f32.mrb[0].mxu0
    %v1873 = vadd.f32 %v1780, %v1872
    %v1874 = vpop.f32.mrb[0].mxu0
    %v1875 = vadd.f32 %v1782, %v1874
    %1876 = vmatprep.mubr.bf16.mxu0 %v815
    %1877 = vmatmul.mubr.bf16.gmra.mrb[0].mxu0 %v814
    %v1878 = vpop.f32.mrb[0].mxu0
    %v1879 = vadd.f32 %v1786, %v1878
    %v1880 = vpop.f32.mrb[0].mxu0
    %v1881 = vadd.f32 %v1788, %v1880
    %v1882 = vpop.f32.mrb[0].mxu0
    %v1883 = vadd.f32 %v1790, %v1882
    %v1884 = vpop.f32.mrb[0].mxu0
    %v1885 = vadd.f32 %v1792, %v1884
    %1886 = vmatprep.mubr.bf16.mxu0 %v823
    %1887 = vmatmul.mubr.bf16.gmra.mrb[0].mxu0 %v822
    %v1888 = vpop.f32.mrb[0].mxu0
    %v1889 = vadd.f32 %v1796, %v1888
    %v1890 = vpop.f32.mrb[0].mxu0
    %v1891 = vadd.f32 %v1798, %v1890
    %v1892 = vpop.f32.mrb[0].mxu0
    %v1893 = vadd.f32 %v1800, %v1892
    %v1894 = vpop.f32.mrb[0].mxu0
    %v1895 = vadd.f32 %v1802, %v1894
    %1896 = vdwg.mxu0
    %1897 = vmatprep.subr.bf16.mxu0 %v511
    %1898 = vmatpush1.bf16.msra.mxu0 %v510
    %1899 = vmatprep.subr.bf16.mxu0 %v519
    %1900 = vmatpush1.bf16.msra.mxu0 %v518
    %1901 = vmatprep.subr.bf16.mxu0 %v527
    %1902 = vmatpush1.bf16.msra.mxu0 %v526
    %1903 = vmatprep.subr.bf16.mxu0 %v535
    %1904 = vmatpush1.bf16.msra.mxu0 %v534
    %1905 = vmatprep.subr.bf16.mxu0 %v543
    %1906 = vmatpush1.bf16.msra.mxu0 %v542
    %1907 = vmatprep.subr.bf16.mxu0 %v551
    %1908 = vmatpush1.bf16.msra.mxu0 %v550
    %1909 = vmatprep.subr.bf16.mxu0 %v559
    %1910 = vmatpush1.bf16.msra.mxu0 %v558
    %1911 = vmatprep.subr.bf16.mxu0 %v567
    %1912 = vmatpush1.bf16.msra.mxu0 %v566
    %1913 = vmatprep.subr.bf16.mxu0 %v575
    %1914 = vmatpush1.bf16.msra.mxu0 %v574
    %1915 = vmatprep.subr.bf16.mxu0 %v583
    %1916 = vmatpush1.bf16.msra.mxu0 %v582
    %1917 = vmatprep.subr.bf16.mxu0 %v591
    %1918 = vmatpush1.bf16.msra.mxu0 %v590
    %1919 = vmatprep.subr.bf16.mxu0 %v599
    %1920 = vmatpush1.bf16.msra.mxu0 %v598
    %1921 = vmatprep.subr.bf16.mxu0 %v607
    %1922 = vmatpush1.bf16.msra.mxu0 %v606
    %1923 = vmatprep.subr.bf16.mxu0 %v615
    %1924 = vmatpush1.bf16.msra.mxu0 %v614
    %1925 = vmatprep.subr.bf16.mxu0 %v623
    %1926 = vmatpush1.bf16.msra.mxu0 %v622
    %1927 = vmatprep.subr.bf16.mxu0 %v631
    %1928 = vmatpush1.bf16.msra.mxu0 %v630
    %1929 = vmatprep.mubr.bf16.mxu0 %v785
    %1930 = vmatmul.mubr.bf16.gmra.mrb[0].mxu0 %v784
    %v1931 = vpop.f32.mrb[0].mxu0
    %v1932 = vadd.f32 %v1839, %v1931
    %v1933 = vpop.f32.mrb[0].mxu0
    %v1934 = vadd.f32 %v1841, %v1933
    %v1935 = vpop.f32.mrb[0].mxu0
    %v1936 = vadd.f32 %v1843, %v1935
    %v1937 = vpop.f32.mrb[0].mxu0
    %v1938 = vadd.f32 %v1845, %v1937
    %1939 = vmatprep.mubr.bf16.mxu0 %v793
    %1940 = vmatmul.mubr.bf16.gmra.mrb[0].mxu0 %v792
    %v1941 = vpop.f32.mrb[0].mxu0
    %v1942 = vadd.f32 %v1849, %v1941
    %v1943 = vpop.f32.mrb[0].mxu0
    %v1944 = vadd.f32 %v1851, %v1943
    %v1945 = vpop.f32.mrb[0].mxu0
    %v1946 = vadd.f32 %v1853, %v1945
    %v1947 = vpop.f32.mrb[0].mxu0
    %v1948 = vadd.f32 %v1855, %v1947
    %1949 = vmatprep.mubr.bf16.mxu0 %v801
    %1950 = vmatmul.mubr.bf16.gmra.mrb[0].mxu0 %v800
    %v1951 = vpop.f32.mrb[0].mxu0
    %v1952 = vadd.f32 %v1859, %v1951
    %v1953 = vpop.f32.mrb[0].mxu0
    %v1954 = vadd.f32 %v1861, %v1953
    %v1955 = vpop.f32.mrb[0].mxu0
    %v1956 = vadd.f32 %v1863, %v1955
    %v1957 = vpop.f32.mrb[0].mxu0
    %v1958 = vadd.f32 %v1865, %v1957
    %1959 = vmatprep.mubr.bf16.mxu0 %v809
    %1960 = vmatmul.mubr.bf16.gmra.mrb[0].mxu0 %v808
    %v1961 = vpop.f32.mrb[0].mxu0
    %v1962 = vadd.f32 %v1869, %v1961
    %v1963 = vpop.f32.mrb[0].mxu0
    %v1964 = vadd.f32 %v1871, %v1963
    %v1965 = vpop.f32.mrb[0].mxu0
    %v1966 = vadd.f32 %v1873, %v1965
    %v1967 = vpop.f32.mrb[0].mxu0
    %v1968 = vadd.f32 %v1875, %v1967
    %1969 = vmatprep.mubr.bf16.mxu0 %v817
    %1970 = vmatmul.mubr.bf16.gmra.mrb[0].mxu0 %v816
    %v1971 = vpop.f32.mrb[0].mxu0
    %v1972 = vadd.f32 %v1879, %v1971
    %v1973 = vpop.f32.mrb[0].mxu0
    %v1974 = vadd.f32 %v1881, %v1973
    %v1975 = vpop.f32.mrb[0].mxu0
    %v1976 = vadd.f32 %v1883, %v1975
    %v1977 = vpop.f32.mrb[0].mxu0
    %v1978 = vadd.f32 %v1885, %v1977
    %1979 = vmatprep.mubr.bf16.mxu0 %v825
    %1980 = vmatmul.mubr.bf16.gmra.mrb[0].mxu0 %v824
    %v1981 = vpop.f32.mrb[0].mxu0
    %v1982 = vadd.f32 %v1889, %v1981
    %v1983 = vpop.f32.mrb[0].mxu0
    %v1984 = vadd.f32 %v1891, %v1983
    %v1985 = vpop.f32.mrb[0].mxu0
    %v1986 = vadd.f32 %v1893, %v1985
    %v1987 = vpop.f32.mrb[0].mxu0
    %v1988 = vadd.f32 %v1895, %v1987
    %1989 = vdwg.mxu0
    %1990 = vmatprep.subr.bf16.mxu0 %v129
    %1991 = vmatpush1.bf16.msra.mxu0 %v128
    %1992 = vmatprep.subr.bf16.mxu0 %v137
    %1993 = vmatpush1.bf16.msra.mxu0 %v136
    %1994 = vmatprep.subr.bf16.mxu0 %v145
    %1995 = vmatpush1.bf16.msra.mxu0 %v144
    %1996 = vmatprep.subr.bf16.mxu0 %v153
    %1997 = vmatpush1.bf16.msra.mxu0 %v152
    %1998 = vmatprep.subr.bf16.mxu0 %v161
    %1999 = vmatpush1.bf16.msra.mxu0 %v160
    %2000 = vmatprep.subr.bf16.mxu0 %v169
    %2001 = vmatpush1.bf16.msra.mxu0 %v168
    %2002 = vmatprep.subr.bf16.mxu0 %v177
    %2003 = vmatpush1.bf16.msra.mxu0 %v176
    %2004 = vmatprep.subr.bf16.mxu0 %v185
    %2005 = vmatpush1.bf16.msra.mxu0 %v184
    %2006 = vmatprep.subr.bf16.mxu0 %v193
    %2007 = vmatpush1.bf16.msra.mxu0 %v192
    %2008 = vmatprep.subr.bf16.mxu0 %v201
    %2009 = vmatpush1.bf16.msra.mxu0 %v200
    %2010 = vmatprep.subr.bf16.mxu0 %v209
    %2011 = vmatpush1.bf16.msra.mxu0 %v208
    %2012 = vmatprep.subr.bf16.mxu0 %v217
    %2013 = vmatpush1.bf16.msra.mxu0 %v216
    %2014 = vmatprep.subr.bf16.mxu0 %v225
    %2015 = vmatpush1.bf16.msra.mxu0 %v224
    %2016 = vmatprep.subr.bf16.mxu0 %v233
    %2017 = vmatpush1.bf16.msra.mxu0 %v232
    %2018 = vmatprep.subr.bf16.mxu0 %v241
    %2019 = vmatpush1.bf16.msra.mxu0 %v240
    %2020 = vmatprep.subr.bf16.mxu0 %v249
    %2021 = vmatpush1.bf16.msra.mxu0 %v248
    %2022 = vmatprep.mubr.bf16.mxu0 %v779
    %2023 = vmatmul.mubr.bf16.gmra.mrb[0].mxu0 %v778
    %v2024 = vpop.f32.mrb[0].mxu0
    %v2025 = vadd.f32 0.0, %v2024
    %v2026 = vpop.f32.mrb[0].mxu0
    %v2027 = vadd.f32 0.0, %v2026
    %v2028 = vpop.f32.mrb[0].mxu0
    %v2029 = vadd.f32 0.0, %v2028
    %v2030 = vpop.f32.mrb[0].mxu0
    %v2031 = vadd.f32 0.0, %v2030
    %2032 = vmatprep.mubr.bf16.mxu0 %v787
    %2033 = vmatmul.mubr.bf16.gmra.mrb[0].mxu0 %v786
    %v2034 = vpop.f32.mrb[0].mxu0
    %v2035 = vadd.f32 0.0, %v2034
    %v2036 = vpop.f32.mrb[0].mxu0
    %v2037 = vadd.f32 0.0, %v2036
    %v2038 = vpop.f32.mrb[0].mxu0
    %v2039 = vadd.f32 0.0, %v2038
    %v2040 = vpop.f32.mrb[0].mxu0
    %v2041 = vadd.f32 0.0, %v2040
    %2042 = vmatprep.mubr.bf16.mxu0 %v795
    %2043 = vmatmul.mubr.bf16.gmra.mrb[0].mxu0 %v794
    %v2044 = vpop.f32.mrb[0].mxu0
    %v2045 = vadd.f32 0.0, %v2044
    %v2046 = vpop.f32.mrb[0].mxu0
    %v2047 = vadd.f32 0.0, %v2046
    %v2048 = vpop.f32.mrb[0].mxu0
    %v2049 = vadd.f32 0.0, %v2048
    %v2050 = vpop.f32.mrb[0].mxu0
    %v2051 = vadd.f32 0.0, %v2050
    %2052 = vmatprep.mubr.bf16.mxu0 %v803
    %2053 = vmatmul.mubr.bf16.gmra.mrb[0].mxu0 %v802
    %v2054 = vpop.f32.mrb[0].mxu0
    %v2055 = vadd.f32 0.0, %v2054
    %v2056 = vpop.f32.mrb[0].mxu0
    %v2057 = vadd.f32 0.0, %v2056
    %v2058 = vpop.f32.mrb[0].mxu0
    %v2059 = vadd.f32 0.0, %v2058
    %v2060 = vpop.f32.mrb[0].mxu0
    %v2061 = vadd.f32 0.0, %v2060
    %2062 = vmatprep.mubr.bf16.mxu0 %v811
    %2063 = vmatmul.mubr.bf16.gmra.mrb[0].mxu0 %v810
    %v2064 = vpop.f32.mrb[0].mxu0
    %v2065 = vadd.f32 0.0, %v2064
    %v2066 = vpop.f32.mrb[0].mxu0
    %v2067 = vadd.f32 0.0, %v2066
    %v2068 = vpop.f32.mrb[0].mxu0
    %v2069 = vadd.f32 0.0, %v2068
    %v2070 = vpop.f32.mrb[0].mxu0
    %v2071 = vadd.f32 0.0, %v2070
    %2072 = vmatprep.mubr.bf16.mxu0 %v819
    %2073 = vmatmul.mubr.bf16.gmra.mrb[0].mxu0 %v818
    %v2074 = vpop.f32.mrb[0].mxu0
    %v2075 = vadd.f32 0.0, %v2074
    %v2076 = vpop.f32.mrb[0].mxu0
    %v2077 = vadd.f32 0.0, %v2076
    %v2078 = vpop.f32.mrb[0].mxu0
    %v2079 = vadd.f32 0.0, %v2078
    %v2080 = vpop.f32.mrb[0].mxu0
    %v2081 = vadd.f32 0.0, %v2080
    %2082 = vdwg.mxu0
    %2083 = vmatprep.subr.bf16.mxu0 %v257
    %2084 = vmatpush1.bf16.msra.mxu0 %v256
    %2085 = vmatprep.subr.bf16.mxu0 %v265
    %2086 = vmatpush1.bf16.msra.mxu0 %v264
    %2087 = vmatprep.subr.bf16.mxu0 %v273
    %2088 = vmatpush1.bf16.msra.mxu0 %v272
    %2089 = vmatprep.subr.bf16.mxu0 %v281
    %2090 = vmatpush1.bf16.msra.mxu0 %v280
    %2091 = vmatprep.subr.bf16.mxu0 %v289
    %2092 = vmatpush1.bf16.msra.mxu0 %v288
    %2093 = vmatprep.subr.bf16.mxu0 %v297
    %2094 = vmatpush1.bf16.msra.mxu0 %v296
    %2095 = vmatprep.subr.bf16.mxu0 %v305
    %2096 = vmatpush1.bf16.msra.mxu0 %v304
    %2097 = vmatprep.subr.bf16.mxu0 %v313
    %2098 = vmatpush1.bf16.msra.mxu0 %v312
    %2099 = vmatprep.subr.bf16.mxu0 %v321
    %2100 = vmatpush1.bf16.msra.mxu0 %v320
    %2101 = vmatprep.subr.bf16.mxu0 %v329
    %2102 = vmatpush1.bf16.msra.mxu0 %v328
    %2103 = vmatprep.subr.bf16.mxu0 %v337
    %2104 = vmatpush1.bf16.msra.mxu0 %v336
    %2105 = vmatprep.subr.bf16.mxu0 %v345
    %2106 = vmatpush1.bf16.msra.mxu0 %v344
    %2107 = vmatprep.subr.bf16.mxu0 %v353
    %2108 = vmatpush1.bf16.msra.mxu0 %v352
    %2109 = vmatprep.subr.bf16.mxu0 %v361
    %2110 = vmatpush1.bf16.msra.mxu0 %v360
    %2111 = vmatprep.subr.bf16.mxu0 %v369
    %2112 = vmatpush1.bf16.msra.mxu0 %v368
    %2113 = vmatprep.subr.bf16.mxu0 %v377
    %2114 = vmatpush1.bf16.msra.mxu0 %v376
    %2115 = vmatprep.mubr.bf16.mxu0 %v781
    %2116 = vmatmul.mubr.bf16.gmra.mrb[0].mxu0 %v780
    %v2117 = vpop.f32.mrb[0].mxu0
    %v2118 = vadd.f32 %v2025, %v2117
    %v2119 = vpop.f32.mrb[0].mxu0
    %v2120 = vadd.f32 %v2027, %v2119
    %v2121 = vpop.f32.mrb[0].mxu0
    %v2122 = vadd.f32 %v2029, %v2121
    %v2123 = vpop.f32.mrb[0].mxu0
    %v2124 = vadd.f32 %v2031, %v2123
    %2125 = vmatprep.mubr.bf16.mxu0 %v789
    %2126 = vmatmul.mubr.bf16.gmra.mrb[0].mxu0 %v788
    %v2127 = vpop.f32.mrb[0].mxu0
    %v2128 = vadd.f32 %v2035, %v2127
    %v2129 = vpop.f32.mrb[0].mxu0
    %v2130 = vadd.f32 %v2037, %v2129
    %v2131 = vpop.f32.mrb[0].mxu0
    %v2132 = vadd.f32 %v2039, %v2131
    %v2133 = vpop.f32.mrb[0].mxu0
    %v2134 = vadd.f32 %v2041, %v2133
    %2135 = vmatprep.mubr.bf16.mxu0 %v797
    %2136 = vmatmul.mubr.bf16.gmra.mrb[0].mxu0 %v796
    %v2137 = vpop.f32.mrb[0].mxu0
    %v2138 = vadd.f32 %v2045, %v2137
    %v2139 = vpop.f32.mrb[0].mxu0
    %v2140 = vadd.f32 %v2047, %v2139
    %v2141 = vpop.f32.mrb[0].mxu0
    %v2142 = vadd.f32 %v2049, %v2141
    %v2143 = vpop.f32.mrb[0].mxu0
    %v2144 = vadd.f32 %v2051, %v2143
    %2145 = vmatprep.mubr.bf16.mxu0 %v805
    %2146 = vmatmul.mubr.bf16.gmra.mrb[0].mxu0 %v804
    %v2147 = vpop.f32.mrb[0].mxu0
    %v2148 = vadd.f32 %v2055, %v2147
    %v2149 = vpop.f32.mrb[0].mxu0
    %v2150 = vadd.f32 %v2057, %v2149
    %v2151 = vpop.f32.mrb[0].mxu0
    %v2152 = vadd.f32 %v2059, %v2151
    %v2153 = vpop.f32.mrb[0].mxu0
    %v2154 = vadd.f32 %v2061, %v2153
    %2155 = vmatprep.mubr.bf16.mxu0 %v813
    %2156 = vmatmul.mubr.bf16.gmra.mrb[0].mxu0 %v812
    %v2157 = vpop.f32.mrb[0].mxu0
    %v2158 = vadd.f32 %v2065, %v2157
    %v2159 = vpop.f32.mrb[0].mxu0
    %v2160 = vadd.f32 %v2067, %v2159
    %v2161 = vpop.f32.mrb[0].mxu0
    %v2162 = vadd.f32 %v2069, %v2161
    %v2163 = vpop.f32.mrb[0].mxu0
    %v2164 = vadd.f32 %v2071, %v2163
    %2165 = vmatprep.mubr.bf16.mxu0 %v821
    %2166 = vmatmul.mubr.bf16.gmra.mrb[0].mxu0 %v820
    %v2167 = vpop.f32.mrb[0].mxu0
    %v2168 = vadd.f32 %v2075, %v2167
    %v2169 = vpop.f32.mrb[0].mxu0
    %v2170 = vadd.f32 %v2077, %v2169
    %v2171 = vpop.f32.mrb[0].mxu0
    %v2172 = vadd.f32 %v2079, %v2171
    %v2173 = vpop.f32.mrb[0].mxu0
    %v2174 = vadd.f32 %v2081, %v2173
    %2175 = vdwg.mxu0
    %2176 = vmatprep.subr.bf16.mxu0 %v385
    %2177 = vmatpush1.bf16.msra.mxu0 %v384
    %2178 = vmatprep.subr.bf16.mxu0 %v393
    %2179 = vmatpush1.bf16.msra.mxu0 %v392
    %2180 = vmatprep.subr.bf16.mxu0 %v401
    %2181 = vmatpush1.bf16.msra.mxu0 %v400
    %2182 = vmatprep.subr.bf16.mxu0 %v409
    %2183 = vmatpush1.bf16.msra.mxu0 %v408
    %2184 = vmatprep.subr.bf16.mxu0 %v417
    %2185 = vmatpush1.bf16.msra.mxu0 %v416
    %2186 = vmatprep.subr.bf16.mxu0 %v425
    %2187 = vmatpush1.bf16.msra.mxu0 %v424
    %2188 = vmatprep.subr.bf16.mxu0 %v433
    %2189 = vmatpush1.bf16.msra.mxu0 %v432
    %2190 = vmatprep.subr.bf16.mxu0 %v441
    %2191 = vmatpush1.bf16.msra.mxu0 %v440
    %2192 = vmatprep.subr.bf16.mxu0 %v449
    %2193 = vmatpush1.bf16.msra.mxu0 %v448
    %2194 = vmatprep.subr.bf16.mxu0 %v457
    %2195 = vmatpush1.bf16.msra.mxu0 %v456
    %2196 = vmatprep.subr.bf16.mxu0 %v465
    %2197 = vmatpush1.bf16.msra.mxu0 %v464
    %2198 = vmatprep.subr.bf16.mxu0 %v473
    %2199 = vmatpush1.bf16.msra.mxu0 %v472
    %2200 = vmatprep.subr.bf16.mxu0 %v481
    %2201 = vmatpush1.bf16.msra.mxu0 %v480
    %2202 = vmatprep.subr.bf16.mxu0 %v489
    %2203 = vmatpush1.bf16.msra.mxu0 %v488
    %2204 = vmatprep.subr.bf16.mxu0 %v497
    %2205 = vmatpush1.bf16.msra.mxu0 %v496
    %2206 = vmatprep.subr.bf16.mxu0 %v505
    %2207 = vmatpush1.bf16.msra.mxu0 %v504
    %2208 = vmatprep.mubr.bf16.mxu0 %v783
    %2209 = vmatmul.mubr.bf16.gmra.mrb[0].mxu0 %v782
    %v2210 = vpop.f32.mrb[0].mxu0
    %v2211 = vadd.f32 %v2118, %v2210
    %v2212 = vpop.f32.mrb[0].mxu0
    %v2213 = vadd.f32 %v2120, %v2212
    %v2214 = vpop.f32.mrb[0].mxu0
    %v2215 = vadd.f32 %v2122, %v2214
    %v2216 = vpop.f32.mrb[0].mxu0
    %v2217 = vadd.f32 %v2124, %v2216
    %2218 = vmatprep.mubr.bf16.mxu0 %v791
    %2219 = vmatmul.mubr.bf16.gmra.mrb[0].mxu0 %v790
    %v2220 = vpop.f32.mrb[0].mxu0
    %v2221 = vadd.f32 %v2128, %v2220
    %v2222 = vpop.f32.mrb[0].mxu0
    %v2223 = vadd.f32 %v2130, %v2222
    %v2224 = vpop.f32.mrb[0].mxu0
    %v2225 = vadd.f32 %v2132, %v2224
    %v2226 = vpop.f32.mrb[0].mxu0
    %v2227 = vadd.f32 %v2134, %v2226
    %2228 = vmatprep.mubr.bf16.mxu0 %v799
    %2229 = vmatmul.mubr.bf16.gmra.mrb[0].mxu0 %v798
    %v2230 = vpop.f32.mrb[0].mxu0
    %v2231 = vadd.f32 %v2138, %v2230
    %v2232 = vpop.f32.mrb[0].mxu0
    %v2233 = vadd.f32 %v2140, %v2232
    %v2234 = vpop.f32.mrb[0].mxu0
    %v2235 = vadd.f32 %v2142, %v2234
    %v2236 = vpop.f32.mrb[0].mxu0
    %v2237 = vadd.f32 %v2144, %v2236
    %2238 = vmatprep.mubr.bf16.mxu0 %v807
    %2239 = vmatmul.mubr.bf16.gmra.mrb[0].mxu0 %v806
    %v2240 = vpop.f32.mrb[0].mxu0
    %v2241 = vadd.f32 %v2148, %v2240
    %v2242 = vpop.f32.mrb[0].mxu0
    %v2243 = vadd.f32 %v2150, %v2242
    %v2244 = vpop.f32.mrb[0].mxu0
    %v2245 = vadd.f32 %v2152, %v2244
    %v2246 = vpop.f32.mrb[0].mxu0
    %v2247 = vadd.f32 %v2154, %v2246
    %2248 = vmatprep.mubr.bf16.mxu0 %v815
    %2249 = vmatmul.mubr.bf16.gmra.mrb[0].mxu0 %v814
    %v2250 = vpop.f32.mrb[0].mxu0
    %v2251 = vadd.f32 %v2158, %v2250
    %v2252 = vpop.f32.mrb[0].mxu0
    %v2253 = vadd.f32 %v2160, %v2252
    %v2254 = vpop.f32.mrb[0].mxu0
    %v2255 = vadd.f32 %v2162, %v2254
    %v2256 = vpop.f32.mrb[0].mxu0
    %v2257 = vadd.f32 %v2164, %v2256
    %2258 = vmatprep.mubr.bf16.mxu0 %v823
    %2259 = vmatmul.mubr.bf16.gmra.mrb[0].mxu0 %v822
    %v2260 = vpop.f32.mrb[0].mxu0
    %v2261 = vadd.f32 %v2168, %v2260
    %v2262 = vpop.f32.mrb[0].mxu0
    %v2263 = vadd.f32 %v2170, %v2262
    %v2264 = vpop.f32.mrb[0].mxu0
    %v2265 = vadd.f32 %v2172, %v2264
    %v2266 = vpop.f32.mrb[0].mxu0
    %v2267 = vadd.f32 %v2174, %v2266
    %2268 = vdwg.mxu0
    %2269 = vmatprep.subr.bf16.mxu0 %v513
    %2270 = vmatpush1.bf16.msra.mxu0 %v512
    %2271 = vmatprep.subr.bf16.mxu0 %v521
    %2272 = vmatpush1.bf16.msra.mxu0 %v520
    %2273 = vmatprep.subr.bf16.mxu0 %v529
    %2274 = vmatpush1.bf16.msra.mxu0 %v528
    %2275 = vmatprep.subr.bf16.mxu0 %v537
    %2276 = vmatpush1.bf16.msra.mxu0 %v536
    %2277 = vmatprep.subr.bf16.mxu0 %v545
    %2278 = vmatpush1.bf16.msra.mxu0 %v544
    %2279 = vmatprep.subr.bf16.mxu0 %v553
    %2280 = vmatpush1.bf16.msra.mxu0 %v552
    %2281 = vmatprep.subr.bf16.mxu0 %v561
    %2282 = vmatpush1.bf16.msra.mxu0 %v560
    %2283 = vmatprep.subr.bf16.mxu0 %v569
    %2284 = vmatpush1.bf16.msra.mxu0 %v568
    %2285 = vmatprep.subr.bf16.mxu0 %v577
    %2286 = vmatpush1.bf16.msra.mxu0 %v576
    %2287 = vmatprep.subr.bf16.mxu0 %v585
    %2288 = vmatpush1.bf16.msra.mxu0 %v584
    %2289 = vmatprep.subr.bf16.mxu0 %v593
    %2290 = vmatpush1.bf16.msra.mxu0 %v592
    %2291 = vmatprep.subr.bf16.mxu0 %v601
    %2292 = vmatpush1.bf16.msra.mxu0 %v600
    %2293 = vmatprep.subr.bf16.mxu0 %v609
    %2294 = vmatpush1.bf16.msra.mxu0 %v608
    %2295 = vmatprep.subr.bf16.mxu0 %v617
    %2296 = vmatpush1.bf16.msra.mxu0 %v616
    %2297 = vmatprep.subr.bf16.mxu0 %v625
    %2298 = vmatpush1.bf16.msra.mxu0 %v624
    %2299 = vmatprep.subr.bf16.mxu0 %v633
    %2300 = vmatpush1.bf16.msra.mxu0 %v632
    %2301 = vmatprep.mubr.bf16.mxu0 %v785
    %2302 = vmatmul.mubr.bf16.gmra.mrb[0].mxu0 %v784
    %v2303 = vpop.f32.mrb[0].mxu0
    %v2304 = vadd.f32 %v2211, %v2303
    %v2305 = vpop.f32.mrb[0].mxu0
    %v2306 = vadd.f32 %v2213, %v2305
    %v2307 = vpop.f32.mrb[0].mxu0
    %v2308 = vadd.f32 %v2215, %v2307
    %v2309 = vpop.f32.mrb[0].mxu0
    %v2310 = vadd.f32 %v2217, %v2309
    %2311 = vmatprep.mubr.bf16.mxu0 %v793
    %2312 = vmatmul.mubr.bf16.gmra.mrb[0].mxu0 %v792
    %v2313 = vpop.f32.mrb[0].mxu0
    %v2314 = vadd.f32 %v2221, %v2313
    %v2315 = vpop.f32.mrb[0].mxu0
    %v2316 = vadd.f32 %v2223, %v2315
    %v2317 = vpop.f32.mrb[0].mxu0
    %v2318 = vadd.f32 %v2225, %v2317
    %v2319 = vpop.f32.mrb[0].mxu0
    %v2320 = vadd.f32 %v2227, %v2319
    %2321 = vmatprep.mubr.bf16.mxu0 %v801
    %2322 = vmatmul.mubr.bf16.gmra.mrb[0].mxu0 %v800
    %v2323 = vpop.f32.mrb[0].mxu0
    %v2324 = vadd.f32 %v2231, %v2323
    %v2325 = vpop.f32.mrb[0].mxu0
    %v2326 = vadd.f32 %v2233, %v2325
    %v2327 = vpop.f32.mrb[0].mxu0
    %v2328 = vadd.f32 %v2235, %v2327
    %v2329 = vpop.f32.mrb[0].mxu0
    %v2330 = vadd.f32 %v2237, %v2329
    %2331 = vmatprep.mubr.bf16.mxu0 %v809
    %2332 = vmatmul.mubr.bf16.gmra.mrb[0].mxu0 %v808
    %v2333 = vpop.f32.mrb[0].mxu0
    %v2334 = vadd.f32 %v2241, %v2333
    %v2335 = vpop.f32.mrb[0].mxu0
    %v2336 = vadd.f32 %v2243, %v2335
    %v2337 = vpop.f32.mrb[0].mxu0
    %v2338 = vadd.f32 %v2245, %v2337
    %v2339 = vpop.f32.mrb[0].mxu0
    %v2340 = vadd.f32 %v2247, %v2339
    %2341 = vmatprep.mubr.bf16.mxu0 %v817
    %2342 = vmatmul.mubr.bf16.gmra.mrb[0].mxu0 %v816
    %v2343 = vpop.f32.mrb[0].mxu0
    %v2344 = vadd.f32 %v2251, %v2343
    %v2345 = vpop.f32.mrb[0].mxu0
    %v2346 = vadd.f32 %v2253, %v2345
    %v2347 = vpop.f32.mrb[0].mxu0
    %v2348 = vadd.f32 %v2255, %v2347
    %v2349 = vpop.f32.mrb[0].mxu0
    %v2350 = vadd.f32 %v2257, %v2349
    %2351 = vmatprep.mubr.bf16.mxu0 %v825
    %2352 = vmatmul.mubr.bf16.gmra.mrb[0].mxu0 %v824
    %v2353 = vpop.f32.mrb[0].mxu0
    %v2354 = vadd.f32 %v2261, %v2353
    %v2355 = vpop.f32.mrb[0].mxu0
    %v2356 = vadd.f32 %v2263, %v2355
    %v2357 = vpop.f32.mrb[0].mxu0
    %v2358 = vadd.f32 %v2265, %v2357
    %v2359 = vpop.f32.mrb[0].mxu0
    %v2360 = vadd.f32 %v2267, %v2359
    %2361 = vdwg.mxu0
    %v2362 = vlaneseq
    %v2363 = vand.u32 %v2362, 127
    %v2364 = vadd.s32 %v2363, 128
    %v2365 = vadd.s32 %v2363, 256
    %v2366 = vadd.s32 %v2363, 384
    %vm2367 = vcmp.eq.s32.totalorder %v2363, 0
    %vm2368 = vcmp.eq.s32.totalorder %v2364, 0
    %vm2369 = vcmp.eq.s32.totalorder %v2365, 0
    %vm2370 = vcmp.eq.s32.totalorder %v2366, 0
    %v2371 = vsel %vm2367, 0.0, %v1932
    %v2372 = vsel %vm2368, 0.0, %v1934
    %v2373 = vsel %vm2369, 0.0, %v2304
    %v2374 = vsel %vm2370, 0.0, %v2306
    %v2375 = vsel %vm2367, 0.0, %v1936
    %v2376 = vsel %vm2368, 0.0, %v1938
    %v2377 = vsel %vm2369, 0.0, %v2308
    %v2378 = vsel %vm2370, 0.0, %v2310
    %v2379 = vsel %vm2367, 0.0, %v1942
    %v2380 = vsel %vm2368, 0.0, %v1944
    %v2381 = vsel %vm2369, 0.0, %v2314
    %v2382 = vsel %vm2370, 0.0, %v2316
    %v2383 = vsel %vm2367, 0.0, %v1946
    %v2384 = vsel %vm2368, 0.0, %v1948
    %v2385 = vsel %vm2369, 0.0, %v2318
    %v2386 = vsel %vm2370, 0.0, %v2320
    %v2387 = vsel %vm2367, 0.0, %v1952
    %v2388 = vsel %vm2368, 0.0, %v1954
    %v2389 = vsel %vm2369, 0.0, %v2324
    %v2390 = vsel %vm2370, 0.0, %v2326
    %v2391 = vsel %vm2367, 0.0, %v1956
    %v2392 = vsel %vm2368, 0.0, %v1958
    %v2393 = vsel %vm2369, 0.0, %v2328
    %v2394 = vsel %vm2370, 0.0, %v2330
    %v2395 = vsel %vm2367, 0.0, %v1962
    %v2396 = vsel %vm2368, 0.0, %v1964
    %v2397 = vsel %vm2369, 0.0, %v2334
    %v2398 = vsel %vm2370, 0.0, %v2336
    %v2399 = vsel %vm2367, 0.0, %v1966
    %v2400 = vsel %vm2368, 0.0, %v1968
    %v2401 = vsel %vm2369, 0.0, %v2338
    %v2402 = vsel %vm2370, 0.0, %v2340
    %v2403 = vsel %vm2367, 0.0, %v1972
    %v2404 = vsel %vm2368, 0.0, %v1974
    %v2405 = vsel %vm2369, 0.0, %v2344
    %v2406 = vsel %vm2370, 0.0, %v2346
    %v2407 = vsel %vm2367, 0.0, %v1976
    %v2408 = vsel %vm2368, 0.0, %v1978
    %v2409 = vsel %vm2369, 0.0, %v2348
    %v2410 = vsel %vm2370, 0.0, %v2350
    %v2411 = vsel %vm2367, 0.0, %v1982
    %v2412 = vsel %vm2368, 0.0, %v1984
    %v2413 = vsel %vm2369, 0.0, %v2354
    %v2414 = vsel %vm2370, 0.0, %v2356
    %v2415 = vsel %vm2367, 0.0, %v1986
    %v2416 = vsel %vm2368, 0.0, %v1988
    %v2417 = vsel %vm2369, 0.0, %v2358
    %v2418 = vsel %vm2370, 0.0, %v2360
    %v2419 = vmul.f32 %v1188, %v1188
    %v2420 = vmul.f32 %v1190, %v1190
    %v2421 = vmul.f32 %v1560, %v1560
    %v2422 = vmul.f32 %v1562, %v1562
    %v2423 = vmul.f32 %v1192, %v1192
    %v2424 = vmul.f32 %v1194, %v1194
    %v2425 = vmul.f32 %v1564, %v1564
    %v2426 = vmul.f32 %v1566, %v1566
    %v2427 = vmul.f32 %v1198, %v1198
    %v2428 = vmul.f32 %v1200, %v1200
    %v2429 = vmul.f32 %v1570, %v1570
    %v2430 = vmul.f32 %v1572, %v1572
    %v2431 = vmul.f32 %v1202, %v1202
    %v2432 = vmul.f32 %v1204, %v1204
    %v2433 = vmul.f32 %v1574, %v1574
    %v2434 = vmul.f32 %v1576, %v1576
    %v2435 = vmul.f32 %v1208, %v1208
    %v2436 = vmul.f32 %v1210, %v1210
    %v2437 = vmul.f32 %v1580, %v1580
    %v2438 = vmul.f32 %v1582, %v1582
    %v2439 = vmul.f32 %v1212, %v1212
    %v2440 = vmul.f32 %v1214, %v1214
    %v2441 = vmul.f32 %v1584, %v1584
    %v2442 = vmul.f32 %v1586, %v1586
    %v2443 = vmul.f32 %v1218, %v1218
    %v2444 = vmul.f32 %v1220, %v1220
    %v2445 = vmul.f32 %v1590, %v1590
    %v2446 = vmul.f32 %v1592, %v1592
    %v2447 = vmul.f32 %v1222, %v1222
    %v2448 = vmul.f32 %v1224, %v1224
    %v2449 = vmul.f32 %v1594, %v1594
    %v2450 = vmul.f32 %v1596, %v1596
    %v2451 = vmul.f32 %v1228, %v1228
    %v2452 = vmul.f32 %v1230, %v1230
    %v2453 = vmul.f32 %v1600, %v1600
    %v2454 = vmul.f32 %v1602, %v1602
    %v2455 = vmul.f32 %v1232, %v1232
    %v2456 = vmul.f32 %v1234, %v1234
    %v2457 = vmul.f32 %v1604, %v1604
    %v2458 = vmul.f32 %v1606, %v1606
    %v2459 = vmul.f32 %v1238, %v1238
    %v2460 = vmul.f32 %v1240, %v1240
    %v2461 = vmul.f32 %v1610, %v1610
    %v2462 = vmul.f32 %v1612, %v1612
    %v2463 = vmul.f32 %v1242, %v1242
    %v2464 = vmul.f32 %v1244, %v1244
    %v2465 = vmul.f32 %v1614, %v1614
    %v2466 = vmul.f32 %v1616, %v1616
    %v2467 = vmul.f32 %v2371, %v2371
    %v2468 = vmul.f32 %v2372, %v2372
    %v2469 = vmul.f32 %v2373, %v2373
    %v2470 = vmul.f32 %v2374, %v2374
    %v2471 = vmul.f32 %v2375, %v2375
    %v2472 = vmul.f32 %v2376, %v2376
    %v2473 = vmul.f32 %v2377, %v2377
    %v2474 = vmul.f32 %v2378, %v2378
    %v2475 = vmul.f32 %v2379, %v2379
    %v2476 = vmul.f32 %v2380, %v2380
    %v2477 = vmul.f32 %v2381, %v2381
    %v2478 = vmul.f32 %v2382, %v2382
    %v2479 = vmul.f32 %v2383, %v2383
    %v2480 = vmul.f32 %v2384, %v2384
    %v2481 = vmul.f32 %v2385, %v2385
    %v2482 = vmul.f32 %v2386, %v2386
    %v2483 = vmul.f32 %v2387, %v2387
    %v2484 = vmul.f32 %v2388, %v2388
    %v2485 = vmul.f32 %v2389, %v2389
    %v2486 = vmul.f32 %v2390, %v2390
    %v2487 = vmul.f32 %v2391, %v2391
    %v2488 = vmul.f32 %v2392, %v2392
    %v2489 = vmul.f32 %v2393, %v2393
    %v2490 = vmul.f32 %v2394, %v2394
    %v2491 = vmul.f32 %v2395, %v2395
    %v2492 = vmul.f32 %v2396, %v2396
    %v2493 = vmul.f32 %v2397, %v2397
    %v2494 = vmul.f32 %v2398, %v2398
    %v2495 = vmul.f32 %v2399, %v2399
    %v2496 = vmul.f32 %v2400, %v2400
    %v2497 = vmul.f32 %v2401, %v2401
    %v2498 = vmul.f32 %v2402, %v2402
    %v2499 = vmul.f32 %v2403, %v2403
    %v2500 = vmul.f32 %v2404, %v2404
    %v2501 = vmul.f32 %v2405, %v2405
    %v2502 = vmul.f32 %v2406, %v2406
    %v2503 = vmul.f32 %v2407, %v2407
    %v2504 = vmul.f32 %v2408, %v2408
    %v2505 = vmul.f32 %v2409, %v2409
    %v2506 = vmul.f32 %v2410, %v2410
    %v2507 = vmul.f32 %v2411, %v2411
    %v2508 = vmul.f32 %v2412, %v2412
    %v2509 = vmul.f32 %v2413, %v2413
    %v2510 = vmul.f32 %v2414, %v2414
    %v2511 = vmul.f32 %v2415, %v2415
    %v2512 = vmul.f32 %v2416, %v2416
    %v2513 = vmul.f32 %v2417, %v2417
    %v2514 = vmul.f32 %v2418, %v2418
    %v2515 = vadd.f32 %v2419, %v2467
    %v2516 = vadd.f32 %v2420, %v2468
    %v2517 = vadd.f32 %v2421, %v2469
    %v2518 = vadd.f32 %v2422, %v2470
    %v2519 = vadd.f32 %v2423, %v2471
    %v2520 = vadd.f32 %v2424, %v2472
    %v2521 = vadd.f32 %v2425, %v2473
    %v2522 = vadd.f32 %v2426, %v2474
    %v2523 = vadd.f32 %v2427, %v2475
    %v2524 = vadd.f32 %v2428, %v2476
    %v2525 = vadd.f32 %v2429, %v2477
    %v2526 = vadd.f32 %v2430, %v2478
    %v2527 = vadd.f32 %v2431, %v2479
    %v2528 = vadd.f32 %v2432, %v2480
    %v2529 = vadd.f32 %v2433, %v2481
    %v2530 = vadd.f32 %v2434, %v2482
    %v2531 = vadd.f32 %v2435, %v2483
    %v2532 = vadd.f32 %v2436, %v2484
    %v2533 = vadd.f32 %v2437, %v2485
    %v2534 = vadd.f32 %v2438, %v2486
    %v2535 = vadd.f32 %v2439, %v2487
    %v2536 = vadd.f32 %v2440, %v2488
    %v2537 = vadd.f32 %v2441, %v2489
    %v2538 = vadd.f32 %v2442, %v2490
    %v2539 = vadd.f32 %v2443, %v2491
    %v2540 = vadd.f32 %v2444, %v2492
    %v2541 = vadd.f32 %v2445, %v2493
    %v2542 = vadd.f32 %v2446, %v2494
    %v2543 = vadd.f32 %v2447, %v2495
    %v2544 = vadd.f32 %v2448, %v2496
    %v2545 = vadd.f32 %v2449, %v2497
    %v2546 = vadd.f32 %v2450, %v2498
    %v2547 = vadd.f32 %v2451, %v2499
    %v2548 = vadd.f32 %v2452, %v2500
    %v2549 = vadd.f32 %v2453, %v2501
    %v2550 = vadd.f32 %v2454, %v2502
    %v2551 = vadd.f32 %v2455, %v2503
    %v2552 = vadd.f32 %v2456, %v2504
    %v2553 = vadd.f32 %v2457, %v2505
    %v2554 = vadd.f32 %v2458, %v2506
    %v2555 = vadd.f32 %v2459, %v2507
    %v2556 = vadd.f32 %v2460, %v2508
    %v2557 = vadd.f32 %v2461, %v2509
    %v2558 = vadd.f32 %v2462, %v2510
    %v2559 = vadd.f32 %v2463, %v2511
    %v2560 = vadd.f32 %v2464, %v2512
    %v2561 = vadd.f32 %v2465, %v2513
    %v2562 = vadd.f32 %v2466, %v2514
    %v2563 = vmax.f32 %v2515, 1e-07
    %v2564 = vmax.f32 %v2516, 1e-07
    %v2565 = vmax.f32 %v2517, 1e-07
    %v2566 = vmax.f32 %v2518, 1e-07
    %v2567 = vmax.f32 %v2519, 1e-07
    %v2568 = vmax.f32 %v2520, 1e-07
    %v2569 = vmax.f32 %v2521, 1e-07
    %v2570 = vmax.f32 %v2522, 1e-07
    %v2571 = vmax.f32 %v2523, 1e-07
    %v2572 = vmax.f32 %v2524, 1e-07
    %v2573 = vmax.f32 %v2525, 1e-07
    %v2574 = vmax.f32 %v2526, 1e-07
    %v2575 = vmax.f32 %v2527, 1e-07
    %v2576 = vmax.f32 %v2528, 1e-07
    %v2577 = vmax.f32 %v2529, 1e-07
    %v2578 = vmax.f32 %v2530, 1e-07
    %v2579 = vmax.f32 %v2531, 1e-07
    %v2580 = vmax.f32 %v2532, 1e-07
    %v2581 = vmax.f32 %v2533, 1e-07
    %v2582 = vmax.f32 %v2534, 1e-07
    %v2583 = vmax.f32 %v2535, 1e-07
    %v2584 = vmax.f32 %v2536, 1e-07
    %v2585 = vmax.f32 %v2537, 1e-07
    %v2586 = vmax.f32 %v2538, 1e-07
    %v2587 = vmax.f32 %v2539, 1e-07
    %v2588 = vmax.f32 %v2540, 1e-07
    %v2589 = vmax.f32 %v2541, 1e-07
    %v2590 = vmax.f32 %v2542, 1e-07
    %v2591 = vmax.f32 %v2543, 1e-07
    %v2592 = vmax.f32 %v2544, 1e-07
    %v2593 = vmax.f32 %v2545, 1e-07
    %v2594 = vmax.f32 %v2546, 1e-07
    %v2595 = vmax.f32 %v2547, 1e-07
    %v2596 = vmax.f32 %v2548, 1e-07
    %v2597 = vmax.f32 %v2549, 1e-07
    %v2598 = vmax.f32 %v2550, 1e-07
    %v2599 = vmax.f32 %v2551, 1e-07
    %v2600 = vmax.f32 %v2552, 1e-07
    %v2601 = vmax.f32 %v2553, 1e-07
    %v2602 = vmax.f32 %v2554, 1e-07
    %v2603 = vmax.f32 %v2555, 1e-07
    %v2604 = vmax.f32 %v2556, 1e-07
    %v2605 = vmax.f32 %v2557, 1e-07
    %v2606 = vmax.f32 %v2558, 1e-07
    %v2607 = vmax.f32 %v2559, 1e-07
    %v2608 = vmax.f32 %v2560, 1e-07
    %v2609 = vmax.f32 %v2561, 1e-07
    %v2610 = vmax.f32 %v2562, 1e-07
    %v2611 = vrsqrt.pop %v2563
    %v2612 = vmul.f32 %v2563, %v2611
    %vm2613 = vcmp.eq.f32.partialorder %v2563, inf
    %v2614 = vsel %vm2613, %v2563, %v2612
    %vm2615 = vcmp.eq.f32.partialorder %v2563, 0.0
    %v2616 = vand.u32 %v2563, 2147483648
    %v2617 = vsel %vm2615, %v2616, %v2614
    %v2618 = vrsqrt.pop %v2564
    %v2619 = vmul.f32 %v2564, %v2618
    %vm2620 = vcmp.eq.f32.partialorder %v2564, inf
    %v2621 = vsel %vm2620, %v2564, %v2619
    %vm2622 = vcmp.eq.f32.partialorder %v2564, 0.0
    %v2623 = vand.u32 %v2564, 2147483648
    %v2624 = vsel %vm2622, %v2623, %v2621
    %v2625 = vrsqrt.pop %v2565
    %v2626 = vmul.f32 %v2565, %v2625
    %vm2627 = vcmp.eq.f32.partialorder %v2565, inf
    %v2628 = vsel %vm2627, %v2565, %v2626
    %vm2629 = vcmp.eq.f32.partialorder %v2565, 0.0
    %v2630 = vand.u32 %v2565, 2147483648
    %v2631 = vsel %vm2629, %v2630, %v2628
    %v2632 = vrsqrt.pop %v2566
    %v2633 = vmul.f32 %v2566, %v2632
    %vm2634 = vcmp.eq.f32.partialorder %v2566, inf
    %v2635 = vsel %vm2634, %v2566, %v2633
    %vm2636 = vcmp.eq.f32.partialorder %v2566, 0.0
    %v2637 = vand.u32 %v2566, 2147483648
    %v2638 = vsel %vm2636, %v2637, %v2635
    %v2639 = vrsqrt.pop %v2567
    %v2640 = vmul.f32 %v2567, %v2639
    %vm2641 = vcmp.eq.f32.partialorder %v2567, inf
    %v2642 = vsel %vm2641, %v2567, %v2640
    %vm2643 = vcmp.eq.f32.partialorder %v2567, 0.0
    %v2644 = vand.u32 %v2567, 2147483648
    %v2645 = vsel %vm2643, %v2644, %v2642
    %v2646 = vrsqrt.pop %v2568
    %v2647 = vmul.f32 %v2568, %v2646
    %vm2648 = vcmp.eq.f32.partialorder %v2568, inf
    %v2649 = vsel %vm2648, %v2568, %v2647
    %vm2650 = vcmp.eq.f32.partialorder %v2568, 0.0
    %v2651 = vand.u32 %v2568, 2147483648
    %v2652 = vsel %vm2650, %v2651, %v2649
    %v2653 = vrsqrt.pop %v2569
    %v2654 = vmul.f32 %v2569, %v2653
    %vm2655 = vcmp.eq.f32.partialorder %v2569, inf
    %v2656 = vsel %vm2655, %v2569, %v2654
    %vm2657 = vcmp.eq.f32.partialorder %v2569, 0.0
    %v2658 = vand.u32 %v2569, 2147483648
    %v2659 = vsel %vm2657, %v2658, %v2656
    %v2660 = vrsqrt.pop %v2570
    %v2661 = vmul.f32 %v2570, %v2660
    %vm2662 = vcmp.eq.f32.partialorder %v2570, inf
    %v2663 = vsel %vm2662, %v2570, %v2661
    %vm2664 = vcmp.eq.f32.partialorder %v2570, 0.0
    %v2665 = vand.u32 %v2570, 2147483648
    %v2666 = vsel %vm2664, %v2665, %v2663
    %v2667 = vrsqrt.pop %v2571
    %v2668 = vmul.f32 %v2571, %v2667
    %vm2669 = vcmp.eq.f32.partialorder %v2571, inf
    %v2670 = vsel %vm2669, %v2571, %v2668
    %vm2671 = vcmp.eq.f32.partialorder %v2571, 0.0
    %v2672 = vand.u32 %v2571, 2147483648
    %v2673 = vsel %vm2671, %v2672, %v2670
    %v2674 = vrsqrt.pop %v2572
    %v2675 = vmul.f32 %v2572, %v2674
    %vm2676 = vcmp.eq.f32.partialorder %v2572, inf
    %v2677 = vsel %vm2676, %v2572, %v2675
    %vm2678 = vcmp.eq.f32.partialorder %v2572, 0.0
    %v2679 = vand.u32 %v2572, 2147483648
    %v2680 = vsel %vm2678, %v2679, %v2677
    %v2681 = vrsqrt.pop %v2573
    %v2682 = vmul.f32 %v2573, %v2681
    %vm2683 = vcmp.eq.f32.partialorder %v2573, inf
    %v2684 = vsel %vm2683, %v2573, %v2682
    %vm2685 = vcmp.eq.f32.partialorder %v2573, 0.0
    %v2686 = vand.u32 %v2573, 2147483648
    %v2687 = vsel %vm2685, %v2686, %v2684
    %v2688 = vrsqrt.pop %v2574
    %v2689 = vmul.f32 %v2574, %v2688
    %vm2690 = vcmp.eq.f32.partialorder %v2574, inf
    %v2691 = vsel %vm2690, %v2574, %v2689
    %vm2692 = vcmp.eq.f32.partialorder %v2574, 0.0
    %v2693 = vand.u32 %v2574, 2147483648
    %v2694 = vsel %vm2692, %v2693, %v2691
    %v2695 = vrsqrt.pop %v2575
    %v2696 = vmul.f32 %v2575, %v2695
    %vm2697 = vcmp.eq.f32.partialorder %v2575, inf
    %v2698 = vsel %vm2697, %v2575, %v2696
    %vm2699 = vcmp.eq.f32.partialorder %v2575, 0.0
    %v2700 = vand.u32 %v2575, 2147483648
    %v2701 = vsel %vm2699, %v2700, %v2698
    %v2702 = vrsqrt.pop %v2576
    %v2703 = vmul.f32 %v2576, %v2702
    %vm2704 = vcmp.eq.f32.partialorder %v2576, inf
    %v2705 = vsel %vm2704, %v2576, %v2703
    %vm2706 = vcmp.eq.f32.partialorder %v2576, 0.0
    %v2707 = vand.u32 %v2576, 2147483648
    %v2708 = vsel %vm2706, %v2707, %v2705
    %v2709 = vrsqrt.pop %v2577
    %v2710 = vmul.f32 %v2577, %v2709
    %vm2711 = vcmp.eq.f32.partialorder %v2577, inf
    %v2712 = vsel %vm2711, %v2577, %v2710
    %vm2713 = vcmp.eq.f32.partialorder %v2577, 0.0
    %v2714 = vand.u32 %v2577, 2147483648
    %v2715 = vsel %vm2713, %v2714, %v2712
    %v2716 = vrsqrt.pop %v2578
    %v2717 = vmul.f32 %v2578, %v2716
    %vm2718 = vcmp.eq.f32.partialorder %v2578, inf
    %v2719 = vsel %vm2718, %v2578, %v2717
    %vm2720 = vcmp.eq.f32.partialorder %v2578, 0.0
    %v2721 = vand.u32 %v2578, 2147483648
    %v2722 = vsel %vm2720, %v2721, %v2719
    %v2723 = vrsqrt.pop %v2579
    %v2724 = vmul.f32 %v2579, %v2723
    %vm2725 = vcmp.eq.f32.partialorder %v2579, inf
    %v2726 = vsel %vm2725, %v2579, %v2724
    %vm2727 = vcmp.eq.f32.partialorder %v2579, 0.0
    %v2728 = vand.u32 %v2579, 2147483648
    %v2729 = vsel %vm2727, %v2728, %v2726
    %v2730 = vrsqrt.pop %v2580
    %v2731 = vmul.f32 %v2580, %v2730
    %vm2732 = vcmp.eq.f32.partialorder %v2580, inf
    %v2733 = vsel %vm2732, %v2580, %v2731
    %vm2734 = vcmp.eq.f32.partialorder %v2580, 0.0
    %v2735 = vand.u32 %v2580, 2147483648
    %v2736 = vsel %vm2734, %v2735, %v2733
    %v2737 = vrsqrt.pop %v2581
    %v2738 = vmul.f32 %v2581, %v2737
    %vm2739 = vcmp.eq.f32.partialorder %v2581, inf
    %v2740 = vsel %vm2739, %v2581, %v2738
    %vm2741 = vcmp.eq.f32.partialorder %v2581, 0.0
    %v2742 = vand.u32 %v2581, 2147483648
    %v2743 = vsel %vm2741, %v2742, %v2740
    %v2744 = vrsqrt.pop %v2582
    %v2745 = vmul.f32 %v2582, %v2744
    %vm2746 = vcmp.eq.f32.partialorder %v2582, inf
    %v2747 = vsel %vm2746, %v2582, %v2745
    %vm2748 = vcmp.eq.f32.partialorder %v2582, 0.0
    %v2749 = vand.u32 %v2582, 2147483648
    %v2750 = vsel %vm2748, %v2749, %v2747
    %v2751 = vrsqrt.pop %v2583
    %v2752 = vmul.f32 %v2583, %v2751
    %vm2753 = vcmp.eq.f32.partialorder %v2583, inf
    %v2754 = vsel %vm2753, %v2583, %v2752
    %vm2755 = vcmp.eq.f32.partialorder %v2583, 0.0
    %v2756 = vand.u32 %v2583, 2147483648
    %v2757 = vsel %vm2755, %v2756, %v2754
    %v2758 = vrsqrt.pop %v2584
    %v2759 = vmul.f32 %v2584, %v2758
    %vm2760 = vcmp.eq.f32.partialorder %v2584, inf
    %v2761 = vsel %vm2760, %v2584, %v2759
    %vm2762 = vcmp.eq.f32.partialorder %v2584, 0.0
    %v2763 = vand.u32 %v2584, 2147483648
    %v2764 = vsel %vm2762, %v2763, %v2761
    %v2765 = vrsqrt.pop %v2585
    %v2766 = vmul.f32 %v2585, %v2765
    %vm2767 = vcmp.eq.f32.partialorder %v2585, inf
    %v2768 = vsel %vm2767, %v2585, %v2766
    %vm2769 = vcmp.eq.f32.partialorder %v2585, 0.0
    %v2770 = vand.u32 %v2585, 2147483648
    %v2771 = vsel %vm2769, %v2770, %v2768
    %v2772 = vrsqrt.pop %v2586
    %v2773 = vmul.f32 %v2586, %v2772
    %vm2774 = vcmp.eq.f32.partialorder %v2586, inf
    %v2775 = vsel %vm2774, %v2586, %v2773
    %vm2776 = vcmp.eq.f32.partialorder %v2586, 0.0
    %v2777 = vand.u32 %v2586, 2147483648
    %v2778 = vsel %vm2776, %v2777, %v2775
    %v2779 = vrsqrt.pop %v2587
    %v2780 = vmul.f32 %v2587, %v2779
    %vm2781 = vcmp.eq.f32.partialorder %v2587, inf
    %v2782 = vsel %vm2781, %v2587, %v2780
    %vm2783 = vcmp.eq.f32.partialorder %v2587, 0.0
    %v2784 = vand.u32 %v2587, 2147483648
    %v2785 = vsel %vm2783, %v2784, %v2782
    %v2786 = vrsqrt.pop %v2588
    %v2787 = vmul.f32 %v2588, %v2786
    %vm2788 = vcmp.eq.f32.partialorder %v2588, inf
    %v2789 = vsel %vm2788, %v2588, %v2787
    %vm2790 = vcmp.eq.f32.partialorder %v2588, 0.0
    %v2791 = vand.u32 %v2588, 2147483648
    %v2792 = vsel %vm2790, %v2791, %v2789
    %v2793 = vrsqrt.pop %v2589
    %v2794 = vmul.f32 %v2589, %v2793
    %vm2795 = vcmp.eq.f32.partialorder %v2589, inf
    %v2796 = vsel %vm2795, %v2589, %v2794
    %vm2797 = vcmp.eq.f32.partialorder %v2589, 0.0
    %v2798 = vand.u32 %v2589, 2147483648
    %v2799 = vsel %vm2797, %v2798, %v2796
    %v2800 = vrsqrt.pop %v2590
    %v2801 = vmul.f32 %v2590, %v2800
    %vm2802 = vcmp.eq.f32.partialorder %v2590, inf
    %v2803 = vsel %vm2802, %v2590, %v2801
    %vm2804 = vcmp.eq.f32.partialorder %v2590, 0.0
    %v2805 = vand.u32 %v2590, 2147483648
    %v2806 = vsel %vm2804, %v2805, %v2803
    %v2807 = vrsqrt.pop %v2591
    %v2808 = vmul.f32 %v2591, %v2807
    %vm2809 = vcmp.eq.f32.partialorder %v2591, inf
    %v2810 = vsel %vm2809, %v2591, %v2808
    %vm2811 = vcmp.eq.f32.partialorder %v2591, 0.0
    %v2812 = vand.u32 %v2591, 2147483648
    %v2813 = vsel %vm2811, %v2812, %v2810
    %v2814 = vrsqrt.pop %v2592
    %v2815 = vmul.f32 %v2592, %v2814
    %vm2816 = vcmp.eq.f32.partialorder %v2592, inf
    %v2817 = vsel %vm2816, %v2592, %v2815
    %vm2818 = vcmp.eq.f32.partialorder %v2592, 0.0
    %v2819 = vand.u32 %v2592, 2147483648
    %v2820 = vsel %vm2818, %v2819, %v2817
    %v2821 = vrsqrt.pop %v2593
    %v2822 = vmul.f32 %v2593, %v2821
    %vm2823 = vcmp.eq.f32.partialorder %v2593, inf
    %v2824 = vsel %vm2823, %v2593, %v2822
    %vm2825 = vcmp.eq.f32.partialorder %v2593, 0.0
    %v2826 = vand.u32 %v2593, 2147483648
    %v2827 = vsel %vm2825, %v2826, %v2824
    %v2828 = vrsqrt.pop %v2594
    %v2829 = vmul.f32 %v2594, %v2828
    %vm2830 = vcmp.eq.f32.partialorder %v2594, inf
    %v2831 = vsel %vm2830, %v2594, %v2829
    %vm2832 = vcmp.eq.f32.partialorder %v2594, 0.0
    %v2833 = vand.u32 %v2594, 2147483648
    %v2834 = vsel %vm2832, %v2833, %v2831
    %v2835 = vrsqrt.pop %v2595
    %v2836 = vmul.f32 %v2595, %v2835
    %vm2837 = vcmp.eq.f32.partialorder %v2595, inf
    %v2838 = vsel %vm2837, %v2595, %v2836
    %vm2839 = vcmp.eq.f32.partialorder %v2595, 0.0
    %v2840 = vand.u32 %v2595, 2147483648
    %v2841 = vsel %vm2839, %v2840, %v2838
    %v2842 = vrsqrt.pop %v2596
    %v2843 = vmul.f32 %v2596, %v2842
    %vm2844 = vcmp.eq.f32.partialorder %v2596, inf
    %v2845 = vsel %vm2844, %v2596, %v2843
    %vm2846 = vcmp.eq.f32.partialorder %v2596, 0.0
    %v2847 = vand.u32 %v2596, 2147483648
    %v2848 = vsel %vm2846, %v2847, %v2845
    %v2849 = vrsqrt.pop %v2597
    %v2850 = vmul.f32 %v2597, %v2849
    %vm2851 = vcmp.eq.f32.partialorder %v2597, inf
    %v2852 = vsel %vm2851, %v2597, %v2850
    %vm2853 = vcmp.eq.f32.partialorder %v2597, 0.0
    %v2854 = vand.u32 %v2597, 2147483648
    %v2855 = vsel %vm2853, %v2854, %v2852
    %v2856 = vrsqrt.pop %v2598
    %v2857 = vmul.f32 %v2598, %v2856
    %vm2858 = vcmp.eq.f32.partialorder %v2598, inf
    %v2859 = vsel %vm2858, %v2598, %v2857
    %vm2860 = vcmp.eq.f32.partialorder %v2598, 0.0
    %v2861 = vand.u32 %v2598, 2147483648
    %v2862 = vsel %vm2860, %v2861, %v2859
    %v2863 = vrsqrt.pop %v2599
    %v2864 = vmul.f32 %v2599, %v2863
    %vm2865 = vcmp.eq.f32.partialorder %v2599, inf
    %v2866 = vsel %vm2865, %v2599, %v2864
    %vm2867 = vcmp.eq.f32.partialorder %v2599, 0.0
    %v2868 = vand.u32 %v2599, 2147483648
    %v2869 = vsel %vm2867, %v2868, %v2866
    %v2870 = vrsqrt.pop %v2600
    %v2871 = vmul.f32 %v2600, %v2870
    %vm2872 = vcmp.eq.f32.partialorder %v2600, inf
    %v2873 = vsel %vm2872, %v2600, %v2871
    %vm2874 = vcmp.eq.f32.partialorder %v2600, 0.0
    %v2875 = vand.u32 %v2600, 2147483648
    %v2876 = vsel %vm2874, %v2875, %v2873
    %v2877 = vrsqrt.pop %v2601
    %v2878 = vmul.f32 %v2601, %v2877
    %vm2879 = vcmp.eq.f32.partialorder %v2601, inf
    %v2880 = vsel %vm2879, %v2601, %v2878
    %vm2881 = vcmp.eq.f32.partialorder %v2601, 0.0
    %v2882 = vand.u32 %v2601, 2147483648
    %v2883 = vsel %vm2881, %v2882, %v2880
    %v2884 = vrsqrt.pop %v2602
    %v2885 = vmul.f32 %v2602, %v2884
    %vm2886 = vcmp.eq.f32.partialorder %v2602, inf
    %v2887 = vsel %vm2886, %v2602, %v2885
    %vm2888 = vcmp.eq.f32.partialorder %v2602, 0.0
    %v2889 = vand.u32 %v2602, 2147483648
    %v2890 = vsel %vm2888, %v2889, %v2887
    %v2891 = vrsqrt.pop %v2603
    %v2892 = vmul.f32 %v2603, %v2891
    %vm2893 = vcmp.eq.f32.partialorder %v2603, inf
    %v2894 = vsel %vm2893, %v2603, %v2892
    %vm2895 = vcmp.eq.f32.partialorder %v2603, 0.0
    %v2896 = vand.u32 %v2603, 2147483648
    %v2897 = vsel %vm2895, %v2896, %v2894
    %v2898 = vrsqrt.pop %v2604
    %v2899 = vmul.f32 %v2604, %v2898
    %vm2900 = vcmp.eq.f32.partialorder %v2604, inf
    %v2901 = vsel %vm2900, %v2604, %v2899
    %vm2902 = vcmp.eq.f32.partialorder %v2604, 0.0
    %v2903 = vand.u32 %v2604, 2147483648
    %v2904 = vsel %vm2902, %v2903, %v2901
    %v2905 = vrsqrt.pop %v2605
    %v2906 = vmul.f32 %v2605, %v2905
    %vm2907 = vcmp.eq.f32.partialorder %v2605, inf
    %v2908 = vsel %vm2907, %v2605, %v2906
    %vm2909 = vcmp.eq.f32.partialorder %v2605, 0.0
    %v2910 = vand.u32 %v2605, 2147483648
    %v2911 = vsel %vm2909, %v2910, %v2908
    %v2912 = vrsqrt.pop %v2606
    %v2913 = vmul.f32 %v2606, %v2912
    %vm2914 = vcmp.eq.f32.partialorder %v2606, inf
    %v2915 = vsel %vm2914, %v2606, %v2913
    %vm2916 = vcmp.eq.f32.partialorder %v2606, 0.0
    %v2917 = vand.u32 %v2606, 2147483648
    %v2918 = vsel %vm2916, %v2917, %v2915
    %v2919 = vrsqrt.pop %v2607
    %v2920 = vmul.f32 %v2607, %v2919
    %vm2921 = vcmp.eq.f32.partialorder %v2607, inf
    %v2922 = vsel %vm2921, %v2607, %v2920
    %vm2923 = vcmp.eq.f32.partialorder %v2607, 0.0
    %v2924 = vand.u32 %v2607, 2147483648
    %v2925 = vsel %vm2923, %v2924, %v2922
    %v2926 = vrsqrt.pop %v2608
    %v2927 = vmul.f32 %v2608, %v2926
    %vm2928 = vcmp.eq.f32.partialorder %v2608, inf
    %v2929 = vsel %vm2928, %v2608, %v2927
    %vm2930 = vcmp.eq.f32.partialorder %v2608, 0.0
    %v2931 = vand.u32 %v2608, 2147483648
    %v2932 = vsel %vm2930, %v2931, %v2929
    %v2933 = vrsqrt.pop %v2609
    %v2934 = vmul.f32 %v2609, %v2933
    %vm2935 = vcmp.eq.f32.partialorder %v2609, inf
    %v2936 = vsel %vm2935, %v2609, %v2934
    %vm2937 = vcmp.eq.f32.partialorder %v2609, 0.0
    %v2938 = vand.u32 %v2609, 2147483648
    %v2939 = vsel %vm2937, %v2938, %v2936
    %v2940 = vrsqrt.pop %v2610
    %v2941 = vmul.f32 %v2610, %v2940
    %vm2942 = vcmp.eq.f32.partialorder %v2610, inf
    %v2943 = vsel %vm2942, %v2610, %v2941
    %vm2944 = vcmp.eq.f32.partialorder %v2610, 0.0
    %v2945 = vand.u32 %v2610, 2147483648
    %v2946 = vsel %vm2944, %v2945, %v2943
    %v2947 = vmul.f32 %v1932, %v1932
    %v2948 = vmul.f32 %v1936, %v1936
    %v2949 = vmul.f32 %v1942, %v1942
    %v2950 = vmul.f32 %v1946, %v1946
    %v2951 = vmul.f32 %v1952, %v1952
    %v2952 = vmul.f32 %v1956, %v1956
    %v2953 = vmul.f32 %v1962, %v1962
    %v2954 = vmul.f32 %v1966, %v1966
    %v2955 = vmul.f32 %v1972, %v1972
    %v2956 = vmul.f32 %v1976, %v1976
    %v2957 = vmul.f32 %v1982, %v1982
    %v2958 = vmul.f32 %v1986, %v1986
    %v2959 = vmax.f32 %v2947, 1e-07
    %v2960 = vmax.f32 %v2948, 1e-07
    %v2961 = vmax.f32 %v2949, 1e-07
    %v2962 = vmax.f32 %v2950, 1e-07
    %v2963 = vmax.f32 %v2951, 1e-07
    %v2964 = vmax.f32 %v2952, 1e-07
    %v2965 = vmax.f32 %v2953, 1e-07
    %v2966 = vmax.f32 %v2954, 1e-07
    %v2967 = vmax.f32 %v2955, 1e-07
    %v2968 = vmax.f32 %v2956, 1e-07
    %v2969 = vmax.f32 %v2957, 1e-07
    %v2970 = vmax.f32 %v2958, 1e-07
    %v2971 = vrsqrt.pop %v2959
    %v2972 = vmul.f32 %v2959, %v2971
    %vm2973 = vcmp.eq.f32.partialorder %v2959, inf
    %v2974 = vsel %vm2973, %v2959, %v2972
    %vm2975 = vcmp.eq.f32.partialorder %v2959, 0.0
    %v2976 = vand.u32 %v2959, 2147483648
    %v2977 = vsel %vm2975, %v2976, %v2974
    %v2978 = vrsqrt.pop %v2960
    %v2979 = vmul.f32 %v2960, %v2978
    %vm2980 = vcmp.eq.f32.partialorder %v2960, inf
    %v2981 = vsel %vm2980, %v2960, %v2979
    %vm2982 = vcmp.eq.f32.partialorder %v2960, 0.0
    %v2983 = vand.u32 %v2960, 2147483648
    %v2984 = vsel %vm2982, %v2983, %v2981
    %v2985 = vrsqrt.pop %v2961
    %v2986 = vmul.f32 %v2961, %v2985
    %vm2987 = vcmp.eq.f32.partialorder %v2961, inf
    %v2988 = vsel %vm2987, %v2961, %v2986
    %vm2989 = vcmp.eq.f32.partialorder %v2961, 0.0
    %v2990 = vand.u32 %v2961, 2147483648
    %v2991 = vsel %vm2989, %v2990, %v2988
    %v2992 = vrsqrt.pop %v2962
    %v2993 = vmul.f32 %v2962, %v2992
    %vm2994 = vcmp.eq.f32.partialorder %v2962, inf
    %v2995 = vsel %vm2994, %v2962, %v2993
    %vm2996 = vcmp.eq.f32.partialorder %v2962, 0.0
    %v2997 = vand.u32 %v2962, 2147483648
    %v2998 = vsel %vm2996, %v2997, %v2995
    %v2999 = vrsqrt.pop %v2963
    %v3000 = vmul.f32 %v2963, %v2999
    %vm3001 = vcmp.eq.f32.partialorder %v2963, inf
    %v3002 = vsel %vm3001, %v2963, %v3000
    %vm3003 = vcmp.eq.f32.partialorder %v2963, 0.0
    %v3004 = vand.u32 %v2963, 2147483648
    %v3005 = vsel %vm3003, %v3004, %v3002
    %v3006 = vrsqrt.pop %v2964
    %v3007 = vmul.f32 %v2964, %v3006
    %vm3008 = vcmp.eq.f32.partialorder %v2964, inf
    %v3009 = vsel %vm3008, %v2964, %v3007
    %vm3010 = vcmp.eq.f32.partialorder %v2964, 0.0
    %v3011 = vand.u32 %v2964, 2147483648
    %v3012 = vsel %vm3010, %v3011, %v3009
    %v3013 = vrsqrt.pop %v2965
    %v3014 = vmul.f32 %v2965, %v3013
    %vm3015 = vcmp.eq.f32.partialorder %v2965, inf
    %v3016 = vsel %vm3015, %v2965, %v3014
    %vm3017 = vcmp.eq.f32.partialorder %v2965, 0.0
    %v3018 = vand.u32 %v2965, 2147483648
    %v3019 = vsel %vm3017, %v3018, %v3016
    %v3020 = vrsqrt.pop %v2966
    %v3021 = vmul.f32 %v2966, %v3020
    %vm3022 = vcmp.eq.f32.partialorder %v2966, inf
    %v3023 = vsel %vm3022, %v2966, %v3021
    %vm3024 = vcmp.eq.f32.partialorder %v2966, 0.0
    %v3025 = vand.u32 %v2966, 2147483648
    %v3026 = vsel %vm3024, %v3025, %v3023
    %v3027 = vrsqrt.pop %v2967
    %v3028 = vmul.f32 %v2967, %v3027
    %vm3029 = vcmp.eq.f32.partialorder %v2967, inf
    %v3030 = vsel %vm3029, %v2967, %v3028
    %vm3031 = vcmp.eq.f32.partialorder %v2967, 0.0
    %v3032 = vand.u32 %v2967, 2147483648
    %v3033 = vsel %vm3031, %v3032, %v3030
    %v3034 = vrsqrt.pop %v2968
    %v3035 = vmul.f32 %v2968, %v3034
    %vm3036 = vcmp.eq.f32.partialorder %v2968, inf
    %v3037 = vsel %vm3036, %v2968, %v3035
    %vm3038 = vcmp.eq.f32.partialorder %v2968, 0.0
    %v3039 = vand.u32 %v2968, 2147483648
    %v3040 = vsel %vm3038, %v3039, %v3037
    %v3041 = vrsqrt.pop %v2969
    %v3042 = vmul.f32 %v2969, %v3041
    %vm3043 = vcmp.eq.f32.partialorder %v2969, inf
    %v3044 = vsel %vm3043, %v2969, %v3042
    %vm3045 = vcmp.eq.f32.partialorder %v2969, 0.0
    %v3046 = vand.u32 %v2969, 2147483648
    %v3047 = vsel %vm3045, %v3046, %v3044
    %v3048 = vrsqrt.pop %v2970
    %v3049 = vmul.f32 %v2970, %v3048
    %vm3050 = vcmp.eq.f32.partialorder %v2970, inf
    %v3051 = vsel %vm3050, %v2970, %v3049
    %vm3052 = vcmp.eq.f32.partialorder %v2970, 0.0
    %v3053 = vand.u32 %v2970, 2147483648
    %v3054 = vsel %vm3052, %v3053, %v3051
    %v3055 = vsub.f32 %v2785, %v2617
    %v3056 = vsub.f32 %v2792, %v2624
    %v3057 = vsub.f32 %v2799, %v2631
    %v3058 = vsub.f32 %v2806, %v2638
    %v3059 = vsub.f32 %v2813, %v2645
    %v3060 = vsub.f32 %v2820, %v2652
    %v3061 = vsub.f32 %v2827, %v2659
    %v3062 = vsub.f32 %v2834, %v2666
    %v3063 = vsub.f32 %v2841, %v2673
    %v3064 = vsub.f32 %v2848, %v2680
    %v3065 = vsub.f32 %v2855, %v2687
    %v3066 = vsub.f32 %v2862, %v2694
    %v3067 = vsub.f32 %v2869, %v2701
    %v3068 = vsub.f32 %v2876, %v2708
    %v3069 = vsub.f32 %v2883, %v2715
    %v3070 = vsub.f32 %v2890, %v2722
    %v3071 = vsub.f32 %v2897, %v2729
    %v3072 = vsub.f32 %v2904, %v2736
    %v3073 = vsub.f32 %v2911, %v2743
    %v3074 = vsub.f32 %v2918, %v2750
    %v3075 = vsub.f32 %v2925, %v2757
    %v3076 = vsub.f32 %v2932, %v2764
    %v3077 = vsub.f32 %v2939, %v2771
    %v3078 = vsub.f32 %v2946, %v2778
    %v3079 = vsub.f32 %v3019, %v2977
    %v3080 = vsub.f32 %v3026, %v2984
    %v3081 = vsub.f32 %v3033, %v2991
    %v3082 = vsub.f32 %v3040, %v2998
    %v3083 = vsub.f32 %v3047, %v3005
    %v3084 = vsub.f32 %v3054, %v3012
    %v3085 = vmul.f32 %v3055, %v3055
    %v3086 = vmul.f32 %v3056, %v3056
    %v3087 = vmul.f32 %v3057, %v3057
    %v3088 = vmul.f32 %v3058, %v3058
    %v3089 = vmul.f32 %v3059, %v3059
    %v3090 = vmul.f32 %v3060, %v3060
    %v3091 = vmul.f32 %v3061, %v3061
    %v3092 = vmul.f32 %v3062, %v3062
    %v3093 = vmul.f32 %v3063, %v3063
    %v3094 = vmul.f32 %v3064, %v3064
    %v3095 = vmul.f32 %v3065, %v3065
    %v3096 = vmul.f32 %v3066, %v3066
    %v3097 = vmul.f32 %v3067, %v3067
    %v3098 = vmul.f32 %v3068, %v3068
    %v3099 = vmul.f32 %v3069, %v3069
    %v3100 = vmul.f32 %v3070, %v3070
    %v3101 = vmul.f32 %v3071, %v3071
    %v3102 = vmul.f32 %v3072, %v3072
    %v3103 = vmul.f32 %v3073, %v3073
    %v3104 = vmul.f32 %v3074, %v3074
    %v3105 = vmul.f32 %v3075, %v3075
    %v3106 = vmul.f32 %v3076, %v3076
    %v3107 = vmul.f32 %v3077, %v3077
    %v3108 = vmul.f32 %v3078, %v3078
    %v3109 = vadd.f32 %v3085, %v3086
    %v3110 = vadd.f32 %v3109, %v3087
    %v3111 = vadd.f32 %v3110, %v3088
    %v3112 = vadd.f32 %v3111, %v3089
    %v3113 = vadd.f32 %v3112, %v3090
    %v3114 = vadd.f32 %v3113, %v3091
    %v3115 = vadd.f32 %v3114, %v3092
    %v3116 = vadd.f32 %v3115, %v3093
    %v3117 = vadd.f32 %v3116, %v3094
    %v3118 = vadd.f32 %v3117, %v3095
    %v3119 = vadd.f32 %v3118, %v3096
    %v3120 = vadd.f32 %v3119, %v3097
    %v3121 = vadd.f32 %v3120, %v3098
    %v3122 = vadd.f32 %v3121, %v3099
    %v3123 = vadd.f32 %v3122, %v3100
    %v3124 = vadd.f32 %v3123, %v3101
    %v3125 = vadd.f32 %v3124, %v3102
    %v3126 = vadd.f32 %v3125, %v3103
    %v3127 = vadd.f32 %v3126, %v3104
    %v3128 = vadd.f32 %v3127, %v3105
    %v3129 = vadd.f32 %v3128, %v3106
    %v3130 = vadd.f32 %v3129, %v3107
    %v3131 = vadd.f32 %v3130, %v3108
    %3132 = vadd.xlane.f32.xlu0 %v3131
    %v3133 = vpop.xlane.xlu0 %3132
    %v3134 = vrot.slane %v3133, 4
    %v3135 = vadd.f32 %v3133, %v3134
    %v3136 = vrot.slane %v3135, 2
    %v3137 = vadd.f32 %v3135, %v3136
    %v3138 = vrot.slane %v3137, 1
    %v3139 = vadd.f32 %v3137, %v3138
    %s3140 = vtos %v3139
    %v3141 = vmul.f32 %v3079, %v3079
    %v3142 = vmul.f32 %v3080, %v3080
    %v3143 = vmul.f32 %v3081, %v3081
    %v3144 = vmul.f32 %v3082, %v3082
    %v3145 = vmul.f32 %v3083, %v3083
    %v3146 = vmul.f32 %v3084, %v3084
    %vm3147 = vcmask 7168
    %v3148 = vsel %vm3147, %v3141, 0.0
    %v3149 = vsel %vm3147, %v3142, 0.0
    %v3150 = vadd.f32 %v3148, %v3149
    %v3151 = vsel %vm3147, %v3143, 0.0
    %v3152 = vadd.f32 %v3150, %v3151
    %v3153 = vsel %vm3147, %v3144, 0.0
    %v3154 = vadd.f32 %v3152, %v3153
    %v3155 = vsel %vm3147, %v3145, 0.0
    %v3156 = vadd.f32 %v3154, %v3155
    %v3157 = vsel %vm3147, %v3146, 0.0
    %v3158 = vadd.f32 %v3156, %v3157
    %3159 = vadd.xlane.f32.xlu0 %v3158
    %v3160 = vpop.xlane.xlu0 %3159
    %v3161 = vrot.slane %v3160, 4
    %v3162 = vadd.f32 %v3160, %v3161
    %v3163 = vrot.slane %v3162, 2
    %v3164 = vadd.f32 %v3162, %v3163
    %v3165 = vrot.slane %v3164, 1
    %v3166 = vadd.f32 %v3164, %v3165
    %s3167 = vtos %v3166
    %s3168 = sadd.f32 %s3140, %s3167
    %v3169 = vadd.f32 %v2587, %v2588
    %v3170 = vadd.f32 %v3169, %v2589
    %v3171 = vadd.f32 %v3170, %v2590
    %v3172 = vadd.f32 %v3171, %v2591
    %v3173 = vadd.f32 %v3172, %v2592
    %v3174 = vadd.f32 %v3173, %v2593
    %v3175 = vadd.f32 %v3174, %v2594
    %v3176 = vadd.f32 %v3175, %v2595
    %v3177 = vadd.f32 %v3176, %v2596
    %v3178 = vadd.f32 %v3177, %v2597
    %v3179 = vadd.f32 %v3178, %v2598
    %v3180 = vadd.f32 %v3179, %v2599
    %v3181 = vadd.f32 %v3180, %v2600
    %v3182 = vadd.f32 %v3181, %v2601
    %v3183 = vadd.f32 %v3182, %v2602
    %v3184 = vadd.f32 %v3183, %v2603
    %v3185 = vadd.f32 %v3184, %v2604
    %v3186 = vadd.f32 %v3185, %v2605
    %v3187 = vadd.f32 %v3186, %v2606
    %v3188 = vadd.f32 %v3187, %v2607
    %v3189 = vadd.f32 %v3188, %v2608
    %v3190 = vadd.f32 %v3189, %v2609
    %v3191 = vadd.f32 %v3190, %v2610
    %3192 = vadd.xlane.f32.xlu0 %v3191
    %v3193 = vpop.xlane.xlu0 %3192
    %v3194 = vrot.slane %v3193, 4
    %v3195 = vadd.f32 %v3193, %v3194
    %v3196 = vrot.slane %v3195, 2
    %v3197 = vadd.f32 %v3195, %v3196
    %v3198 = vrot.slane %v3197, 1
    %v3199 = vadd.f32 %v3197, %v3198
    %s3200 = vtos %v3199
    %v3201 = vsel %vm3147, %v2965, 0.0
    %v3202 = vsel %vm3147, %v2966, 0.0
    %v3203 = vadd.f32 %v3201, %v3202
    %v3204 = vsel %vm3147, %v2967, 0.0
    %v3205 = vadd.f32 %v3203, %v3204
    %v3206 = vsel %vm3147, %v2968, 0.0
    %v3207 = vadd.f32 %v3205, %v3206
    %v3208 = vsel %vm3147, %v2969, 0.0
    %v3209 = vadd.f32 %v3207, %v3208
    %v3210 = vsel %vm3147, %v2970, 0.0
    %v3211 = vadd.f32 %v3209, %v3210
    %3212 = vadd.xlane.f32.xlu0 %v3211
    %v3213 = vpop.xlane.xlu0 %3212
    %v3214 = vrot.slane %v3213, 4
    %v3215 = vadd.f32 %v3213, %v3214
    %v3216 = vrot.slane %v3215, 2
    %v3217 = vadd.f32 %v3215, %v3216
    %v3218 = vrot.slane %v3217, 1
    %v3219 = vadd.f32 %v3217, %v3218
    %s3220 = vtos %v3219
    %s3221 = sadd.f32 %s3200, %s3220
    %v3222 = vrcp.pop %v2563
    %v3223 = vmul.f32 %v2587, %v3222
    %v3224 = vrcp.pop %v2564
    %v3225 = vmul.f32 %v2588, %v3224
    %v3226 = vrcp.pop %v2565
    %v3227 = vmul.f32 %v2589, %v3226
    %v3228 = vrcp.pop %v2566
    %v3229 = vmul.f32 %v2590, %v3228
    %v3230 = vrcp.pop %v2567
    %v3231 = vmul.f32 %v2591, %v3230
    %v3232 = vrcp.pop %v2568
    %v3233 = vmul.f32 %v2592, %v3232
    %v3234 = vrcp.pop %v2569
    %v3235 = vmul.f32 %v2593, %v3234
    %v3236 = vrcp.pop %v2570
    %v3237 = vmul.f32 %v2594, %v3236
    %v3238 = vrcp.pop %v2571
    %v3239 = vmul.f32 %v2595, %v3238
    %v3240 = vrcp.pop %v2572
    %v3241 = vmul.f32 %v2596, %v3240
    %v3242 = vrcp.pop %v2573
    %v3243 = vmul.f32 %v2597, %v3242
    %v3244 = vrcp.pop %v2574
    %v3245 = vmul.f32 %v2598, %v3244
    %v3246 = vrcp.pop %v2575
    %v3247 = vmul.f32 %v2599, %v3246
    %v3248 = vrcp.pop %v2576
    %v3249 = vmul.f32 %v2600, %v3248
    %v3250 = vrcp.pop %v2577
    %v3251 = vmul.f32 %v2601, %v3250
    %v3252 = vrcp.pop %v2578
    %v3253 = vmul.f32 %v2602, %v3252
    %v3254 = vrcp.pop %v2579
    %v3255 = vmul.f32 %v2603, %v3254
    %v3256 = vrcp.pop %v2580
    %v3257 = vmul.f32 %v2604, %v3256
    %v3258 = vrcp.pop %v2581
    %v3259 = vmul.f32 %v2605, %v3258
    %v3260 = vrcp.pop %v2582
    %v3261 = vmul.f32 %v2606, %v3260
    %v3262 = vrcp.pop %v2583
    %v3263 = vmul.f32 %v2607, %v3262
    %v3264 = vrcp.pop %v2584
    %v3265 = vmul.f32 %v2608, %v3264
    %v3266 = vrcp.pop %v2585
    %v3267 = vmul.f32 %v2609, %v3266
    %v3268 = vrcp.pop %v2586
    %v3269 = vmul.f32 %v2610, %v3268
    %v3270 = vlog2.pop %v3223
    %v3271 = vmul.f32 %v3270, 0.6931472
    %v3272 = vlog2.pop %v3225
    %v3273 = vmul.f32 %v3272, 0.6931472
    %v3274 = vlog2.pop %v3227
    %v3275 = vmul.f32 %v3274, 0.6931472
    %v3276 = vlog2.pop %v3229
    %v3277 = vmul.f32 %v3276, 0.6931472
    %v3278 = vlog2.pop %v3231
    %v3279 = vmul.f32 %v3278, 0.6931472
    %v3280 = vlog2.pop %v3233
    %v3281 = vmul.f32 %v3280, 0.6931472
    %v3282 = vlog2.pop %v3235
    %v3283 = vmul.f32 %v3282, 0.6931472
    %v3284 = vlog2.pop %v3237
    %v3285 = vmul.f32 %v3284, 0.6931472
    %v3286 = vlog2.pop %v3239
    %v3287 = vmul.f32 %v3286, 0.6931472
    %v3288 = vlog2.pop %v3241
    %v3289 = vmul.f32 %v3288, 0.6931472
    %v3290 = vlog2.pop %v3243
    %v3291 = vmul.f32 %v3290, 0.6931472
    %v3292 = vlog2.pop %v3245
    %v3293 = vmul.f32 %v3292, 0.6931472
    %v3294 = vlog2.pop %v3247
    %v3295 = vmul.f32 %v3294, 0.6931472
    %v3296 = vlog2.pop %v3249
    %v3297 = vmul.f32 %v3296, 0.6931472
    %v3298 = vlog2.pop %v3251
    %v3299 = vmul.f32 %v3298, 0.6931472
    %v3300 = vlog2.pop %v3253
    %v3301 = vmul.f32 %v3300, 0.6931472
    %v3302 = vlog2.pop %v3255
    %v3303 = vmul.f32 %v3302, 0.6931472
    %v3304 = vlog2.pop %v3257
    %v3305 = vmul.f32 %v3304, 0.6931472
    %v3306 = vlog2.pop %v3259
    %v3307 = vmul.f32 %v3306, 0.6931472
    %v3308 = vlog2.pop %v3261
    %v3309 = vmul.f32 %v3308, 0.6931472
    %v3310 = vlog2.pop %v3263
    %v3311 = vmul.f32 %v3310, 0.6931472
    %v3312 = vlog2.pop %v3265
    %v3313 = vmul.f32 %v3312, 0.6931472
    %v3314 = vlog2.pop %v3267
    %v3315 = vmul.f32 %v3314, 0.6931472
    %v3316 = vlog2.pop %v3269
    %v3317 = vmul.f32 %v3316, 0.6931472
    %v3318 = vand.u32 2147483647, %v3271
    %v3319 = vand.u32 2147483647, %v3273
    %v3320 = vand.u32 2147483647, %v3275
    %v3321 = vand.u32 2147483647, %v3277
    %v3322 = vand.u32 2147483647, %v3279
    %v3323 = vand.u32 2147483647, %v3281
    %v3324 = vand.u32 2147483647, %v3283
    %v3325 = vand.u32 2147483647, %v3285
    %v3326 = vand.u32 2147483647, %v3287
    %v3327 = vand.u32 2147483647, %v3289
    %v3328 = vand.u32 2147483647, %v3291
    %v3329 = vand.u32 2147483647, %v3293
    %v3330 = vand.u32 2147483647, %v3295
    %v3331 = vand.u32 2147483647, %v3297
    %v3332 = vand.u32 2147483647, %v3299
    %v3333 = vand.u32 2147483647, %v3301
    %v3334 = vand.u32 2147483647, %v3303
    %v3335 = vand.u32 2147483647, %v3305
    %v3336 = vand.u32 2147483647, %v3307
    %v3337 = vand.u32 2147483647, %v3309
    %v3338 = vand.u32 2147483647, %v3311
    %v3339 = vand.u32 2147483647, %v3313
    %v3340 = vand.u32 2147483647, %v3315
    %v3341 = vand.u32 2147483647, %v3317
    %v3342 = vadd.f32 %v3318, %v3319
    %v3343 = vadd.f32 %v3342, %v3320
    %v3344 = vadd.f32 %v3343, %v3321
    %v3345 = vadd.f32 %v3344, %v3322
    %v3346 = vadd.f32 %v3345, %v3323
    %v3347 = vadd.f32 %v3346, %v3324
    %v3348 = vadd.f32 %v3347, %v3325
    %v3349 = vadd.f32 %v3348, %v3326
    %v3350 = vadd.f32 %v3349, %v3327
    %v3351 = vadd.f32 %v3350, %v3328
    %v3352 = vadd.f32 %v3351, %v3329
    %v3353 = vadd.f32 %v3352, %v3330
    %v3354 = vadd.f32 %v3353, %v3331
    %v3355 = vadd.f32 %v3354, %v3332
    %v3356 = vadd.f32 %v3355, %v3333
    %v3357 = vadd.f32 %v3356, %v3334
    %v3358 = vadd.f32 %v3357, %v3335
    %v3359 = vadd.f32 %v3358, %v3336
    %v3360 = vadd.f32 %v3359, %v3337
    %v3361 = vadd.f32 %v3360, %v3338
    %v3362 = vadd.f32 %v3361, %v3339
    %v3363 = vadd.f32 %v3362, %v3340
    %v3364 = vadd.f32 %v3363, %v3341
    %3365 = vadd.xlane.f32.xlu0 %v3364
    %v3366 = vpop.xlane.xlu0 %3365
    %v3367 = vrot.slane %v3366, 4
    %v3368 = vadd.f32 %v3366, %v3367
    %v3369 = vrot.slane %v3368, 2
    %v3370 = vadd.f32 %v3368, %v3369
    %v3371 = vrot.slane %v3370, 1
    %v3372 = vadd.f32 %v3370, %v3371
    %s3373 = vtos %v3372
    %v3374 = vrcp.pop %v2959
    %v3375 = vmul.f32 %v2965, %v3374
    %v3376 = vrcp.pop %v2960
    %v3377 = vmul.f32 %v2966, %v3376
    %v3378 = vrcp.pop %v2961
    %v3379 = vmul.f32 %v2967, %v3378
    %v3380 = vrcp.pop %v2962
    %v3381 = vmul.f32 %v2968, %v3380
    %v3382 = vrcp.pop %v2963
    %v3383 = vmul.f32 %v2969, %v3382
    %v3384 = vrcp.pop %v2964
    %v3385 = vmul.f32 %v2970, %v3384
    %v3386 = vlog2.pop %v3375
    %v3387 = vmul.f32 %v3386, 0.6931472
    %v3388 = vlog2.pop %v3377
    %v3389 = vmul.f32 %v3388, 0.6931472
    %v3390 = vlog2.pop %v3379
    %v3391 = vmul.f32 %v3390, 0.6931472
    %v3392 = vlog2.pop %v3381
    %v3393 = vmul.f32 %v3392, 0.6931472
    %v3394 = vlog2.pop %v3383
    %v3395 = vmul.f32 %v3394, 0.6931472
    %v3396 = vlog2.pop %v3385
    %v3397 = vmul.f32 %v3396, 0.6931472
    %v3398 = vand.u32 2147483647, %v3387
    %v3399 = vand.u32 2147483647, %v3389
    %v3400 = vand.u32 2147483647, %v3391
    %v3401 = vand.u32 2147483647, %v3393
    %v3402 = vand.u32 2147483647, %v3395
    %v3403 = vand.u32 2147483647, %v3397
    %v3404 = vsel %vm3147, %v3398, 0.0
    %v3405 = vsel %vm3147, %v3399, 0.0
    %v3406 = vadd.f32 %v3404, %v3405
    %v3407 = vsel %vm3147, %v3400, 0.0
    %v3408 = vadd.f32 %v3406, %v3407
    %v3409 = vsel %vm3147, %v3401, 0.0
    %v3410 = vadd.f32 %v3408, %v3409
    %v3411 = vsel %vm3147, %v3402, 0.0
    %v3412 = vadd.f32 %v3410, %v3411
    %v3413 = vsel %vm3147, %v3403, 0.0
    %v3414 = vadd.f32 %v3412, %v3413
    %3415 = vadd.xlane.f32.xlu0 %v3414
    %v3416 = vpop.xlane.xlu0 %3415
    %v3417 = vrot.slane %v3416, 4
    %v3418 = vadd.f32 %v3416, %v3417
    %v3419 = vrot.slane %v3418, 2
    %v3420 = vadd.f32 %v3418, %v3419
    %v3421 = vrot.slane %v3420, 1
    %v3422 = vadd.f32 %v3420, %v3421
    %s3423 = vtos %v3422
    %s3424 = sadd.f32 %s3373, %s3423
    %s3425 = smul.f32 %s3424, 0.5
    %v3426 = vlaneseq
    %v3427 = vshrl.u32 %v3426, 7
    %vm3428 = vcmp.eq.s32.totalorder %v3427, 0
    %vm3429 = vmand %vm3428, %vm2367
    %v3430 = vstv %s3168
    %v3431 = vsel %vm3429, %v3430, 0.0
    %vm3432 = vcmp.eq.s32.totalorder %v2363, 1
    %vm3433 = vmand %vm3428, %vm3432
    %v3434 = vstv %s3221
    %v3435 = vsel %vm3433, %v3434, 0.0
    %v3436 = vadd.f32 %v3431, %v3435
    %vm3437 = vcmp.eq.s32.totalorder %v2363, 2
    %vm3438 = vmand %vm3428, %vm3437
    %v3439 = vstv %s3425
    %v3440 = vsel %vm3438, %v3439, 0.0
    %v3441 = vadd.f32 %v3436, %v3440
    // Predicated region
    $region14: #{tpu_custom_call.1} parent=1 // pred_check
      %p3442 = pneg %p31
    $region15: #{tpu_custom_call.1} parent=1 // pred_check_branch
      %3444 = sbr.rel (%p3442) target = $region17
    $region16: #{tpu_custom_call.1} parent=1 // pred_region
      %3445 = vst [vmem:[#allocation7] sm:$0xff] 0.0
    $region17: #{tpu_custom_call.1} parent=1 // pred_fallthru
      _
    %v3446 = vld [vmem:[#allocation7] sm:$0xff]
    %v3447 = vadd.f32 %v3446, %v3441
    %3448 = vst [vmem:[#allocation7] sm:$0xff] %v3447
    // Predicated region
    $region18: #{tpu_custom_call.1} parent=1 // pred_check
      _
    $region19: #{tpu_custom_call.1} parent=1 // pred_check_branch
      %3450 = sbr.rel (0) target = $region21
    $region20: #{tpu_custom_call.1} parent=1 // pred_region
      %s3452 = ssub.s32 128, 128
      %3453 = vsyncadd [#allocation6], %s3452
      %s3455 = sshll.u32 [#allocation7], 4
      %s3456 = int_to_ptr.vmem [resolvable:$true] %s3455
      %3458 = dma.vmem_to_hbm [thread:$0]  %s3456, 128, %s2, [#allocation6]
    $region21: #{tpu_custom_call.1} parent=1 // pred_fallthru
      _
    // Predicated region
    $region22: #{tpu_custom_call.1} parent=1 // pred_check
      _
    $region23: #{tpu_custom_call.1} parent=1 // pred_check_branch
      %3460 = sbr.rel (0) target = $region25
    $region24: #{tpu_custom_call.1} parent=1 // pred_region
      %3461 = dma.done [#allocation6], 128
    $region25: #{tpu_custom_call.1} parent=1 // pred_fallthru
      _
    %3462 = vsyncpa [#allocation5], 1
    %3463 = vsyncpa [#allocation6], 1
  %3464 = vsyncmov [#allocation3]
  %s3465 = vpop.sfrf %3464
  %p3466 = scmp.eq.s32.totalorder %s3465, 0
  %p3467 = pneg %p3466
  %3469 = shalt.err (%p3467)

</llo_original>
